<compile_context>
chip_gen: v7x
topology: tpu7x:2x2x1
jax: 0.10.0
libtpu: 0.0.40
codegen_flags: <defaults>
</compile_context>

<pallas_src>
import functools

import jax
import jax.numpy as jnp
from jax.experimental import pallas as pl
from jax.experimental.pallas import tpu as pltpu

BN_EPS = 1e-5
LANE = 128
SUBLANE = 8
VMEM_LIMIT = 32 * 1024 * 1024


def _round_up(x, m):
    return (x + m - 1) // m * m


# --------------------------- Pallas kernels ---------------------------------

def _conv_bias_act_kernel(x_ref, w_ref, b_ref, o_ref, *, neg_slope, apply_act):
    """One M-tile: y = x @ w + b, optional LeakyReLU.  bf16 operands, f32 accum."""
    y = jnp.dot(x_ref[...], w_ref[...], preferred_element_type=jnp.float32)
    y = y + b_ref[...]
    if apply_act:
        y = jnp.where(y >= 0, y, neg_slope * y)
    o_ref[...] = y.astype(o_ref.dtype)


def _conv_bn_act_kernel(x_ref, w_ref, g_ref, b_ref, o_ref, s_ref, *,
                        inv_m, neg_slope):
    """Fused CNNBlock tile (conv -> BatchNorm2d(batch stats) -> LeakyReLU).

    grid = (phase, m_tile), both sequential so s_ref (per-channel [sum; sum_sq],
    f32) is shared across every M tile.
      phase 0: y = x @ w, accumulate stats.
      phase 1: recompute y, normalize with biased batch variance (torch training
               mode), scale/shift, LeakyReLU.
    Zero-padded M rows / K columns / Cout columns contribute exactly 0 to the
    matmul and to the stats, and padded gamma/beta are 0 -> padded outputs are 0.
    """
    phase = pl.program_id(0)
    tile = pl.program_id(1)

    @pl.when(jnp.logical_and(phase == 0, tile == 0))
    def _():
        s_ref[...] = jnp.zeros_like(s_ref)

    y = jnp.dot(x_ref[...], w_ref[...], preferred_element_type=jnp.float32)

    @pl.when(phase == 0)
    def _():
        s1 = jnp.sum(y, axis=0, keepdims=True)          # (1, Cp) f32
        s2 = jnp.sum(y * y, axis=0, keepdims=True)      # (1, Cp) f32
        s_ref[...] = s_ref[...] + jnp.concatenate([s1, s2], axis=0)

    @pl.when(phase == 1)
    def _():
        tot = s_ref[...]
        mean = tot[0:1, :] * inv_m
        var = jnp.maximum(tot[1:2, :] * inv_m - mean * mean, 0.0)
        inv_std = jax.lax.rsqrt(var + BN_EPS)
        scale = g_ref[...] * inv_std
        shift = b_ref[...] - mean * scale
        v = y * scale + shift
        o_ref[...] = jnp.where(v >= 0, v, neg_slope * v).astype(o_ref.dtype)


# --------------------------- pallas_call wrappers ----------------------------

def _conv_matmul(patches, w2d, bias, *, neg_slope, apply_act, tm, out_dtype):
    m_pad, kp = patches.shape
    cp = w2d.shape[1]
    num_tiles = m_pad // tm
    kern = functools.partial(_conv_bias_act_kernel,
                             neg_slope=neg_slope, apply_act=apply_act)
    return pl.pallas_call(
        kern,
        grid=(num_tiles,),
        in_specs=[pl.BlockSpec((tm, kp), lambda i: (i, 0)),
                  pl.BlockSpec((kp, cp), lambda i: (0, 0)),
                  pl.BlockSpec((1, cp), lambda i: (0, 0))],
        out_specs=pl.BlockSpec((tm, cp), lambda i: (i, 0)),
        out_shape=jax.ShapeDtypeStruct((m_pad, cp), out_dtype),
        compiler_params=pltpu.CompilerParams(
            dimension_semantics=("parallel",), vmem_limit_bytes=VMEM_LIMIT),
        cost_estimate=pl.CostEstimate(
            flops=2 * m_pad * kp * cp, transcendentals=0,
            bytes_accessed=int(patches.size) * 2 + int(w2d.size) * 2
            + m_pad * cp * jnp.dtype(out_dtype).itemsize),
    )(patches, w2d, bias)


def _conv_bn_fused(patches, w2d, gamma, beta, *, m_true, neg_slope, tm, out_dtype):
    m_pad, kp = patches.shape
    cp = w2d.shape[1]
    num_tiles = m_pad // tm
    kern = functools.partial(_conv_bn_act_kernel,
                             inv_m=1.0 / float(m_true), neg_slope=neg_slope)
    # NOTE: both grid axes are "arbitrary": the stats scratch must observe every
    # M tile before normalization.  With the handful of tiles these layers have,
    # that beats a separate stats pass + f32 intermediate in HBM; for very large
    # M, a two-call variant with "parallel" tiles may be preferable.
    return pl.pallas_call(
        kern,
        grid=(2, num_tiles),
        in_specs=[pl.BlockSpec((tm, kp), lambda p, i: (i, 0)),
                  pl.BlockSpec((kp, cp), lambda p, i: (0, 0)),
                  pl.BlockSpec((1, cp), lambda p, i: (0, 0)),
                  pl.BlockSpec((1, cp), lambda p, i: (0, 0))],
        out_specs=pl.BlockSpec((tm, cp), lambda p, i: (i, 0)),
        out_shape=jax.ShapeDtypeStruct((m_pad, cp), out_dtype),
        scratch_shapes=[pltpu.VMEM((2, cp), jnp.float32)],
        compiler_params=pltpu.CompilerParams(
            dimension_semantics=("arbitrary", "arbitrary"),
            vmem_limit_bytes=VMEM_LIMIT),
        cost_estimate=pl.CostEstimate(
            flops=4 * m_pad * kp * cp, transcendentals=num_tiles * cp,
            bytes_accessed=2 * int(patches.size) * 2 + int(w2d.size) * 2
            + m_pad * cp * jnp.dtype(out_dtype).itemsize),
    )(patches, w2d, gamma, beta)


# --------------------------- conv layer (NHWC) -------------------------------

def _conv_layer(x_nhwc, weight, bias, gamma, beta, *, stride, padding, bn,
                neg_slope, apply_act, out_dtype, tm=256):
    n, h, w, cin = x_nhwc.shape
    cout, cin_w, kh, kw = weight.shape
    assert cin_w == cin
    sh, sw = stride
    ph, pw = padding
    oh = (h + 2 * ph - kh) // sh + 1
    ow = (w + 2 * pw - kw) // sw + 1

    # im2col with reflect padding (padding_mode="reflect"); K order = (kh, kw, cin).
    # TODO(synk): stream per-tap matmuls instead of materializing patches in HBM.
    xp = jnp.pad(x_nhwc, ((0, 0), (ph, ph), (pw, pw), (0, 0)), mode="reflect")
    taps = []
    for ikh in range(kh):
        for ikw in range(kw):
            taps.append(xp[:, ikh:ikh + sh * oh:sh, ikw:ikw + sw * ow:sw, :])
    patches = jnp.stack(taps, axis=3).reshape(n * oh * ow, kh * kw * cin)

    m, k = patches.shape
    tm_eff = min(tm, _round_up(m, SUBLANE))        # multiple of 8
    m_pad = _round_up(m, tm_eff)
    kp = _round_up(k, LANE)                        # lane-dense K
    cp = _round_up(cout, LANE)                     # lane-dense Cout

    # Zero padding: padded rows/cols contribute exactly 0 to matmul and BN sums.
    patches_p = jnp.pad(patches.astype(jnp.bfloat16),
                        ((0, m_pad - m), (0, kp - k)))
    w2d = weight.transpose(2, 3, 1, 0).reshape(k, cout)   # (kh, kw, cin) x cout
    w_p = jnp.pad(w2d.astype(jnp.bfloat16), ((0, kp - k), (0, cp - cout)))

    if bn:
        gamma_p = jnp.pad(gamma.astype(jnp.float32).reshape(1, cout),
                          ((0, 0), (0, cp - cout)))
        beta_p = jnp.pad(beta.astype(jnp.float32).reshape(1, cout),
                         ((0, 0), (0, cp - cout)))
        out_p = _conv_bn_fused(patches_p, w_p, gamma_p, beta_p, m_true=m,
                               neg_slope=neg_slope, tm=tm_eff, out_dtype=out_dtype)
    else:
        bias_p = jnp.zeros((1, cp), jnp.float32)
        if bias is not None:
            bias_p = bias_p.at[0, :cout].set(bias.astype(jnp.float32))
        out_p = _conv_matmul(patches_p, w_p, bias_p, neg_slope=neg_slope,
                             apply_act=apply_act, tm=tm_eff, out_dtype=out_dtype)

    return out_p[:m, :cout].reshape(n, oh, ow, cout)


# --------------------------- Discriminator -----------------------------------

LAYER_CONFIGS = (
    # name,     kernel,  stride, padding, bias,  bn,    activation
    ("initial", (4, 4), (2, 2), (1, 1), True,  False, True),
    ("conv0",   (4, 4), (2, 1), (1, 1), False, True,  True),
    ("conv1",   (5, 4), (3, 2), (1, 1), False, True,  True),
    ("conv2",   (5, 4), (3, 1), (1, 1), False, True,  True),
    ("last",    (5, 4), (2, 2), (1, 1), True,  False, False),
)


def init_discriminator_params(key, in_channels=1, features=(8, 16, 32, 64)):
    chans = [2 * in_channels, features[0], features[1], features[2], features[3], 1]
    params = {}
    for idx, (name, (kh, kw), _s, _p, has_bias, has_bn, _a) in enumerate(LAYER_CONFIGS):
        cin, cout = chans[idx], chans[idx + 1]
        key, k_w, k_b, k_g, k_be = jax.random.split(key, 5)
        layer = {"w": 0.1 * jax.random.normal(k_w, (cout, cin, kh, kw), jnp.float32)}
        if has_bias:
            layer["b"] = 0.05 * jax.random.normal(k_b, (cout,), jnp.float32)
        if has_bn:
            layer["gamma"] = 1.0 + 0.05 * jax.random.normal(k_g, (cout,), jnp.float32)
            layer["beta"] = 0.05 * jax.random.normal(k_be, (cout,), jnp.float32)
        params[name] = layer
    return params


def discriminator_forward(params, x, y, *, leak=0.2, tm=256):
    h = jnp.concatenate([x, y], axis=1)       # NCHW channel concat
    h = h.transpose(0, 2, 3, 1)               # -> NHWC once (channels on lanes)
    last_name = LAYER_CONFIGS[-1][0]
    for name, _ksz, stride, pad, _has_bias, has_bn, act in LAYER_CONFIGS:
        p = params[name]
        out_dtype = jnp.float32 if name == last_name else jnp.bfloat16
        h = _conv_layer(h, p["w"], p.get("b"), p.get("gamma"), p.get("beta"),
                        stride=stride, padding=pad, bn=has_bn,
                        neg_slope=leak, apply_act=act, out_dtype=out_dtype, tm=tm)
    return h.transpose(0, 3, 1, 2)            # -> NCHW at the boundary


# --------------------------- pure-JAX reference -------------------------------

def _leaky(v, s):
    return jnp.where(v >= 0, v, s * v)


def _ref_conv(x, w, b, stride, padding):
    ph, pw = padding
    xp = jnp.pad(x, ((0, 0), (0, 0), (ph, ph), (pw, pw)), mode="reflect")
    # Same quantization as the kernel path: bf16 operands, f32 accumulation.
    y = jax.lax.conv_general_dilated(
        xp.astype(jnp.bfloat16), w.astype(jnp.bfloat16),
        window_strides=stride, padding="VALID",
        dimension_numbers=("NCHW", "OIHW", "NCHW"),
        preferred_element_type=jnp.float32)
    if b is not None:
        y = y + b.reshape(1, -1, 1, 1)
    return y


def _ref_bn(y, gamma, beta):
    mean = jnp.mean(y, axis=(0, 2, 3), keepdims=True)
    var = jnp.mean((y - mean) ** 2, axis=(0, 2, 3), keepdims=True)
    return ((y - mean) * jax.lax.rsqrt(var + BN_EPS)
            * gamma.reshape(1, -1, 1, 1) + beta.reshape(1, -1, 1, 1))


def reference_forward(params, x, y, *, leak=0.2):
    h = jnp.concatenate([x, y], axis=1)
    for name, _ksz, stride, pad, _has_bias, has_bn, act in LAYER_CONFIGS:
        p = params[name]
        h = _ref_conv(h, p["w"], p.get("b"), stride, pad)
        if has_bn:
            h = _ref_bn(h, p["gamma"], p["beta"])
        if act:
            h = _leaky(h, leak)
    return h


if __name__ == "__main__":
    # Smallest shapes that survive the asymmetric strided conv chain of this
    # discriminator (tall, narrow spectrogram-like input): (N,1,108,16) -> (N,1,1,1).
    N, CIN, H, W = 2, 1, 108, 16
    FEATURES = (8, 16, 32, 64)

    key = jax.random.PRNGKey(0)
    k_params, k_x, k_y = jax.random.split(key, 3)
    params = init_discriminator_params(k_params, in_channels=CIN, features=FEATURES)
    x = jax.random.normal(k_x, (N, CIN, H, W), jnp.float32)
    y = jax.random.normal(k_y, (N, CIN, H, W), jnp.float32)

    fwd = jax.jit(discriminator_forward)
    out = jax.block_until_ready(fwd(params, x, y))

    ref = jax.block_until_ready(reference_forward(params, x, y))
    assert out.shape == ref.shape == (N, 1, 1, 1), (out.shape, ref.shape)
    max_err = float(jnp.max(jnp.abs(out - ref)))
    assert jnp.allclose(out, ref, atol=2e-2, rtol=2e-2), max_err

    print("KERNEL_OK")
</pallas_src>

<mosaic_0001>
module attributes {stable_mosaic.version = 11 : i64} {
  func.func @_conv_bias_act_kernel(%arg0: i32, %arg1: memref<256x128xbf16, #tpu.memory_space<vmem>>, %arg2: memref<128x128xbf16, #tpu.memory_space<vmem>>, %arg3: memref<1x128xf32, #tpu.memory_space<vmem>>, %arg4: memref<256x128xbf16, #tpu.memory_space<vmem>>) attributes {dimension_semantics = [#tpu.dimension_semantics<parallel>], iteration_bounds = array<i64: 4>, scalar_prefetch = 0 : i64, scratch_operands = 0 : i64, tpu.core_type = #tpu.core_type<tc>, window_params = [{transform_indices = @transform_0, window_bounds = array<i64: 256, 128>}, {pipeline_mode = #tpu.pipeline_mode<synchronous>, transform_indices = @transform_1, window_bounds = array<i64: 128, 128>}, {pipeline_mode = #tpu.pipeline_mode<synchronous>, transform_indices = @transform_2, window_bounds = array<i64: 1, 128>}, {transform_indices = @transform_3, window_bounds = array<i64: 256, 128>}]} {
    %c0 = arith.constant 0 : index
    %c0_0 = arith.constant 0 : index
    %0 = vector.load %arg1[%c0, %c0_0] : memref<256x128xbf16, #tpu.memory_space<vmem>>, vector<256x128xbf16>
    %c0_1 = arith.constant 0 : index
    %c0_2 = arith.constant 0 : index
    %1 = vector.load %arg2[%c0_1, %c0_2] : memref<128x128xbf16, #tpu.memory_space<vmem>>, vector<128x128xbf16>
    %cst = arith.constant dense<0.000000e+00> : vector<256x128xf32>
    %2 = tpu.matmul %0, %1, %cst {dimension_numbers = #tpu.dot_dimension_numbers<[1], [0], [0], [1], [0, 0, 1, 1], [], []>} : vector<256x128xbf16>, vector<128x128xbf16>, vector<256x128xf32> -> vector<256x128xf32>
    %c0_3 = arith.constant 0 : index
    %c0_4 = arith.constant 0 : index
    %3 = vector.load %arg3[%c0_3, %c0_4] : memref<1x128xf32, #tpu.memory_space<vmem>>, vector<1x128xf32>
    %4 = vector.broadcast %3 : vector<1x128xf32> to vector<256x128xf32>
    %5 = arith.addf %2, %4 : vector<256x128xf32>
    %cst_5 = arith.constant 0.000000e+00 : f32
    %6 = vector.broadcast %cst_5 : f32 to vector<256x128xf32>
    %7 = arith.cmpf oge, %5, %6 : vector<256x128xf32>
    %cst_6 = arith.constant 2.000000e-01 : f32
    %8 = vector.broadcast %cst_6 : f32 to vector<256x128xf32>
    %9 = arith.mulf %8, %5 : vector<256x128xf32>
    %10 = arith.select %7, %5, %9 : vector<256x128xi1>, vector<256x128xf32>
    %11 = arith.truncf %10 : vector<256x128xf32> to vector<256x128xbf16>
    %c0_7 = arith.constant 0 : index
    %c0_8 = arith.constant 0 : index
    %12 = vector.load %arg4[%c0_7, %c0_8] : memref<256x128xbf16, #tpu.memory_space<vmem>>, vector<256x128xbf16>
    tpu.vector_store %arg4[%c0_7, %c0_8], %11 {strides = array<i32>} : memref<256x128xbf16, #tpu.memory_space<vmem>>, vector<256x128xbf16>,
    return
  }
  func.func @transform_0(%arg0: i32) -> (i32, i32) {
    %c0_i32 = arith.constant 0 : i32
    %c0_i32_0 = arith.constant 0 : i32
    return %arg0, %c0_i32 : i32, i32
  }
  func.func @transform_1(%arg0: i32) -> (i32, i32) {
    %c0_i32 = arith.constant 0 : i32
    %c0_i32_0 = arith.constant 0 : i32
    %c0_i32_1 = arith.constant 0 : i32
    return %c0_i32, %c0_i32_0 : i32, i32
  }
  func.func @transform_2(%arg0: i32) -> (i32, i32) {
    %c0_i32 = arith.constant 0 : i32
    %c0_i32_0 = arith.constant 0 : i32
    %c0_i32_1 = arith.constant 0 : i32
    return %c0_i32, %c0_i32_0 : i32, i32
  }
  func.func @transform_3(%arg0: i32) -> (i32, i32) {
    %c0_i32 = arith.constant 0 : i32
    %c0_i32_0 = arith.constant 0 : i32
    return %arg0, %c0_i32 : i32, i32
  }
}

module attributes {stable_mosaic.version = 11 : i64} {
  func.func @_conv_bn_act_kernel(%arg0: i32, %arg1: i32, %arg2: memref<256x128xbf16, #tpu.memory_space<vmem>>, %arg3: memref<128x128xbf16, #tpu.memory_space<vmem>>, %arg4: memref<1x128xf32, #tpu.memory_space<vmem>>, %arg5: memref<1x128xf32, #tpu.memory_space<vmem>>, %arg6: memref<256x128xbf16, #tpu.memory_space<vmem>>, %arg7: memref<2x128xf32, #tpu.memory_space<vmem>>) attributes {dimension_semantics = [#tpu.dimension_semantics<arbitrary>, #tpu.dimension_semantics<arbitrary>], iteration_bounds = array<i64: 2, 2>, scalar_prefetch = 0 : i64, scratch_operands = 1 : i64, tpu.core_type = #tpu.core_type<tc>, window_params = [{transform_indices = @transform_0, window_bounds = array<i64: 256, 128>}, {pipeline_mode = #tpu.pipeline_mode<synchronous>, transform_indices = @transform_1, window_bounds = array<i64: 128, 128>}, {pipeline_mode = #tpu.pipeline_mode<synchronous>, transform_indices = @transform_2, window_bounds = array<i64: 1, 128>}, {pipeline_mode = #tpu.pipeline_mode<synchronous>, transform_indices = @transform_3, window_bounds = array<i64: 1, 128>}, {transform_indices = @transform_4, window_bounds = array<i64: 256, 128>}]} {
    %c0_i32 = arith.constant 0 : i32
    %0 = arith.cmpi eq, %arg0, %c0_i32 : i32
    %c0_i32_0 = arith.constant 0 : i32
    %1 = arith.cmpi eq, %arg1, %c0_i32_0 : i32
    %2 = arith.andi %0, %1 : i1
    %3 = arith.extui %2 : i1 to i32
    %c0_i32_1 = arith.constant 0 : i32
    %4 = arith.cmpi ne, %3, %c0_i32_1 : i32
    scf.if %4 {
      %cst_8 = arith.constant 0.000000e+00 : f32
      %14 = vector.broadcast %cst_8 : f32 to vector<2x128xf32>
      %c0_9 = arith.constant 0 : index
      %c0_10 = arith.constant 0 : index
      %15 = vector.load %arg7[%c0_9, %c0_10] : memref<2x128xf32, #tpu.memory_space<vmem>>, vector<2x128xf32>
      tpu.vector_store %arg7[%c0_9, %c0_10], %14 {strides = array<i32>} : memref<2x128xf32, #tpu.memory_space<vmem>>, vector<2x128xf32>,
    } else {
    }
    %c0 = arith.constant 0 : index
    %c0_2 = arith.constant 0 : index
    %5 = vector.load %arg2[%c0, %c0_2] : memref<256x128xbf16, #tpu.memory_space<vmem>>, vector<256x128xbf16>
    %c0_3 = arith.constant 0 : index
    %c0_4 = arith.constant 0 : index
    %6 = vector.load %arg3[%c0_3, %c0_4] : memref<128x128xbf16, #tpu.memory_space<vmem>>, vector<128x128xbf16>
    %cst = arith.constant dense<0.000000e+00> : vector<256x128xf32>
    %7 = tpu.matmul %5, %6, %cst {dimension_numbers = #tpu.dot_dimension_numbers<[1], [0], [0], [1], [0, 0, 1, 1], [], []>} : vector<256x128xbf16>, vector<128x128xbf16>, vector<256x128xf32> -> vector<256x128xf32>
    %c0_i32_5 = arith.constant 0 : i32
    %8 = arith.cmpi eq, %arg0, %c0_i32_5 : i32
    %9 = arith.extui %8 : i1 to i32
    %c0_i32_6 = arith.constant 0 : i32
    %10 = arith.cmpi ne, %9, %c0_i32_6 : i32
    scf.if %10 {
      %cst_8 = arith.constant dense<0.000000e+00> : vector<128xf32>
      %14 = vector.multi_reduction <add>, %7, %cst_8 [0] : vector<256x128xf32> to vector<128xf32>
      %15 = vector.shape_cast %14 : vector<128xf32> to vector<1x128xf32>
      %16 = arith.mulf %7, %7 : vector<256x128xf32>
      %cst_9 = arith.constant dense<0.000000e+00> : vector<128xf32>
      %17 = vector.multi_reduction <add>, %16, %cst_9 [0] : vector<256x128xf32> to vector<128xf32>
      %18 = vector.shape_cast %17 : vector<128xf32> to vector<1x128xf32>
      %c0_10 = arith.constant 0 : index
      %c0_11 = arith.constant 0 : index
      %19 = vector.load %arg7[%c0_10, %c0_11] : memref<2x128xf32, #tpu.memory_space<vmem>>, vector<2x128xf32>
      %20 = tpu.concatenate %15, %18 in 0 : vector<1x128xf32>, vector<1x128xf32> -> vector<2x128xf32>
      %21 = arith.addf %19, %20 : vector<2x128xf32>
      %c0_12 = arith.constant 0 : index
      %c0_13 = arith.constant 0 : index
      %22 = vector.load %arg7[%c0_12, %c0_13] : memref<2x128xf32, #tpu.memory_space<vmem>>, vector<2x128xf32>
      tpu.vector_store %arg7[%c0_12, %c0_13], %21 {strides = array<i32>} : memref<2x128xf32, #tpu.memory_space<vmem>>, vector<2x128xf32>,
    } else {
    }
    %c1_i32 = arith.constant 1 : i32
    %11 = arith.cmpi eq, %arg0, %c1_i32 : i32
    %12 = arith.extui %11 : i1 to i32
    %c0_i32_7 = arith.constant 0 : i32
    %13 = arith.cmpi ne, %12, %c0_i32_7 : i32
    scf.if %13 {
      %c0_8 = arith.constant 0 : index
      %c0_9 = arith.constant 0 : index
      %14 = vector.load %arg7[%c0_8, %c0_9] : memref<2x128xf32, #tpu.memory_space<vmem>>, vector<2x128xf32>
      %15 = vector.extract_strided_slice %14 {offsets = [0, 0], sizes = [1, 128], strides = [1, 1]} : vector<2x128xf32> to vector<1x128xf32>
      %cst_10 = arith.constant 0.00264550257 : f32
      %16 = vector.broadcast %cst_10 : f32 to vector<1x128xf32>
      %17 = arith.mulf %15, %16 : vector<1x128xf32>
      %18 = vector.extract_strided_slice %14 {offsets = [1, 0], sizes = [1, 128], strides = [1, 1]} : vector<2x128xf32> to vector<1x128xf32>
      %cst_11 = arith.constant 0.00264550257 : f32
      %19 = vector.broadcast %cst_11 : f32 to vector<1x128xf32>
      %20 = arith.mulf %18, %19 : vector<1x128xf32>
      %21 = arith.mulf %17, %17 : vector<1x128xf32>
      %22 = arith.subf %20, %21 : vector<1x128xf32>
      %cst_12 = arith.constant 0.000000e+00 : f32
      %23 = vector.broadcast %cst_12 : f32 to vector<1x128xf32>
      %24 = arith.maximumf %22, %23 : vector<1x128xf32>
      %cst_13 = arith.constant 9.99999974E-6 : f32
      %25 = vector.broadcast %cst_13 : f32 to vector<1x128xf32>
      %26 = arith.addf %24, %25 : vector<1x128xf32>
      %27 = math.rsqrt %26 : vector<1x128xf32>
      %c0_14 = arith.constant 0 : index
      %c0_15 = arith.constant 0 : index
      %28 = vector.load %arg4[%c0_14, %c0_15] : memref<1x128xf32, #tpu.memory_space<vmem>>, vector<1x128xf32>
      %29 = arith.mulf %28, %27 : vector<1x128xf32>
      %c0_16 = arith.constant 0 : index
      %c0_17 = arith.constant 0 : index
      %30 = vector.load %arg5[%c0_16, %c0_17] : memref<1x128xf32, #tpu.memory_space<vmem>>, vector<1x128xf32>
      %31 = arith.mulf %17, %29 : vector<1x128xf32>
      %32 = arith.subf %30, %31 : vector<1x128xf32>
      %33 = vector.broadcast %29 : vector<1x128xf32> to vector<256x128xf32>
      %34 = arith.mulf %7, %33 : vector<256x128xf32>
      %35 = vector.broadcast %32 : vector<1x128xf32> to vector<256x128xf32>
      %36 = arith.addf %34, %35 : vector<256x128xf32>
      %cst_18 = arith.constant 0.000000e+00 : f32
      %37 = vector.broadcast %cst_18 : f32 to vector<256x128xf32>
      %38 = arith.cmpf oge, %36, %37 : vector<256x128xf32>
      %cst_19 = arith.constant 2.000000e-01 : f32
      %39 = vector.broadcast %cst_19 : f32 to vector<256x128xf32>
      %40 = arith.mulf %39, %36 : vector<256x128xf32>
      %41 = arith.select %38, %36, %40 : vector<256x128xi1>, vector<256x128xf32>
      %42 = arith.truncf %41 : vector<256x128xf32> to vector<256x128xbf16>
      %c0_20 = arith.constant 0 : index
      %c0_21 = arith.constant 0 : index
      %43 = vector.load %arg6[%c0_20, %c0_21] : memref<256x128xbf16, #tpu.memory_space<vmem>>, vector<256x128xbf16>
      tpu.vector_store %arg6[%c0_20, %c0_21], %42 {strides = array<i32>} : memref<256x128xbf16, #tpu.memory_space<vmem>>, vector<256x128xbf16>,
    } else {
    }
    return
  }
  func.func @transform_0(%arg0: i32, %arg1: i32) -> (i32, i32) {
    %c0_i32 = arith.constant 0 : i32
    %c0_i32_0 = arith.constant 0 : i32
    return %arg1, %c0_i32 : i32, i32
  }
  func.func @transform_1(%arg0: i32, %arg1: i32) -> (i32, i32) {
    %c0_i32 = arith.constant 0 : i32
    %c0_i32_0 = arith.constant 0 : i32
    %c0_i32_1 = arith.constant 0 : i32
    return %c0_i32, %c0_i32_0 : i32, i32
  }
  func.func @transform_2(%arg0: i32, %arg1: i32) -> (i32, i32) {
    %c0_i32 = arith.constant 0 : i32
    %c0_i32_0 = arith.constant 0 : i32
    %c0_i32_1 = arith.constant 0 : i32
    return %c0_i32, %c0_i32_0 : i32, i32
  }
  func.func @transform_3(%arg0: i32, %arg1: i32) -> (i32, i32) {
    %c0_i32 = arith.constant 0 : i32
    %c0_i32_0 = arith.constant 0 : i32
    %c0_i32_1 = arith.constant 0 : i32
    return %c0_i32, %c0_i32_0 : i32, i32
  }
  func.func @transform_4(%arg0: i32, %arg1: i32) -> (i32, i32) {
    %c0_i32 = arith.constant 0 : i32
    %c0_i32_0 = arith.constant 0 : i32
    return %arg1, %c0_i32 : i32, i32
  }
}

module attributes {stable_mosaic.version = 11 : i64} {
  func.func @_conv_bn_act_kernel(%arg0: i32, %arg1: i32, %arg2: memref<56x384xbf16, #tpu.memory_space<vmem>>, %arg3: memref<384x128xbf16, #tpu.memory_space<vmem>>, %arg4: memref<1x128xf32, #tpu.memory_space<vmem>>, %arg5: memref<1x128xf32, #tpu.memory_space<vmem>>, %arg6: memref<56x128xbf16, #tpu.memory_space<vmem>>, %arg7: memref<2x128xf32, #tpu.memory_space<vmem>>) attributes {dimension_semantics = [#tpu.dimension_semantics<arbitrary>, #tpu.dimension_semantics<arbitrary>], iteration_bounds = array<i64: 2, 1>, scalar_prefetch = 0 : i64, scratch_operands = 1 : i64, tpu.core_type = #tpu.core_type<tc>, window_params = [{transform_indices = @transform_0, window_bounds = array<i64: 56, 384>}, {pipeline_mode = #tpu.pipeline_mode<synchronous>, transform_indices = @transform_1, window_bounds = array<i64: 384, 128>}, {pipeline_mode = #tpu.pipeline_mode<synchronous>, transform_indices = @transform_2, window_bounds = array<i64: 1, 128>}, {pipeline_mode = #tpu.pipeline_mode<synchronous>, transform_indices = @transform_3, window_bounds = array<i64: 1, 128>}, {transform_indices = @transform_4, window_bounds = array<i64: 56, 128>}]} {
    %c0_i32 = arith.constant 0 : i32
    %0 = arith.cmpi eq, %arg0, %c0_i32 : i32
    %c0_i32_0 = arith.constant 0 : i32
    %1 = arith.cmpi eq, %arg1, %c0_i32_0 : i32
    %2 = arith.andi %0, %1 : i1
    %3 = arith.extui %2 : i1 to i32
    %c0_i32_1 = arith.constant 0 : i32
    %4 = arith.cmpi ne, %3, %c0_i32_1 : i32
    scf.if %4 {
      %cst_8 = arith.constant 0.000000e+00 : f32
      %14 = vector.broadcast %cst_8 : f32 to vector<2x128xf32>
      %c0_9 = arith.constant 0 : index
      %c0_10 = arith.constant 0 : index
      %15 = vector.load %arg7[%c0_9, %c0_10] : memref<2x128xf32, #tpu.memory_space<vmem>>, vector<2x128xf32>
      tpu.vector_store %arg7[%c0_9, %c0_10], %14 {strides = array<i32>} : memref<2x128xf32, #tpu.memory_space<vmem>>, vector<2x128xf32>,
    } else {
    }
    %c0 = arith.constant 0 : index
    %c0_2 = arith.constant 0 : index
    %5 = vector.load %arg2[%c0, %c0_2] : memref<56x384xbf16, #tpu.memory_space<vmem>>, vector<56x384xbf16>
    %c0_3 = arith.constant 0 : index
    %c0_4 = arith.constant 0 : index
    %6 = vector.load %arg3[%c0_3, %c0_4] : memref<384x128xbf16, #tpu.memory_space<vmem>>, vector<384x128xbf16>
    %cst = arith.constant dense<0.000000e+00> : vector<56x128xf32>
    %7 = tpu.matmul %5, %6, %cst {dimension_numbers = #tpu.dot_dimension_numbers<[1], [0], [0], [1], [0, 0, 1, 1], [], []>} : vector<56x384xbf16>, vector<384x128xbf16>, vector<56x128xf32> -> vector<56x128xf32>
    %c0_i32_5 = arith.constant 0 : i32
    %8 = arith.cmpi eq, %arg0, %c0_i32_5 : i32
    %9 = arith.extui %8 : i1 to i32
    %c0_i32_6 = arith.constant 0 : i32
    %10 = arith.cmpi ne, %9, %c0_i32_6 : i32
    scf.if %10 {
      %cst_8 = arith.constant dense<0.000000e+00> : vector<128xf32>
      %14 = vector.multi_reduction <add>, %7, %cst_8 [0] : vector<56x128xf32> to vector<128xf32>
      %15 = vector.shape_cast %14 : vector<128xf32> to vector<1x128xf32>
      %16 = arith.mulf %7, %7 : vector<56x128xf32>
      %cst_9 = arith.constant dense<0.000000e+00> : vector<128xf32>
      %17 = vector.multi_reduction <add>, %16, %cst_9 [0] : vector<56x128xf32> to vector<128xf32>
      %18 = vector.shape_cast %17 : vector<128xf32> to vector<1x128xf32>
      %c0_10 = arith.constant 0 : index
      %c0_11 = arith.constant 0 : index
      %19 = vector.load %arg7[%c0_10, %c0_11] : memref<2x128xf32, #tpu.memory_space<vmem>>, vector<2x128xf32>
      %20 = tpu.concatenate %15, %18 in 0 : vector<1x128xf32>, vector<1x128xf32> -> vector<2x128xf32>
      %21 = arith.addf %19, %20 : vector<2x128xf32>
      %c0_12 = arith.constant 0 : index
      %c0_13 = arith.constant 0 : index
      %22 = vector.load %arg7[%c0_12, %c0_13] : memref<2x128xf32, #tpu.memory_space<vmem>>, vector<2x128xf32>
      tpu.vector_store %arg7[%c0_12, %c0_13], %21 {strides = array<i32>} : memref<2x128xf32, #tpu.memory_space<vmem>>, vector<2x128xf32>,
    } else {
    }
    %c1_i32 = arith.constant 1 : i32
    %11 = arith.cmpi eq, %arg0, %c1_i32 : i32
    %12 = arith.extui %11 : i1 to i32
    %c0_i32_7 = arith.constant 0 : i32
    %13 = arith.cmpi ne, %12, %c0_i32_7 : i32
    scf.if %13 {
      %c0_8 = arith.constant 0 : index
      %c0_9 = arith.constant 0 : index
      %14 = vector.load %arg7[%c0_8, %c0_9] : memref<2x128xf32, #tpu.memory_space<vmem>>, vector<2x128xf32>
      %15 = vector.extract_strided_slice %14 {offsets = [0, 0], sizes = [1, 128], strides = [1, 1]} : vector<2x128xf32> to vector<1x128xf32>
      %cst_10 = arith.constant 0.0185185187 : f32
      %16 = vector.broadcast %cst_10 : f32 to vector<1x128xf32>
      %17 = arith.mulf %15, %16 : vector<1x128xf32>
      %18 = vector.extract_strided_slice %14 {offsets = [1, 0], sizes = [1, 128], strides = [1, 1]} : vector<2x128xf32> to vector<1x128xf32>
      %cst_11 = arith.constant 0.0185185187 : f32
      %19 = vector.broadcast %cst_11 : f32 to vector<1x128xf32>
      %20 = arith.mulf %18, %19 : vector<1x128xf32>
      %21 = arith.mulf %17, %17 : vector<1x128xf32>
      %22 = arith.subf %20, %21 : vector<1x128xf32>
      %cst_12 = arith.constant 0.000000e+00 : f32
      %23 = vector.broadcast %cst_12 : f32 to vector<1x128xf32>
      %24 = arith.maximumf %22, %23 : vector<1x128xf32>
      %cst_13 = arith.constant 9.99999974E-6 : f32
      %25 = vector.broadcast %cst_13 : f32 to vector<1x128xf32>
      %26 = arith.addf %24, %25 : vector<1x128xf32>
      %27 = math.rsqrt %26 : vector<1x128xf32>
      %c0_14 = arith.constant 0 : index
      %c0_15 = arith.constant 0 : index
      %28 = vector.load %arg4[%c0_14, %c0_15] : memref<1x128xf32, #tpu.memory_space<vmem>>, vector<1x128xf32>
      %29 = arith.mulf %28, %27 : vector<1x128xf32>
      %c0_16 = arith.constant 0 : index
      %c0_17 = arith.constant 0 : index
      %30 = vector.load %arg5[%c0_16, %c0_17] : memref<1x128xf32, #tpu.memory_space<vmem>>, vector<1x128xf32>
      %31 = arith.mulf %17, %29 : vector<1x128xf32>
      %32 = arith.subf %30, %31 : vector<1x128xf32>
      %33 = vector.broadcast %29 : vector<1x128xf32> to vector<56x128xf32>
      %34 = arith.mulf %7, %33 : vector<56x128xf32>
      %35 = vector.broadcast %32 : vector<1x128xf32> to vector<56x128xf32>
      %36 = arith.addf %34, %35 : vector<56x128xf32>
      %cst_18 = arith.constant 0.000000e+00 : f32
      %37 = vector.broadcast %cst_18 : f32 to vector<56x128xf32>
      %38 = arith.cmpf oge, %36, %37 : vector<56x128xf32>
      %cst_19 = arith.constant 2.000000e-01 : f32
      %39 = vector.broadcast %cst_19 : f32 to vector<56x128xf32>
      %40 = arith.mulf %39, %36 : vector<56x128xf32>
      %41 = arith.select %38, %36, %40 : vector<56x128xi1>, vector<56x128xf32>
      %42 = arith.truncf %41 : vector<56x128xf32> to vector<56x128xbf16>
      %c0_20 = arith.constant 0 : index
      %c0_21 = arith.constant 0 : index
      %43 = vector.load %arg6[%c0_20, %c0_21] : memref<56x128xbf16, #tpu.memory_space<vmem>>, vector<56x128xbf16>
      tpu.vector_store %arg6[%c0_20, %c0_21], %42 {strides = array<i32>} : memref<56x128xbf16, #tpu.memory_space<vmem>>, vector<56x128xbf16>,
    } else {
    }
    return
  }
  func.func @transform_0(%arg0: i32, %arg1: i32) -> (i32, i32) {
    %c0_i32 = arith.constant 0 : i32
    %c0_i32_0 = arith.constant 0 : i32
    return %arg1, %c0_i32 : i32, i32
  }
  func.func @transform_1(%arg0: i32, %arg1: i32) -> (i32, i32) {
    %c0_i32 = arith.constant 0 : i32
    %c0_i32_0 = arith.constant 0 : i32
    %c0_i32_1 = arith.constant 0 : i32
    return %c0_i32, %c0_i32_0 : i32, i32
  }
  func.func @transform_2(%arg0: i32, %arg1: i32) -> (i32, i32) {
    %c0_i32 = arith.constant 0 : i32
    %c0_i32_0 = arith.constant 0 : i32
    %c0_i32_1 = arith.constant 0 : i32
    return %c0_i32, %c0_i32_0 : i32, i32
  }
  func.func @transform_3(%arg0: i32, %arg1: i32) -> (i32, i32) {
    %c0_i32 = arith.constant 0 : i32
    %c0_i32_0 = arith.constant 0 : i32
    %c0_i32_1 = arith.constant 0 : i32
    return %c0_i32, %c0_i32_0 : i32, i32
  }
  func.func @transform_4(%arg0: i32, %arg1: i32) -> (i32, i32) {
    %c0_i32 = arith.constant 0 : i32
    %c0_i32_0 = arith.constant 0 : i32
    return %arg1, %c0_i32 : i32, i32
  }
}

module attributes {stable_mosaic.version = 11 : i64} {
  func.func @_conv_bn_act_kernel(%arg0: i32, %arg1: i32, %arg2: memref<16x640xbf16, #tpu.memory_space<vmem>>, %arg3: memref<640x128xbf16, #tpu.memory_space<vmem>>, %arg4: memref<1x128xf32, #tpu.memory_space<vmem>>, %arg5: memref<1x128xf32, #tpu.memory_space<vmem>>, %arg6: memref<16x128xbf16, #tpu.memory_space<vmem>>, %arg7: memref<2x128xf32, #tpu.memory_space<vmem>>) attributes {dimension_semantics = [#tpu.dimension_semantics<arbitrary>, #tpu.dimension_semantics<arbitrary>], iteration_bounds = array<i64: 2, 1>, scalar_prefetch = 0 : i64, scratch_operands = 1 : i64, tpu.core_type = #tpu.core_type<tc>, window_params = [{transform_indices = @transform_0, window_bounds = array<i64: 16, 640>}, {pipeline_mode = #tpu.pipeline_mode<synchronous>, transform_indices = @transform_1, window_bounds = array<i64: 640, 128>}, {pipeline_mode = #tpu.pipeline_mode<synchronous>, transform_indices = @transform_2, window_bounds = array<i64: 1, 128>}, {pipeline_mode = #tpu.pipeline_mode<synchronous>, transform_indices = @transform_3, window_bounds = array<i64: 1, 128>}, {transform_indices = @transform_4, window_bounds = array<i64: 16, 128>}]} {
    %c0_i32 = arith.constant 0 : i32
    %0 = arith.cmpi eq, %arg0, %c0_i32 : i32
    %c0_i32_0 = arith.constant 0 : i32
    %1 = arith.cmpi eq, %arg1, %c0_i32_0 : i32
    %2 = arith.andi %0, %1 : i1
    %3 = arith.extui %2 : i1 to i32
    %c0_i32_1 = arith.constant 0 : i32
    %4 = arith.cmpi ne, %3, %c0_i32_1 : i32
    scf.if %4 {
      %cst_8 = arith.constant 0.000000e+00 : f32
      %14 = vector.broadcast %cst_8 : f32 to vector<2x128xf32>
      %c0_9 = arith.constant 0 : index
      %c0_10 = arith.constant 0 : index
      %15 = vector.load %arg7[%c0_9, %c0_10] : memref<2x128xf32, #tpu.memory_space<vmem>>, vector<2x128xf32>
      tpu.vector_store %arg7[%c0_9, %c0_10], %14 {strides = array<i32>} : memref<2x128xf32, #tpu.memory_space<vmem>>, vector<2x128xf32>,
    } else {
    }
    %c0 = arith.constant 0 : index
    %c0_2 = arith.constant 0 : index
    %5 = vector.load %arg2[%c0, %c0_2] : memref<16x640xbf16, #tpu.memory_space<vmem>>, vector<16x640xbf16>
    %c0_3 = arith.constant 0 : index
    %c0_4 = arith.constant 0 : index
    %6 = vector.load %arg3[%c0_3, %c0_4] : memref<640x128xbf16, #tpu.memory_space<vmem>>, vector<640x128xbf16>
    %cst = arith.constant dense<0.000000e+00> : vector<16x128xf32>
    %7 = tpu.matmul %5, %6, %cst {dimension_numbers = #tpu.dot_dimension_numbers<[1], [0], [0], [1], [0, 0, 1, 1], [], []>} : vector<16x640xbf16>, vector<640x128xbf16>, vector<16x128xf32> -> vector<16x128xf32>
    %c0_i32_5 = arith.constant 0 : i32
    %8 = arith.cmpi eq, %arg0, %c0_i32_5 : i32
    %9 = arith.extui %8 : i1 to i32
    %c0_i32_6 = arith.constant 0 : i32
    %10 = arith.cmpi ne, %9, %c0_i32_6 : i32
    scf.if %10 {
      %cst_8 = arith.constant dense<0.000000e+00> : vector<128xf32>
      %14 = vector.multi_reduction <add>, %7, %cst_8 [0] : vector<16x128xf32> to vector<128xf32>
      %15 = vector.shape_cast %14 : vector<128xf32> to vector<1x128xf32>
      %16 = arith.mulf %7, %7 : vector<16x128xf32>
      %cst_9 = arith.constant dense<0.000000e+00> : vector<128xf32>
      %17 = vector.multi_reduction <add>, %16, %cst_9 [0] : vector<16x128xf32> to vector<128xf32>
      %18 = vector.shape_cast %17 : vector<128xf32> to vector<1x128xf32>
      %c0_10 = arith.constant 0 : index
      %c0_11 = arith.constant 0 : index
      %19 = vector.load %arg7[%c0_10, %c0_11] : memref<2x128xf32, #tpu.memory_space<vmem>>, vector<2x128xf32>
      %20 = tpu.concatenate %15, %18 in 0 : vector<1x128xf32>, vector<1x128xf32> -> vector<2x128xf32>
      %21 = arith.addf %19, %20 : vector<2x128xf32>
      %c0_12 = arith.constant 0 : index
      %c0_13 = arith.constant 0 : index
      %22 = vector.load %arg7[%c0_12, %c0_13] : memref<2x128xf32, #tpu.memory_space<vmem>>, vector<2x128xf32>
      tpu.vector_store %arg7[%c0_12, %c0_13], %21 {strides = array<i32>} : memref<2x128xf32, #tpu.memory_space<vmem>>, vector<2x128xf32>,
    } else {
    }
    %c1_i32 = arith.constant 1 : i32
    %11 = arith.cmpi eq, %arg0, %c1_i32 : i32
    %12 = arith.extui %11 : i1 to i32
    %c0_i32_7 = arith.constant 0 : i32
    %13 = arith.cmpi ne, %12, %c0_i32_7 : i32
    scf.if %13 {
      %c0_8 = arith.constant 0 : index
      %c0_9 = arith.constant 0 : index
      %14 = vector.load %arg7[%c0_8, %c0_9] : memref<2x128xf32, #tpu.memory_space<vmem>>, vector<2x128xf32>
      %15 = vector.extract_strided_slice %14 {offsets = [0, 0], sizes = [1, 128], strides = [1, 1]} : vector<2x128xf32> to vector<1x128xf32>
      %cst_10 = arith.constant 0.0833333358 : f32
      %16 = vector.broadcast %cst_10 : f32 to vector<1x128xf32>
      %17 = arith.mulf %15, %16 : vector<1x128xf32>
      %18 = vector.extract_strided_slice %14 {offsets = [1, 0], sizes = [1, 128], strides = [1, 1]} : vector<2x128xf32> to vector<1x128xf32>
      %cst_11 = arith.constant 0.0833333358 : f32
      %19 = vector.broadcast %cst_11 : f32 to vector<1x128xf32>
      %20 = arith.mulf %18, %19 : vector<1x128xf32>
      %21 = arith.mulf %17, %17 : vector<1x128xf32>
      %22 = arith.subf %20, %21 : vector<1x128xf32>
      %cst_12 = arith.constant 0.000000e+00 : f32
      %23 = vector.broadcast %cst_12 : f32 to vector<1x128xf32>
      %24 = arith.maximumf %22, %23 : vector<1x128xf32>
      %cst_13 = arith.constant 9.99999974E-6 : f32
      %25 = vector.broadcast %cst_13 : f32 to vector<1x128xf32>
      %26 = arith.addf %24, %25 : vector<1x128xf32>
      %27 = math.rsqrt %26 : vector<1x128xf32>
      %c0_14 = arith.constant 0 : index
      %c0_15 = arith.constant 0 : index
      %28 = vector.load %arg4[%c0_14, %c0_15] : memref<1x128xf32, #tpu.memory_space<vmem>>, vector<1x128xf32>
      %29 = arith.mulf %28, %27 : vector<1x128xf32>
      %c0_16 = arith.constant 0 : index
      %c0_17 = arith.constant 0 : index
      %30 = vector.load %arg5[%c0_16, %c0_17] : memref<1x128xf32, #tpu.memory_space<vmem>>, vector<1x128xf32>
      %31 = arith.mulf %17, %29 : vector<1x128xf32>
      %32 = arith.subf %30, %31 : vector<1x128xf32>
      %33 = vector.broadcast %29 : vector<1x128xf32> to vector<16x128xf32>
      %34 = arith.mulf %7, %33 : vector<16x128xf32>
      %35 = vector.broadcast %32 : vector<1x128xf32> to vector<16x128xf32>
      %36 = arith.addf %34, %35 : vector<16x128xf32>
      %cst_18 = arith.constant 0.000000e+00 : f32
      %37 = vector.broadcast %cst_18 : f32 to vector<16x128xf32>
      %38 = arith.cmpf oge, %36, %37 : vector<16x128xf32>
      %cst_19 = arith.constant 2.000000e-01 : f32
      %39 = vector.broadcast %cst_19 : f32 to vector<16x128xf32>
      %40 = arith.mulf %39, %36 : vector<16x128xf32>
      %41 = arith.select %38, %36, %40 : vector<16x128xi1>, vector<16x128xf32>
      %42 = arith.truncf %41 : vector<16x128xf32> to vector<16x128xbf16>
      %c0_20 = arith.constant 0 : index
      %c0_21 = arith.constant 0 : index
      %43 = vector.load %arg6[%c0_20, %c0_21] : memref<16x128xbf16, #tpu.memory_space<vmem>>, vector<16x128xbf16>
      tpu.vector_store %arg6[%c0_20, %c0_21], %42 {strides = array<i32>} : memref<16x128xbf16, #tpu.memory_space<vmem>>, vector<16x128xbf16>,
    } else {
    }
    return
  }
  func.func @transform_0(%arg0: i32, %arg1: i32) -> (i32, i32) {
    %c0_i32 = arith.constant 0 : i32
    %c0_i32_0 = arith.constant 0 : i32
    return %arg1, %c0_i32 : i32, i32
  }
  func.func @transform_1(%arg0: i32, %arg1: i32) -> (i32, i32) {
    %c0_i32 = arith.constant 0 : i32
    %c0_i32_0 = arith.constant 0 : i32
    %c0_i32_1 = arith.constant 0 : i32
    return %c0_i32, %c0_i32_0 : i32, i32
  }
  func.func @transform_2(%arg0: i32, %arg1: i32) -> (i32, i32) {
    %c0_i32 = arith.constant 0 : i32
    %c0_i32_0 = arith.constant 0 : i32
    %c0_i32_1 = arith.constant 0 : i32
    return %c0_i32, %c0_i32_0 : i32, i32
  }
  func.func @transform_3(%arg0: i32, %arg1: i32) -> (i32, i32) {
    %c0_i32 = arith.constant 0 : i32
    %c0_i32_0 = arith.constant 0 : i32
    %c0_i32_1 = arith.constant 0 : i32
    return %c0_i32, %c0_i32_0 : i32, i32
  }
  func.func @transform_4(%arg0: i32, %arg1: i32) -> (i32, i32) {
    %c0_i32 = arith.constant 0 : i32
    %c0_i32_0 = arith.constant 0 : i32
    return %arg1, %c0_i32 : i32, i32
  }
}

module attributes {stable_mosaic.version = 11 : i64} {
  func.func @_conv_bias_act_kernel(%arg0: i32, %arg1: memref<8x1280xbf16, #tpu.memory_space<vmem>>, %arg2: memref<1280x128xbf16, #tpu.memory_space<vmem>>, %arg3: memref<1x128xf32, #tpu.memory_space<vmem>>, %arg4: memref<8x128xf32, #tpu.memory_space<vmem>>) attributes {dimension_semantics = [#tpu.dimension_semantics<parallel>], iteration_bounds = array<i64: 1>, scalar_prefetch = 0 : i64, scratch_operands = 0 : i64, tpu.core_type = #tpu.core_type<tc>, window_params = [{transform_indices = @transform_0, window_bounds = array<i64: 8, 1280>}, {pipeline_mode = #tpu.pipeline_mode<synchronous>, transform_indices = @transform_1, window_bounds = array<i64: 1280, 128>}, {pipeline_mode = #tpu.pipeline_mode<synchronous>, transform_indices = @transform_2, window_bounds = array<i64: 1, 128>}, {transform_indices = @transform_3, window_bounds = array<i64: 8, 128>}]} {
    %c0 = arith.constant 0 : index
    %c0_0 = arith.constant 0 : index
    %0 = vector.load %arg1[%c0, %c0_0] : memref<8x1280xbf16, #tpu.memory_space<vmem>>, vector<8x1280xbf16>
    %c0_1 = arith.constant 0 : index
    %c0_2 = arith.constant 0 : index
    %1 = vector.load %arg2[%c0_1, %c0_2] : memref<1280x128xbf16, #tpu.memory_space<vmem>>, vector<1280x128xbf16>
    %cst = arith.constant dense<0.000000e+00> : vector<8x128xf32>
    %2 = tpu.matmul %0, %1, %cst {dimension_numbers = #tpu.dot_dimension_numbers<[1], [0], [0], [1], [0, 0, 1, 1], [], []>} : vector<8x1280xbf16>, vector<1280x128xbf16>, vector<8x128xf32> -> vector<8x128xf32>
    %c0_3 = arith.constant 0 : index
    %c0_4 = arith.constant 0 : index
    %3 = vector.load %arg3[%c0_3, %c0_4] : memref<1x128xf32, #tpu.memory_space<vmem>>, vector<1x128xf32>
    %4 = vector.broadcast %3 : vector<1x128xf32> to vector<8x128xf32>
    %5 = arith.addf %2, %4 : vector<8x128xf32>
    %c0_5 = arith.constant 0 : index
    %c0_6 = arith.constant 0 : index
    %6 = vector.load %arg4[%c0_5, %c0_6] : memref<8x128xf32, #tpu.memory_space<vmem>>, vector<8x128xf32>
    tpu.vector_store %arg4[%c0_5, %c0_6], %5 {strides = array<i32>} : memref<8x128xf32, #tpu.memory_space<vmem>>, vector<8x128xf32>,
    return
  }
  func.func @transform_0(%arg0: i32) -> (i32, i32) {
    %c0_i32 = arith.constant 0 : i32
    %c0_i32_0 = arith.constant 0 : i32
    return %arg0, %c0_i32 : i32, i32
  }
  func.func @transform_1(%arg0: i32) -> (i32, i32) {
    %c0_i32 = arith.constant 0 : i32
    %c0_i32_0 = arith.constant 0 : i32
    %c0_i32_1 = arith.constant 0 : i32
    return %c0_i32, %c0_i32_0 : i32, i32
  }
  func.func @transform_2(%arg0: i32) -> (i32, i32) {
    %c0_i32 = arith.constant 0 : i32
    %c0_i32_0 = arith.constant 0 : i32
    %c0_i32_1 = arith.constant 0 : i32
    return %c0_i32, %c0_i32_0 : i32, i32
  }
  func.func @transform_3(%arg0: i32) -> (i32, i32) {
    %c0_i32 = arith.constant 0 : i32
    %c0_i32_0 = arith.constant 0 : i32
    return %arg0, %c0_i32 : i32, i32
  }
}

</mosaic_0001>

<llo_original>
// kernel: discriminator_forward.5
$region0: #{discriminator_forward.5}
  #allocation0 [shape = 'u32[]', space=smem, size = 0x4, offset = 0x4, fixed_abs, tag = 'smem constant byte address 0x4 - core index']
  #allocation1 [shape = 'u32[144,128]{1,0:T(1,128)}', space=vmem, size = 0x12000, scoped, tag = 'internal scratch']
  %s0 = inlined_call_operand.vmem [shape: bf16[1024,128], index: 0, kind: input, shape index: {}]
  %s1 = inlined_call_operand.vmem [shape: bf16[128,128], index: 1, kind: input, shape index: {}]
  %s2 = inlined_call_operand.vmem [shape: f32[1,128], index: 2, kind: input, shape index: {}]
  %s3 = inlined_call_operand.vmem [shape: bf16[1024,128], index: 3, kind: output, shape index: {}]
  %s4 = sld [smem:[#allocation0]]
  $region45: #{discriminator_forward.5} parent=0
    _
  %s6 = ssub.s32 1, %s4
  %s7 = scalar_select 0, %s6, %s4
  loop: start=0, step=1, limit=6
  $region2: #{discriminator_forward.5} parent=0 // loop_pre_header
    _
  $region3: #{discriminator_forward.5} parent=0 // loop_header
    %s9 = sphi 0, %s13
    %p10 = scmp.ge.s32.totalorder %s9, 6
    %s19 = sphi 0, %s21
    %s22 = sphi 0, %s19
    %s23 = sphi 0, %s22
    %s39 = sphi 0, %s23
    %s43 = sphi 0, %s43
    %s45 = sphi 0, %s43
    %s46 = sphi 0, %s45
    %s60 = sphi 0, %s46
    %s64 = sphi 0, %s64
    %s66 = sphi 0, %s64
    %s67 = sphi 0, %s66
    %s81 = sphi 0, %s67
    %s87 = sphi 0, %s89
    %s90 = sphi 0, %s87
    %s91 = sphi 0, %s90
    %s107 = sphi 0, %s91
  $region4: #{discriminator_forward.5} parent=0 // loop_header_branch
    %12 = sbr.rel (%p10) target = $region8
  $region5: #{discriminator_forward.5} parent=0 // loop_body
    %s14 = ssub.s32 %s9, 1
    %s15 = ssub.s32 %s9, 2
    %s16 = sadd.s32 %s9, 1
    %s17 = ssub.s32 %s9, %s16
    %p18 = scmp.eq.s32.totalorder %s17, 0
    %s20 = sadd.s32 %s19, 1
    %s21 = scalar_select %p18, %s19, %s20
    %p24 = pneg %p18
    %p25 = scmp.eq.s32.totalorder %s9, 3
    %p26 = por %p24, %p25
    %p27 = scmp.ne.s32.totalorder %s19, %s22
    %p28 = scmp.eq.s32.totalorder %s9, 0
    %p29 = por %p27, %p28
    %p30 = scmp.ne.s32.totalorder %s19, %s22
    %p31 = scmp.eq.s32.totalorder %s14, 3
    %p32 = por %p30, %p31
    %p33 = scmp.ne.s32.totalorder %s22, %s23
    %p34 = scmp.eq.s32.totalorder %s14, 0
    %p35 = por %p33, %p34
    %p36 = scmp.ne.s32.totalorder %s22, %s23
    %p37 = scmp.eq.s32.totalorder %s15, 3
    %p38 = por %p36, %p37
    %p40 = scmp.ne.s32.totalorder %s23, %s39
    %p41 = scmp.eq.s32.totalorder %s15, 0
    %p42 = por %p40, %p41
    %s44 = sadd.s32 %s43, 1
    %p47 = scmp.eq.s32.totalorder %s9, 3
    %p48 = scmp.ne.s32.totalorder %s43, %s45
    %p49 = scmp.eq.s32.totalorder %s9, 0
    %p50 = por %p48, %p49
    %p51 = scmp.ne.s32.totalorder %s43, %s45
    %p52 = scmp.eq.s32.totalorder %s14, 3
    %p53 = por %p51, %p52
    %p54 = scmp.ne.s32.totalorder %s45, %s46
    %p55 = scmp.eq.s32.totalorder %s14, 0
    %p56 = por %p54, %p55
    %p57 = scmp.ne.s32.totalorder %s45, %s46
    %p58 = scmp.eq.s32.totalorder %s15, 3
    %p59 = por %p57, %p58
    %p61 = scmp.ne.s32.totalorder %s46, %s60
    %p62 = scmp.eq.s32.totalorder %s15, 0
    %p63 = por %p61, %p62
    %s65 = sadd.s32 %s64, 1
    %p68 = scmp.eq.s32.totalorder %s9, 3
    %p69 = scmp.ne.s32.totalorder %s64, %s66
    %p70 = scmp.eq.s32.totalorder %s9, 0
    %p71 = por %p69, %p70
    %p72 = scmp.ne.s32.totalorder %s64, %s66
    %p73 = scmp.eq.s32.totalorder %s14, 3
    %p74 = por %p72, %p73
    %p75 = scmp.ne.s32.totalorder %s66, %s67
    %p76 = scmp.eq.s32.totalorder %s14, 0
    %p77 = por %p75, %p76
    %p78 = scmp.ne.s32.totalorder %s66, %s67
    %p79 = scmp.eq.s32.totalorder %s15, 3
    %p80 = por %p78, %p79
    %p82 = scmp.ne.s32.totalorder %s67, %s81
    %p83 = scmp.eq.s32.totalorder %s15, 0
    %p84 = por %p82, %p83
    %s85 = ssub.s32 %s9, %s16
    %p86 = scmp.eq.s32.totalorder %s85, 0
    %s88 = sadd.s32 %s87, 1
    %s89 = scalar_select %p86, %s87, %s88
    %p92 = pneg %p86
    %p93 = scmp.eq.s32.totalorder %s9, 3
    %p94 = por %p92, %p93
    %p95 = scmp.ne.s32.totalorder %s87, %s90
    %p96 = scmp.eq.s32.totalorder %s9, 0
    %p97 = por %p95, %p96
    %p98 = scmp.ne.s32.totalorder %s87, %s90
    %p99 = scmp.eq.s32.totalorder %s14, 3
    %p100 = por %p98, %p99
    %p101 = scmp.ne.s32.totalorder %s90, %s91
    %p102 = scmp.eq.s32.totalorder %s14, 0
    %p103 = por %p101, %p102
    %p104 = scmp.ne.s32.totalorder %s90, %s91
    %p105 = scmp.eq.s32.totalorder %s15, 3
    %p106 = por %p104, %p105
    %p108 = scmp.ne.s32.totalorder %s91, %s107
    %p109 = scmp.eq.s32.totalorder %s15, 0
    %p110 = por %p108, %p109
    %p111 = scmp.le.s32.totalorder 1, %s9
    %p112 = scmp.lt.s32.totalorder %s9, 5
    %p113 = pnand %p111, %p112
    %p114 = pneg %p113
    // Predicated region
    $region9: #{discriminator_forward.5} parent=5 // pred_check
      _
    $region10: #{discriminator_forward.5} parent=5 // pred_check_branch
      %116 = sbr.rel (%p113) target = $region12
    $region11: #{discriminator_forward.5} parent=5 // pred_region
      %s117 = ssub.s32 %s9, 1
      // Predicated region
      $region13: #{discriminator_forward.5} parent=11 // pred_check
        %p118 = pneg %p56
      $region14: #{discriminator_forward.5} parent=11 // pred_check_branch
        %120 = sbr.rel (%p118) target = $region16
      $region15: #{discriminator_forward.5} parent=11 // pred_region
        _
      $region16: #{discriminator_forward.5} parent=11 // pred_fallthru
        _
      // Predicated region
      $region17: #{discriminator_forward.5} parent=11 // pred_check
        %p121 = pneg %p77
      $region18: #{discriminator_forward.5} parent=11 // pred_check_branch
        %123 = sbr.rel (%p121) target = $region20
      $region19: #{discriminator_forward.5} parent=11 // pred_region
        _
      $region20: #{discriminator_forward.5} parent=11 // pred_fallthru
        _
    $region12: #{discriminator_forward.5} parent=5 // pred_fallthru
      _
    %p124 = scmp.lt.s32.totalorder %s9, 4
    // Predicated region
    $region21: #{discriminator_forward.5} parent=5 // pred_check
      %p125 = pneg %p124
    $region22: #{discriminator_forward.5} parent=5 // pred_check_branch
      %127 = sbr.rel (%p125) target = $region24
    $region23: #{discriminator_forward.5} parent=5 // pred_region
      // Predicated region
      $region25: #{discriminator_forward.5} parent=23 // pred_check
        %p128 = pneg %p29
      $region26: #{discriminator_forward.5} parent=23 // pred_check_branch
        %130 = sbr.rel (%p128) target = $region28
      $region27: #{discriminator_forward.5} parent=23 // pred_region
        %s131 = smul.u32 32, %s9
        %p132 = scmp.lt.s32.totalorder %s131, 127
        %s133 = scalar_select %p132, %s131, 127
        %s134 = smul.addr %s133, 4
        %s135 = scalar_lea.vmem %s0, %s134
        %s136 = smul.u32 32, %s9
      $region28: #{discriminator_forward.5} parent=23 // pred_fallthru
        _
    $region24: #{discriminator_forward.5} parent=5 // pred_fallthru
      _
    %p137 = scmp.le.s32.totalorder 1, %s9
    %p138 = scmp.lt.s32.totalorder %s9, 5
    %p139 = pnand %p137, %p138
    %p140 = pneg %p139
    // Predicated region
    $region29: #{discriminator_forward.5} parent=5 // pred_check
      _
    $region30: #{discriminator_forward.5} parent=5 // pred_check_branch
      %142 = sbr.rel (%p139) target = $region32
    $region31: #{discriminator_forward.5} parent=5 // pred_region
      %s143 = ssub.s32 %s9, 1
      %s144 = smul.u32 32, %s14
      %p145 = scmp.lt.s32.totalorder %s144, 127
      %s146 = scalar_select %p145, %s144, 127
      %s147 = smul.addr %s146, 4
      %s148 = scalar_lea.vmem %s0, %s147
      %p149 = pneg %p35
      %p150 = pneg %p32
      %p151 = pneg %p56
      %p152 = pneg %p53
      %p153 = pneg %p77
      %p154 = pneg %p74
      %p155 = pneg %p103
      %p156 = pneg %p100
      %s157 = smul.u32 32, %s14
      %p158 = scmp.lt.s32.totalorder %s157, 127
      %s159 = scalar_select %p158, %s157, 127
      %s160 = smul.addr %s159, 4
      %s161 = scalar_lea.vmem %s3, %s160
      %s162 = smul.u32 32, %s14
      %p163 = scmp.lt.s32.totalorder %s162, 127
      %s164 = scalar_select %p163, %s162, 127
      %s165 = smul.addr %s164, 4
      %s166 = scalar_lea.vmem %s0, %s165
      %s167 = smul.u32 32, %s14
      %s168 = smul.u32 32, %s14
      %p169 = scmp.lt.s32.totalorder %s168, 127
      %s170 = scalar_select %p169, %s168, 127
      %s171 = smul.addr %s170, 4
      %s172 = scalar_lea.vmem %s3, %s171
      %s173 = smul.u32 32, %s14
      %v175 = vld [vmem:[%s166] sm:$0xf]
      %v176 = vld [vmem:[%s166 + $0x4] sm:$0xf]
      %v177 = vld [vmem:[%s166 + $0x8] sm:$0xf]
      %v178 = vld [vmem:[%s166 + $0xc] sm:$0xf]
      %v179 = vld [vmem:[%s166 + $0x10] sm:$0xf]
      %v180 = vld [vmem:[%s166 + $0x14] sm:$0xf]
      %v181 = vld [vmem:[%s166 + $0x18] sm:$0xf]
      %v182 = vld [vmem:[%s166 + $0x1c] sm:$0xf]
      %v183 = vld [vmem:[%s166 + $0x20] sm:$0xf]
      %v184 = vld [vmem:[%s166 + $0x24] sm:$0xf]
      %v185 = vld [vmem:[%s166 + $0x28] sm:$0xf]
      %v186 = vld [vmem:[%s166 + $0x2c] sm:$0xf]
      %v187 = vld [vmem:[%s166 + $0x30] sm:$0xf]
      %v188 = vld [vmem:[%s166 + $0x34] sm:$0xf]
      %v189 = vld [vmem:[%s166 + $0x38] sm:$0xf]
      %v190 = vld [vmem:[%s166 + $0x3c] sm:$0xf]
      %v191 = vld [vmem:[%s166 + $0x40] sm:$0xf]
      %v192 = vld [vmem:[%s166 + $0x44] sm:$0xf]
      %v193 = vld [vmem:[%s166 + $0x48] sm:$0xf]
      %v194 = vld [vmem:[%s166 + $0x4c] sm:$0xf]
      %v195 = vld [vmem:[%s166 + $0x50] sm:$0xf]
      %v196 = vld [vmem:[%s166 + $0x54] sm:$0xf]
      %v197 = vld [vmem:[%s166 + $0x58] sm:$0xf]
      %v198 = vld [vmem:[%s166 + $0x5c] sm:$0xf]
      %v199 = vld [vmem:[%s166 + $0x60] sm:$0xf]
      %v200 = vld [vmem:[%s166 + $0x64] sm:$0xf]
      %v201 = vld [vmem:[%s166 + $0x68] sm:$0xf]
      %v202 = vld [vmem:[%s166 + $0x6c] sm:$0xf]
      %v203 = vld [vmem:[%s166 + $0x70] sm:$0xf]
      %v204 = vld [vmem:[%s166 + $0x74] sm:$0xf]
      %v205 = vld [vmem:[%s166 + $0x78] sm:$0xf]
      %v206 = vld [vmem:[%s166 + $0x7c] sm:$0xf]
      %v207 = vld [vmem:[%s1] sm:$0xf]
      %v208 = vld [vmem:[%s1 + $0x4] sm:$0xf]
      %v209 = vld [vmem:[%s1 + $0x8] sm:$0xf]
      %v210 = vld [vmem:[%s1 + $0xc] sm:$0xf]
      %v211 = vld [vmem:[%s1 + $0x10] sm:$0xf]
      %v212 = vld [vmem:[%s1 + $0x14] sm:$0xf]
      %v213 = vld [vmem:[%s1 + $0x18] sm:$0xf]
      %v214 = vld [vmem:[%s1 + $0x1c] sm:$0xf]
      %v215 = vld [vmem:[%s1 + $0x20] sm:$0xf]
      %v216 = vld [vmem:[%s1 + $0x24] sm:$0xf]
      %v217 = vld [vmem:[%s1 + $0x28] sm:$0xf]
      %v218 = vld [vmem:[%s1 + $0x2c] sm:$0xf]
      %v219 = vld [vmem:[%s1 + $0x30] sm:$0xf]
      %v220 = vld [vmem:[%s1 + $0x34] sm:$0xf]
      %v221 = vld [vmem:[%s1 + $0x38] sm:$0xf]
      %v222 = vld [vmem:[%s1 + $0x3c] sm:$0xf]
      %v223 = vld [vmem:[%s2] sm:$0x1]
      %v225 = vlaneseq
      %v226 = vshrl.u32 %v225, 7
      %v227 = vsub.s32 0, %v226
      %v228 = vrot.slane %v223, %v227
      %v262 = vunpack.c.l.b16 %v175
      %v263 = vunpack.c.l.b16 %v176
      %v264 = vunpack.c.l.b16 %v177
      %v265 = vunpack.c.l.b16 %v178
      %v266 = vunpack.c.l.b16 %v179
      %v267 = vunpack.c.l.b16 %v180
      %v268 = vunpack.c.l.b16 %v181
      %v269 = vunpack.c.l.b16 %v182
      %v270 = vunpack.c.l.b16 %v183
      %v271 = vunpack.c.l.b16 %v184
      %v272 = vunpack.c.l.b16 %v185
      %v273 = vunpack.c.l.b16 %v186
      %v274 = vunpack.c.l.b16 %v187
      %v275 = vunpack.c.l.b16 %v188
      %v276 = vunpack.c.l.b16 %v189
      %v277 = vunpack.c.l.b16 %v190
      %v278 = vunpack.c.l.b16 %v191
      %v279 = vunpack.c.l.b16 %v192
      %v280 = vunpack.c.l.b16 %v193
      %v281 = vunpack.c.l.b16 %v194
      %v282 = vunpack.c.l.b16 %v195
      %v283 = vunpack.c.l.b16 %v196
      %v284 = vunpack.c.l.b16 %v197
      %v285 = vunpack.c.l.b16 %v198
      %v286 = vunpack.c.l.b16 %v199
      %v287 = vunpack.c.l.b16 %v200
      %v288 = vunpack.c.l.b16 %v201
      %v289 = vunpack.c.l.b16 %v202
      %v290 = vunpack.c.l.b16 %v203
      %v291 = vunpack.c.l.b16 %v204
      %v292 = vunpack.c.l.b16 %v205
      %v293 = vunpack.c.l.b16 %v206
      %v294 = vpack.c.b16 %v263, %v262
      %v295 = vpack.c.b16 %v265, %v264
      %v296 = vpack.c.b16 %v267, %v266
      %v297 = vpack.c.b16 %v269, %v268
      %v298 = vpack.c.b16 %v271, %v270
      %v299 = vpack.c.b16 %v273, %v272
      %v300 = vpack.c.b16 %v275, %v274
      %v301 = vpack.c.b16 %v277, %v276
      %v302 = vpack.c.b16 %v279, %v278
      %v303 = vpack.c.b16 %v281, %v280
      %v304 = vpack.c.b16 %v283, %v282
      %v305 = vpack.c.b16 %v285, %v284
      %v306 = vpack.c.b16 %v287, %v286
      %v307 = vpack.c.b16 %v289, %v288
      %v308 = vpack.c.b16 %v291, %v290
      %v309 = vpack.c.b16 %v293, %v292
      %v342 = vunpack.c.l.b16 %v207
      %v343 = vunpack.c.l.b16 %v208
      %v344 = vunpack.c.l.b16 %v209
      %v345 = vunpack.c.l.b16 %v210
      %v346 = vunpack.c.l.b16 %v211
      %v347 = vunpack.c.l.b16 %v212
      %v348 = vunpack.c.l.b16 %v213
      %v349 = vunpack.c.l.b16 %v214
      %v350 = vunpack.c.l.b16 %v215
      %v351 = vunpack.c.l.b16 %v216
      %v352 = vunpack.c.l.b16 %v217
      %v353 = vunpack.c.l.b16 %v218
      %v354 = vunpack.c.l.b16 %v219
      %v355 = vunpack.c.l.b16 %v220
      %v356 = vunpack.c.l.b16 %v221
      %v357 = vunpack.c.l.b16 %v222
      %v358 = vpack.c.b16 %v343, %v342
      %v359 = vpack.c.b16 %v345, %v344
      %v360 = vpack.c.b16 %v347, %v346
      %v361 = vpack.c.b16 %v349, %v348
      %v362 = vpack.c.b16 %v351, %v350
      %v363 = vpack.c.b16 %v353, %v352
      %v364 = vpack.c.b16 %v355, %v354
      %v365 = vpack.c.b16 %v357, %v356
      %374 = vmatprep.subr.bf16.mxu0 0
      %375 = vmatpush1.bf16.msra.mxu0 %v358
      %376 = vmatprep.subr.bf16.mxu0 0
      %377 = vmatpush1.bf16.msra.mxu0 %v359
      %378 = vmatprep.subr.bf16.mxu0 0
      %379 = vmatpush1.bf16.msra.mxu0 %v360
      %380 = vmatprep.subr.bf16.mxu0 0
      %381 = vmatpush1.bf16.msra.mxu0 %v361
      %382 = vmatprep.subr.bf16.mxu0 0
      %383 = vmatpush1.bf16.msra.mxu0 %v362
      %384 = vmatprep.subr.bf16.mxu0 0
      %385 = vmatpush1.bf16.msra.mxu0 %v363
      %386 = vmatprep.subr.bf16.mxu0 0
      %387 = vmatpush1.bf16.msra.mxu0 %v364
      %388 = vmatprep.subr.bf16.mxu0 0
      %389 = vmatpush1.bf16.msra.mxu0 %v365
      %390 = vmatprep.subr.bf16.mxu0 0
      %391 = vmatpush1.bf16.msra.mxu0 0
      %392 = vmatprep.subr.bf16.mxu0 0
      %393 = vmatpush1.bf16.msra.mxu0 0
      %394 = vmatprep.subr.bf16.mxu0 0
      %395 = vmatpush1.bf16.msra.mxu0 0
      %396 = vmatprep.subr.bf16.mxu0 0
      %397 = vmatpush1.bf16.msra.mxu0 0
      %398 = vmatprep.subr.bf16.mxu0 0
      %399 = vmatpush1.bf16.msra.mxu0 0
      %400 = vmatprep.subr.bf16.mxu0 0
      %401 = vmatpush1.bf16.msra.mxu0 0
      %402 = vmatprep.subr.bf16.mxu0 0
      %403 = vmatpush1.bf16.msra.mxu0 0
      %404 = vmatprep.subr.bf16.mxu0 0
      %405 = vmatpush1.bf16.msra.mxu0 0
      %406 = vmatprep.mubr.bf16.mxu0 0
      %407 = vmatmul.mubr.bf16.gmra.mrb[0].mxu0 %v294
      %v408 = vpop.f32.mrb[0].mxu0
      %v409 = vadd.f32 %v228, %v408
      %v410 = vpop.f32.mrb[0].mxu0
      %v411 = vpop.f32.mrb[0].mxu0
      %v412 = vadd.f32 %v228, %v411
      %v413 = vpop.f32.mrb[0].mxu0
      %414 = vmatprep.mubr.bf16.mxu0 0
      %415 = vmatmul.mubr.bf16.gmra.mrb[0].mxu0 %v295
      %v416 = vpop.f32.mrb[0].mxu0
      %v417 = vadd.f32 %v228, %v416
      %v418 = vpop.f32.mrb[0].mxu0
      %v419 = vpop.f32.mrb[0].mxu0
      %v420 = vadd.f32 %v228, %v419
      %v421 = vpop.f32.mrb[0].mxu0
      %422 = vmatprep.mubr.bf16.mxu0 0
      %423 = vmatmul.mubr.bf16.gmra.mrb[0].mxu0 %v296
      %v424 = vpop.f32.mrb[0].mxu0
      %v425 = vadd.f32 %v228, %v424
      %v426 = vpop.f32.mrb[0].mxu0
      %v427 = vpop.f32.mrb[0].mxu0
      %v428 = vadd.f32 %v228, %v427
      %v429 = vpop.f32.mrb[0].mxu0
      %430 = vmatprep.mubr.bf16.mxu0 0
      %431 = vmatmul.mubr.bf16.gmra.mrb[0].mxu0 %v297
      %v432 = vpop.f32.mrb[0].mxu0
      %v433 = vadd.f32 %v228, %v432
      %v434 = vpop.f32.mrb[0].mxu0
      %v435 = vpop.f32.mrb[0].mxu0
      %v436 = vadd.f32 %v228, %v435
      %v437 = vpop.f32.mrb[0].mxu0
      %438 = vmatprep.mubr.bf16.mxu0 0
      %439 = vmatmul.mubr.bf16.gmra.mrb[0].mxu0 %v298
      %v440 = vpop.f32.mrb[0].mxu0
      %v441 = vadd.f32 %v228, %v440
      %v442 = vpop.f32.mrb[0].mxu0
      %v443 = vpop.f32.mrb[0].mxu0
      %v444 = vadd.f32 %v228, %v443
      %v445 = vpop.f32.mrb[0].mxu0
      %446 = vmatprep.mubr.bf16.mxu0 0
      %447 = vmatmul.mubr.bf16.gmra.mrb[0].mxu0 %v299
      %v448 = vpop.f32.mrb[0].mxu0
      %v449 = vadd.f32 %v228, %v448
      %v450 = vpop.f32.mrb[0].mxu0
      %v451 = vpop.f32.mrb[0].mxu0
      %v452 = vadd.f32 %v228, %v451
      %v453 = vpop.f32.mrb[0].mxu0
      %454 = vmatprep.mubr.bf16.mxu0 0
      %455 = vmatmul.mubr.bf16.gmra.mrb[0].mxu0 %v300
      %v456 = vpop.f32.mrb[0].mxu0
      %v457 = vadd.f32 %v228, %v456
      %v458 = vpop.f32.mrb[0].mxu0
      %v459 = vpop.f32.mrb[0].mxu0
      %v460 = vadd.f32 %v228, %v459
      %v461 = vpop.f32.mrb[0].mxu0
      %462 = vmatprep.mubr.bf16.mxu0 0
      %463 = vmatmul.mubr.bf16.gmra.mrb[0].mxu0 %v301
      %v464 = vpop.f32.mrb[0].mxu0
      %v465 = vadd.f32 %v228, %v464
      %v466 = vpop.f32.mrb[0].mxu0
      %v467 = vpop.f32.mrb[0].mxu0
      %v468 = vadd.f32 %v228, %v467
      %v469 = vpop.f32.mrb[0].mxu0
      %470 = vmatprep.mubr.bf16.mxu0 0
      %471 = vmatmul.mubr.bf16.gmra.mrb[0].mxu0 %v302
      %v472 = vpop.f32.mrb[0].mxu0
      %v473 = vadd.f32 %v228, %v472
      %v474 = vpop.f32.mrb[0].mxu0
      %v475 = vpop.f32.mrb[0].mxu0
      %v476 = vadd.f32 %v228, %v475
      %v477 = vpop.f32.mrb[0].mxu0
      %478 = vmatprep.mubr.bf16.mxu0 0
      %479 = vmatmul.mubr.bf16.gmra.mrb[0].mxu0 %v303
      %v480 = vpop.f32.mrb[0].mxu0
      %v481 = vadd.f32 %v228, %v480
      %v482 = vpop.f32.mrb[0].mxu0
      %v483 = vpop.f32.mrb[0].mxu0
      %v484 = vadd.f32 %v228, %v483
      %v485 = vpop.f32.mrb[0].mxu0
      %486 = vmatprep.mubr.bf16.mxu0 0
      %487 = vmatmul.mubr.bf16.gmra.mrb[0].mxu0 %v304
      %v488 = vpop.f32.mrb[0].mxu0
      %v489 = vadd.f32 %v228, %v488
      %v490 = vpop.f32.mrb[0].mxu0
      %v491 = vpop.f32.mrb[0].mxu0
      %v492 = vadd.f32 %v228, %v491
      %v493 = vpop.f32.mrb[0].mxu0
      %494 = vmatprep.mubr.bf16.mxu0 0
      %495 = vmatmul.mubr.bf16.gmra.mrb[0].mxu0 %v305
      %v496 = vpop.f32.mrb[0].mxu0
      %v497 = vadd.f32 %v228, %v496
      %v498 = vpop.f32.mrb[0].mxu0
      %v499 = vpop.f32.mrb[0].mxu0
      %v500 = vadd.f32 %v228, %v499
      %v501 = vpop.f32.mrb[0].mxu0
      %502 = vmatprep.mubr.bf16.mxu0 0
      %503 = vmatmul.mubr.bf16.gmra.mrb[0].mxu0 %v306
      %v504 = vpop.f32.mrb[0].mxu0
      %v505 = vadd.f32 %v228, %v504
      %v506 = vpop.f32.mrb[0].mxu0
      %v507 = vpop.f32.mrb[0].mxu0
      %v508 = vadd.f32 %v228, %v507
      %v509 = vpop.f32.mrb[0].mxu0
      %510 = vmatprep.mubr.bf16.mxu0 0
      %511 = vmatmul.mubr.bf16.gmra.mrb[0].mxu0 %v307
      %v512 = vpop.f32.mrb[0].mxu0
      %v513 = vadd.f32 %v228, %v512
      %v514 = vpop.f32.mrb[0].mxu0
      %v515 = vpop.f32.mrb[0].mxu0
      %v516 = vadd.f32 %v228, %v515
      %v517 = vpop.f32.mrb[0].mxu0
      %518 = vmatprep.mubr.bf16.mxu0 0
      %519 = vmatmul.mubr.bf16.gmra.mrb[0].mxu0 %v308
      %v520 = vpop.f32.mrb[0].mxu0
      %v521 = vadd.f32 %v228, %v520
      %v522 = vpop.f32.mrb[0].mxu0
      %v523 = vpop.f32.mrb[0].mxu0
      %v524 = vadd.f32 %v228, %v523
      %v525 = vpop.f32.mrb[0].mxu0
      %526 = vmatprep.mubr.bf16.mxu0 0
      %527 = vmatmul.mubr.bf16.gmra.mrb[0].mxu0 %v309
      %v528 = vpop.f32.mrb[0].mxu0
      %v529 = vadd.f32 %v228, %v528
      %v530 = vpop.f32.mrb[0].mxu0
      %v531 = vpop.f32.mrb[0].mxu0
      %v532 = vadd.f32 %v228, %v531
      %v533 = vpop.f32.mrb[0].mxu0
      %534 = vdwg.mxu0
      %vm535 = vcmp.ge.f32.partialorder %v409, 0.0
      %vm536 = vcmp.ge.f32.partialorder %v412, 0.0
      %vm537 = vcmp.ge.f32.partialorder %v417, 0.0
      %vm538 = vcmp.ge.f32.partialorder %v420, 0.0
      %vm539 = vcmp.ge.f32.partialorder %v425, 0.0
      %vm540 = vcmp.ge.f32.partialorder %v428, 0.0
      %vm541 = vcmp.ge.f32.partialorder %v433, 0.0
      %vm542 = vcmp.ge.f32.partialorder %v436, 0.0
      %vm543 = vcmp.ge.f32.partialorder %v441, 0.0
      %vm544 = vcmp.ge.f32.partialorder %v444, 0.0
      %vm545 = vcmp.ge.f32.partialorder %v449, 0.0
      %vm546 = vcmp.ge.f32.partialorder %v452, 0.0
      %vm547 = vcmp.ge.f32.partialorder %v457, 0.0
      %vm548 = vcmp.ge.f32.partialorder %v460, 0.0
      %vm549 = vcmp.ge.f32.partialorder %v465, 0.0
      %vm550 = vcmp.ge.f32.partialorder %v468, 0.0
      %vm551 = vcmp.ge.f32.partialorder %v473, 0.0
      %vm552 = vcmp.ge.f32.partialorder %v476, 0.0
      %vm553 = vcmp.ge.f32.partialorder %v481, 0.0
      %vm554 = vcmp.ge.f32.partialorder %v484, 0.0
      %vm555 = vcmp.ge.f32.partialorder %v489, 0.0
      %vm556 = vcmp.ge.f32.partialorder %v492, 0.0
      %vm557 = vcmp.ge.f32.partialorder %v497, 0.0
      %vm558 = vcmp.ge.f32.partialorder %v500, 0.0
      %vm559 = vcmp.ge.f32.partialorder %v505, 0.0
      %vm560 = vcmp.ge.f32.partialorder %v508, 0.0
      %vm561 = vcmp.ge.f32.partialorder %v513, 0.0
      %vm562 = vcmp.ge.f32.partialorder %v516, 0.0
      %vm563 = vcmp.ge.f32.partialorder %v521, 0.0
      %vm564 = vcmp.ge.f32.partialorder %v524, 0.0
      %vm565 = vcmp.ge.f32.partialorder %v529, 0.0
      %vm566 = vcmp.ge.f32.partialorder %v532, 0.0
      %v567 = vmul.f32 %v409, 0.2
      %v568 = vmul.f32 %v412, 0.2
      %v569 = vmul.f32 %v417, 0.2
      %v570 = vmul.f32 %v420, 0.2
      %v571 = vmul.f32 %v425, 0.2
      %v572 = vmul.f32 %v428, 0.2
      %v573 = vmul.f32 %v433, 0.2
      %v574 = vmul.f32 %v436, 0.2
      %v575 = vmul.f32 %v441, 0.2
      %v576 = vmul.f32 %v444, 0.2
      %v577 = vmul.f32 %v449, 0.2
      %v578 = vmul.f32 %v452, 0.2
      %v579 = vmul.f32 %v457, 0.2
      %v580 = vmul.f32 %v460, 0.2
      %v581 = vmul.f32 %v465, 0.2
      %v582 = vmul.f32 %v468, 0.2
      %v583 = vmul.f32 %v473, 0.2
      %v584 = vmul.f32 %v476, 0.2
      %v585 = vmul.f32 %v481, 0.2
      %v586 = vmul.f32 %v484, 0.2
      %v587 = vmul.f32 %v489, 0.2
      %v588 = vmul.f32 %v492, 0.2
      %v589 = vmul.f32 %v497, 0.2
      %v590 = vmul.f32 %v500, 0.2
      %v591 = vmul.f32 %v505, 0.2
      %v592 = vmul.f32 %v508, 0.2
      %v593 = vmul.f32 %v513, 0.2
      %v594 = vmul.f32 %v516, 0.2
      %v595 = vmul.f32 %v521, 0.2
      %v596 = vmul.f32 %v524, 0.2
      %v597 = vmul.f32 %v529, 0.2
      %v598 = vmul.f32 %v532, 0.2
      %v599 = vsel %vm535, %v409, %v567
      %v600 = vsel %vm536, %v412, %v568
      %v601 = vsel %vm537, %v417, %v569
      %v602 = vsel %vm538, %v420, %v570
      %v603 = vsel %vm539, %v425, %v571
      %v604 = vsel %vm540, %v428, %v572
      %v605 = vsel %vm541, %v433, %v573
      %v606 = vsel %vm542, %v436, %v574
      %v607 = vsel %vm543, %v441, %v575
      %v608 = vsel %vm544, %v444, %v576
      %v609 = vsel %vm545, %v449, %v577
      %v610 = vsel %vm546, %v452, %v578
      %v611 = vsel %vm547, %v457, %v579
      %v612 = vsel %vm548, %v460, %v580
      %v613 = vsel %vm549, %v465, %v581
      %v614 = vsel %vm550, %v468, %v582
      %v615 = vsel %vm551, %v473, %v583
      %v616 = vsel %vm552, %v476, %v584
      %v617 = vsel %vm553, %v481, %v585
      %v618 = vsel %vm554, %v484, %v586
      %v619 = vsel %vm555, %v489, %v587
      %v620 = vsel %vm556, %v492, %v588
      %v621 = vsel %vm557, %v497, %v589
      %v622 = vsel %vm558, %v500, %v590
      %v623 = vsel %vm559, %v505, %v591
      %v624 = vsel %vm560, %v508, %v592
      %v625 = vsel %vm561, %v513, %v593
      %v626 = vsel %vm562, %v516, %v594
      %v627 = vsel %vm563, %v521, %v595
      %v628 = vsel %vm564, %v524, %v596
      %v629 = vsel %vm565, %v529, %v597
      %v630 = vsel %vm566, %v532, %v598
      %v631 = vpack.c.bf16 %v600, %v599
      %v632 = vpack.c.bf16 %v602, %v601
      %v633 = vpack.c.bf16 %v604, %v603
      %v634 = vpack.c.bf16 %v606, %v605
      %v635 = vpack.c.bf16 %v608, %v607
      %v636 = vpack.c.bf16 %v610, %v609
      %v637 = vpack.c.bf16 %v612, %v611
      %v638 = vpack.c.bf16 %v614, %v613
      %v639 = vpack.c.bf16 %v616, %v615
      %v640 = vpack.c.bf16 %v618, %v617
      %v641 = vpack.c.bf16 %v620, %v619
      %v642 = vpack.c.bf16 %v622, %v621
      %v643 = vpack.c.bf16 %v624, %v623
      %v644 = vpack.c.bf16 %v626, %v625
      %v645 = vpack.c.bf16 %v628, %v627
      %v646 = vpack.c.bf16 %v630, %v629
      %v663 = vunpack.c.l.b16 %v631
      %v664 = vunpack.c.h.b16 %v631
      %v665 = vunpack.c.l.b16 %v632
      %v666 = vunpack.c.h.b16 %v632
      %v667 = vunpack.c.l.b16 %v633
      %v668 = vunpack.c.h.b16 %v633
      %v669 = vunpack.c.l.b16 %v634
      %v670 = vunpack.c.h.b16 %v634
      %v671 = vunpack.c.l.b16 %v635
      %v672 = vunpack.c.h.b16 %v635
      %v673 = vunpack.c.l.b16 %v636
      %v674 = vunpack.c.h.b16 %v636
      %v675 = vunpack.c.l.b16 %v637
      %v676 = vunpack.c.h.b16 %v637
      %v677 = vunpack.c.l.b16 %v638
      %v678 = vunpack.c.h.b16 %v638
      %v679 = vunpack.c.l.b16 %v639
      %v680 = vunpack.c.h.b16 %v639
      %v681 = vunpack.c.l.b16 %v640
      %v682 = vunpack.c.h.b16 %v640
      %v683 = vunpack.c.l.b16 %v641
      %v684 = vunpack.c.h.b16 %v641
      %v685 = vunpack.c.l.b16 %v642
      %v686 = vunpack.c.h.b16 %v642
      %v687 = vunpack.c.l.b16 %v643
      %v688 = vunpack.c.h.b16 %v643
      %v689 = vunpack.c.l.b16 %v644
      %v690 = vunpack.c.h.b16 %v644
      %v691 = vunpack.c.l.b16 %v645
      %v692 = vunpack.c.h.b16 %v645
      %v693 = vunpack.c.l.b16 %v646
      %v694 = vunpack.c.h.b16 %v646
      %v695 = vpack.c.b16 %v663, %v663
      %v696 = vpack.c.b16 %v664, %v664
      %v697 = vpack.c.b16 %v665, %v665
      %v698 = vpack.c.b16 %v666, %v666
      %v699 = vpack.c.b16 %v667, %v667
      %v700 = vpack.c.b16 %v668, %v668
      %v701 = vpack.c.b16 %v669, %v669
      %v702 = vpack.c.b16 %v670, %v670
      %v703 = vpack.c.b16 %v671, %v671
      %v704 = vpack.c.b16 %v672, %v672
      %v705 = vpack.c.b16 %v673, %v673
      %v706 = vpack.c.b16 %v674, %v674
      %v707 = vpack.c.b16 %v675, %v675
      %v708 = vpack.c.b16 %v676, %v676
      %v709 = vpack.c.b16 %v677, %v677
      %v710 = vpack.c.b16 %v678, %v678
      %v711 = vpack.c.b16 %v679, %v679
      %v712 = vpack.c.b16 %v680, %v680
      %v713 = vpack.c.b16 %v681, %v681
      %v714 = vpack.c.b16 %v682, %v682
      %v715 = vpack.c.b16 %v683, %v683
      %v716 = vpack.c.b16 %v684, %v684
      %v717 = vpack.c.b16 %v685, %v685
      %v718 = vpack.c.b16 %v686, %v686
      %v719 = vpack.c.b16 %v687, %v687
      %v720 = vpack.c.b16 %v688, %v688
      %v721 = vpack.c.b16 %v689, %v689
      %v722 = vpack.c.b16 %v690, %v690
      %v723 = vpack.c.b16 %v691, %v691
      %v724 = vpack.c.b16 %v692, %v692
      %v725 = vpack.c.b16 %v693, %v693
      %v726 = vpack.c.b16 %v694, %v694
      %759 = vst [vmem:[%s172] sm:$0xf] %v695
      %760 = vst [vmem:[%s172 + $0x4] sm:$0xf] %v696
      %761 = vst [vmem:[%s172 + $0x8] sm:$0xf] %v697
      %762 = vst [vmem:[%s172 + $0xc] sm:$0xf] %v698
      %763 = vst [vmem:[%s172 + $0x10] sm:$0xf] %v699
      %764 = vst [vmem:[%s172 + $0x14] sm:$0xf] %v700
      %765 = vst [vmem:[%s172 + $0x18] sm:$0xf] %v701
      %766 = vst [vmem:[%s172 + $0x1c] sm:$0xf] %v702
      %767 = vst [vmem:[%s172 + $0x20] sm:$0xf] %v703
      %768 = vst [vmem:[%s172 + $0x24] sm:$0xf] %v704
      %769 = vst [vmem:[%s172 + $0x28] sm:$0xf] %v705
      %770 = vst [vmem:[%s172 + $0x2c] sm:$0xf] %v706
      %771 = vst [vmem:[%s172 + $0x30] sm:$0xf] %v707
      %772 = vst [vmem:[%s172 + $0x34] sm:$0xf] %v708
      %773 = vst [vmem:[%s172 + $0x38] sm:$0xf] %v709
      %774 = vst [vmem:[%s172 + $0x3c] sm:$0xf] %v710
      %775 = vst [vmem:[%s172 + $0x40] sm:$0xf] %v711
      %776 = vst [vmem:[%s172 + $0x44] sm:$0xf] %v712
      %777 = vst [vmem:[%s172 + $0x48] sm:$0xf] %v713
      %778 = vst [vmem:[%s172 + $0x4c] sm:$0xf] %v714
      %779 = vst [vmem:[%s172 + $0x50] sm:$0xf] %v715
      %780 = vst [vmem:[%s172 + $0x54] sm:$0xf] %v716
      %781 = vst [vmem:[%s172 + $0x58] sm:$0xf] %v717
      %782 = vst [vmem:[%s172 + $0x5c] sm:$0xf] %v718
      %783 = vst [vmem:[%s172 + $0x60] sm:$0xf] %v719
      %784 = vst [vmem:[%s172 + $0x64] sm:$0xf] %v720
      %785 = vst [vmem:[%s172 + $0x68] sm:$0xf] %v721
      %786 = vst [vmem:[%s172 + $0x6c] sm:$0xf] %v722
      %787 = vst [vmem:[%s172 + $0x70] sm:$0xf] %v723
      %788 = vst [vmem:[%s172 + $0x74] sm:$0xf] %v724
      %789 = vst [vmem:[%s172 + $0x78] sm:$0xf] %v725
      %790 = vst [vmem:[%s172 + $0x7c] sm:$0xf] %v726
      %s791 = smul.u32 32, %s14
      %p792 = scmp.lt.s32.totalorder %s791, 127
      %s793 = scalar_select %p792, %s791, 127
      %s794 = smul.addr %s793, 4
      %s795 = scalar_lea.vmem %s3, %s794
      // Predicated region
      $region33: #{discriminator_forward.5} parent=31 // pred_check
        %p796 = pneg %p100
      $region34: #{discriminator_forward.5} parent=31 // pred_check_branch
        %798 = sbr.rel (%p796) target = $region36
      $region35: #{discriminator_forward.5} parent=31 // pred_region
        %s799 = smul.u32 32, %s14
      $region36: #{discriminator_forward.5} parent=31 // pred_fallthru
        _
    $region32: #{discriminator_forward.5} parent=5 // pred_fallthru
      _
    %p800 = scmp.le.s32.totalorder 2, %s9
    // Predicated region
    $region37: #{discriminator_forward.5} parent=5 // pred_check
      %p801 = pneg %p800
    $region38: #{discriminator_forward.5} parent=5 // pred_check_branch
      %803 = sbr.rel (%p801) target = $region40
    $region39: #{discriminator_forward.5} parent=5 // pred_region
      %s804 = ssub.s32 %s9, 2
      // Predicated region
      $region41: #{discriminator_forward.5} parent=39 // pred_check
        %p805 = pneg %p106
      $region42: #{discriminator_forward.5} parent=39 // pred_check_branch
        %807 = sbr.rel (%p805) target = $region44
      $region43: #{discriminator_forward.5} parent=39 // pred_region
        %s808 = smul.u32 32, %s15
        %p809 = scmp.lt.s32.totalorder %s808, 127
        %s810 = scalar_select %p809, %s808, 127
        %s811 = smul.addr %s810, 4
        %s812 = scalar_lea.vmem %s3, %s811
      $region44: #{discriminator_forward.5} parent=39 // pred_fallthru
        _
    $region40: #{discriminator_forward.5} parent=5 // pred_fallthru
      _
  $region6: #{discriminator_forward.5} parent=0 // loop_footer
    %s13 = sadd.s32 1, %s9
  $region7: #{discriminator_forward.5} parent=0 // loop_footer_branch
    %8 = sbr.rel target = $region3
  $region8: #{discriminator_forward.5} parent=0 // loop_exit
    _

// kernel: discriminator_forward.6
$region0: #{discriminator_forward.6}
  #allocation0 [shape = 'u32[]', space=smem, size = 0x4, offset = 0x4, fixed_abs, tag = 'smem constant byte address 0x4 - core index']
  #allocation1 [shape = 'u32[144,128]{1,0:T(1,128)}', space=vmem, size = 0x12000, scoped, tag = 'internal scratch']
  #allocation2 [shape = 'f32[2,128]{1,0:T(2,128)}', space=vmem, size = 0x400, scoped, tag = 'scratch operand']
  %s0 = inlined_call_operand.vmem [shape: bf16[512,128], index: 0, kind: input, shape index: {}]
  %s1 = inlined_call_operand.vmem [shape: bf16[128,128], index: 1, kind: input, shape index: {}]
  %s2 = inlined_call_operand.vmem [shape: f32[1,128], index: 2, kind: input, shape index: {}]
  %s3 = inlined_call_operand.vmem [shape: f32[1,128], index: 3, kind: input, shape index: {}]
  %s4 = inlined_call_operand.vmem [shape: bf16[512,128], index: 4, kind: output, shape index: {}]
  %s5 = sld [smem:[#allocation0]]
  $region61: #{discriminator_forward.6} parent=0
    _
  %s7 = ssub.s32 1, %s5
  %s8 = scalar_select 0, %s7, %s5
  loop: start=0, step=1, limit=6
  $region2: #{discriminator_forward.6} parent=0 // loop_pre_header
    _
  $region3: #{discriminator_forward.6} parent=0 // loop_header
    %s10 = sphi 0, %s14
    %p11 = scmp.ge.s32.totalorder %s10, 6
    %s17 = sphi 0, %s29
    %s18 = sphi 0, %s25
    %s19 = sphi 0, %s17
    %s20 = sphi 0, %s18
    %s21 = sphi 0, %s19
    %s22 = sphi 0, %s20
    %s32 = sphi 0, %s34
    %s35 = sphi 0, %s32
    %s36 = sphi 0, %s35
    %s52 = sphi 0, %s36
    %s56 = sphi 0, %s56
    %s58 = sphi 0, %s56
    %s59 = sphi 0, %s58
    %s73 = sphi 0, %s59
    %s77 = sphi 0, %s77
    %s79 = sphi 0, %s77
    %s80 = sphi 0, %s79
    %s94 = sphi 0, %s80
    %s98 = sphi 0, %s98
    %s100 = sphi 0, %s98
    %s101 = sphi 0, %s100
    %s115 = sphi 0, %s101
    %s121 = sphi 0, %s123
    %s124 = sphi 0, %s121
    %s125 = sphi 0, %s124
    %s141 = sphi 0, %s125
  $region4: #{discriminator_forward.6} parent=0 // loop_header_branch
    %13 = sbr.rel (%p11) target = $region8
  $region5: #{discriminator_forward.6} parent=0 // loop_body
    %s15 = ssub.s32 %s10, 1
    %s16 = ssub.s32 %s10, 2
    %s23 = sadd.s32 1, %s18
    %p24 = scmp.ge.s32.totalorder %s23, 2
    %s25 = scalar_select %p24, 0, %s23
    %s26 = sadd.s32 1, %s17
    %s27 = scalar_select %p24, %s26, %s17
    %p28 = scmp.ge.s32.totalorder %s27, 2
    %s29 = scalar_select %p28, 0, %s27
    %s30 = ssub.s32 %s18, %s25
    %p31 = scmp.eq.s32.totalorder %s30, 0
    %s33 = sadd.s32 %s32, 1
    %s34 = scalar_select %p31, %s32, %s33
    %p37 = pneg %p31
    %p38 = scmp.eq.s32.totalorder %s10, 3
    %p39 = por %p37, %p38
    %p40 = scmp.ne.s32.totalorder %s32, %s35
    %p41 = scmp.eq.s32.totalorder %s10, 0
    %p42 = por %p40, %p41
    %p43 = scmp.ne.s32.totalorder %s32, %s35
    %p44 = scmp.eq.s32.totalorder %s15, 3
    %p45 = por %p43, %p44
    %p46 = scmp.ne.s32.totalorder %s35, %s36
    %p47 = scmp.eq.s32.totalorder %s15, 0
    %p48 = por %p46, %p47
    %p49 = scmp.ne.s32.totalorder %s35, %s36
    %p50 = scmp.eq.s32.totalorder %s16, 3
    %p51 = por %p49, %p50
    %p53 = scmp.ne.s32.totalorder %s36, %s52
    %p54 = scmp.eq.s32.totalorder %s16, 0
    %p55 = por %p53, %p54
    %s57 = sadd.s32 %s56, 1
    %p60 = scmp.eq.s32.totalorder %s10, 3
    %p61 = scmp.ne.s32.totalorder %s56, %s58
    %p62 = scmp.eq.s32.totalorder %s10, 0
    %p63 = por %p61, %p62
    %p64 = scmp.ne.s32.totalorder %s56, %s58
    %p65 = scmp.eq.s32.totalorder %s15, 3
    %p66 = por %p64, %p65
    %p67 = scmp.ne.s32.totalorder %s58, %s59
    %p68 = scmp.eq.s32.totalorder %s15, 0
    %p69 = por %p67, %p68
    %p70 = scmp.ne.s32.totalorder %s58, %s59
    %p71 = scmp.eq.s32.totalorder %s16, 3
    %p72 = por %p70, %p71
    %p74 = scmp.ne.s32.totalorder %s59, %s73
    %p75 = scmp.eq.s32.totalorder %s16, 0
    %p76 = por %p74, %p75
    %s78 = sadd.s32 %s77, 1
    %p81 = scmp.eq.s32.totalorder %s10, 3
    %p82 = scmp.ne.s32.totalorder %s77, %s79
    %p83 = scmp.eq.s32.totalorder %s10, 0
    %p84 = por %p82, %p83
    %p85 = scmp.ne.s32.totalorder %s77, %s79
    %p86 = scmp.eq.s32.totalorder %s15, 3
    %p87 = por %p85, %p86
    %p88 = scmp.ne.s32.totalorder %s79, %s80
    %p89 = scmp.eq.s32.totalorder %s15, 0
    %p90 = por %p88, %p89
    %p91 = scmp.ne.s32.totalorder %s79, %s80
    %p92 = scmp.eq.s32.totalorder %s16, 3
    %p93 = por %p91, %p92
    %p95 = scmp.ne.s32.totalorder %s80, %s94
    %p96 = scmp.eq.s32.totalorder %s16, 0
    %p97 = por %p95, %p96
    %s99 = sadd.s32 %s98, 1
    %p102 = scmp.eq.s32.totalorder %s10, 3
    %p103 = scmp.ne.s32.totalorder %s98, %s100
    %p104 = scmp.eq.s32.totalorder %s10, 0
    %p105 = por %p103, %p104
    %p106 = scmp.ne.s32.totalorder %s98, %s100
    %p107 = scmp.eq.s32.totalorder %s15, 3
    %p108 = por %p106, %p107
    %p109 = scmp.ne.s32.totalorder %s100, %s101
    %p110 = scmp.eq.s32.totalorder %s15, 0
    %p111 = por %p109, %p110
    %p112 = scmp.ne.s32.totalorder %s100, %s101
    %p113 = scmp.eq.s32.totalorder %s16, 3
    %p114 = por %p112, %p113
    %p116 = scmp.ne.s32.totalorder %s101, %s115
    %p117 = scmp.eq.s32.totalorder %s16, 0
    %p118 = por %p116, %p117
    %s119 = ssub.s32 %s18, %s25
    %p120 = scmp.eq.s32.totalorder %s119, 0
    %s122 = sadd.s32 %s121, 1
    %s123 = scalar_select %p120, %s121, %s122
    %p126 = pneg %p120
    %p127 = scmp.eq.s32.totalorder %s10, 3
    %p128 = por %p126, %p127
    %p129 = scmp.ne.s32.totalorder %s121, %s124
    %p130 = scmp.eq.s32.totalorder %s10, 0
    %p131 = por %p129, %p130
    %p132 = scmp.ne.s32.totalorder %s121, %s124
    %p133 = scmp.eq.s32.totalorder %s15, 3
    %p134 = por %p132, %p133
    %p135 = scmp.ne.s32.totalorder %s124, %s125
    %p136 = scmp.eq.s32.totalorder %s15, 0
    %p137 = por %p135, %p136
    %p138 = scmp.ne.s32.totalorder %s124, %s125
    %p139 = scmp.eq.s32.totalorder %s16, 3
    %p140 = por %p138, %p139
    %p142 = scmp.ne.s32.totalorder %s125, %s141
    %p143 = scmp.eq.s32.totalorder %s16, 0
    %p144 = por %p142, %p143
    %p145 = scmp.le.s32.totalorder 1, %s10
    %p146 = scmp.lt.s32.totalorder %s10, 5
    %p147 = pnand %p145, %p146
    %p148 = pneg %p147
    // Predicated region
    $region9: #{discriminator_forward.6} parent=5 // pred_check
      _
    $region10: #{discriminator_forward.6} parent=5 // pred_check_branch
      %150 = sbr.rel (%p147) target = $region12
    $region11: #{discriminator_forward.6} parent=5 // pred_region
      %s151 = ssub.s32 %s10, 1
      // Predicated region
      $region13: #{discriminator_forward.6} parent=11 // pred_check
        %p152 = pneg %p69
      $region14: #{discriminator_forward.6} parent=11 // pred_check_branch
        %154 = sbr.rel (%p152) target = $region16
      $region15: #{discriminator_forward.6} parent=11 // pred_region
        _
      $region16: #{discriminator_forward.6} parent=11 // pred_fallthru
        _
      // Predicated region
      $region17: #{discriminator_forward.6} parent=11 // pred_check
        %p155 = pneg %p90
      $region18: #{discriminator_forward.6} parent=11 // pred_check_branch
        %157 = sbr.rel (%p155) target = $region20
      $region19: #{discriminator_forward.6} parent=11 // pred_region
        _
      $region20: #{discriminator_forward.6} parent=11 // pred_fallthru
        _
      // Predicated region
      $region21: #{discriminator_forward.6} parent=11 // pred_check
        %p158 = pneg %p111
      $region22: #{discriminator_forward.6} parent=11 // pred_check_branch
        %160 = sbr.rel (%p158) target = $region24
      $region23: #{discriminator_forward.6} parent=11 // pred_region
        _
      $region24: #{discriminator_forward.6} parent=11 // pred_fallthru
        _
    $region12: #{discriminator_forward.6} parent=5 // pred_fallthru
      _
    %p161 = scmp.lt.s32.totalorder %s10, 4
    // Predicated region
    $region25: #{discriminator_forward.6} parent=5 // pred_check
      %p162 = pneg %p161
    $region26: #{discriminator_forward.6} parent=5 // pred_check_branch
      %164 = sbr.rel (%p162) target = $region28
    $region27: #{discriminator_forward.6} parent=5 // pred_region
      // Predicated region
      $region29: #{discriminator_forward.6} parent=27 // pred_check
        %p165 = pneg %p42
      $region30: #{discriminator_forward.6} parent=27 // pred_check_branch
        %167 = sbr.rel (%p165) target = $region32
      $region31: #{discriminator_forward.6} parent=27 // pred_region
        %s168 = smul.u32 32, %s18
        %p169 = scmp.lt.s32.totalorder %s168, 63
        %s170 = scalar_select %p169, %s168, 63
        %s171 = smul.addr %s170, 4
        %s172 = scalar_lea.vmem %s0, %s171
        %s173 = smul.u32 32, %s18
      $region32: #{discriminator_forward.6} parent=27 // pred_fallthru
        _
    $region28: #{discriminator_forward.6} parent=5 // pred_fallthru
      _
    %p174 = scmp.le.s32.totalorder 1, %s10
    %p175 = scmp.lt.s32.totalorder %s10, 5
    %p176 = pnand %p174, %p175
    %p177 = pneg %p176
    // Predicated region
    $region33: #{discriminator_forward.6} parent=5 // pred_check
      _
    $region34: #{discriminator_forward.6} parent=5 // pred_check_branch
      %179 = sbr.rel (%p176) target = $region36
    $region35: #{discriminator_forward.6} parent=5 // pred_region
      %s180 = ssub.s32 %s10, 1
      %s181 = smul.u32 32, %s20
      %p182 = scmp.lt.s32.totalorder %s181, 63
      %s183 = scalar_select %p182, %s181, 63
      %s184 = smul.addr %s183, 4
      %s185 = scalar_lea.vmem %s0, %s184
      %p186 = pneg %p48
      %p187 = pneg %p45
      %p188 = pneg %p69
      %p189 = pneg %p66
      %p190 = pneg %p90
      %p191 = pneg %p87
      %p192 = pneg %p111
      %p193 = pneg %p108
      %p194 = pneg %p137
      %p195 = pneg %p134
      %s196 = smul.u32 32, %s20
      %p197 = scmp.lt.s32.totalorder %s196, 63
      %s198 = scalar_select %p197, %s196, 63
      %s199 = smul.addr %s198, 4
      %s200 = scalar_lea.vmem %s4, %s199
      %s201 = smul.u32 32, %s20
      %p202 = scmp.lt.s32.totalorder %s201, 63
      %s203 = scalar_select %p202, %s201, 63
      %s204 = smul.addr %s203, 4
      %s205 = scalar_lea.vmem %s0, %s204
      %s206 = smul.u32 32, %s20
      %s207 = smul.u32 32, %s20
      %p208 = scmp.lt.s32.totalorder %s207, 63
      %s209 = scalar_select %p208, %s207, 63
      %s210 = smul.addr %s209, 4
      %s211 = scalar_lea.vmem %s4, %s210
      %s212 = smul.u32 32, %s20
      %p214 = scmp.eq.s32.totalorder %s19, 0
      %p215 = scmp.eq.s32.totalorder %s20, 0
      %p216 = pnand %p214, %p215
      %p217 = pneg %p216
      // Predicated region
      $region37: #{discriminator_forward.6} parent=35 // pred_check
        _
      $region38: #{discriminator_forward.6} parent=35 // pred_check_branch
        %219 = sbr.rel (%p216) target = $region40
      $region39: #{discriminator_forward.6} parent=35 // pred_region
        %220 = vst [vmem:[#allocation2] sm:$0x3] 0.0
      $region40: #{discriminator_forward.6} parent=35 // pred_fallthru
        _
      %v221 = vld [vmem:[%s205] sm:$0xf]
      %v222 = vld [vmem:[%s205 + $0x4] sm:$0xf]
      %v223 = vld [vmem:[%s205 + $0x8] sm:$0xf]
      %v224 = vld [vmem:[%s205 + $0xc] sm:$0xf]
      %v225 = vld [vmem:[%s205 + $0x10] sm:$0xf]
      %v226 = vld [vmem:[%s205 + $0x14] sm:$0xf]
      %v227 = vld [vmem:[%s205 + $0x18] sm:$0xf]
      %v228 = vld [vmem:[%s205 + $0x1c] sm:$0xf]
      %v229 = vld [vmem:[%s205 + $0x20] sm:$0xf]
      %v230 = vld [vmem:[%s205 + $0x24] sm:$0xf]
      %v231 = vld [vmem:[%s205 + $0x28] sm:$0xf]
      %v232 = vld [vmem:[%s205 + $0x2c] sm:$0xf]
      %v233 = vld [vmem:[%s205 + $0x30] sm:$0xf]
      %v234 = vld [vmem:[%s205 + $0x34] sm:$0xf]
      %v235 = vld [vmem:[%s205 + $0x38] sm:$0xf]
      %v236 = vld [vmem:[%s205 + $0x3c] sm:$0xf]
      %v237 = vld [vmem:[%s205 + $0x40] sm:$0xf]
      %v238 = vld [vmem:[%s205 + $0x44] sm:$0xf]
      %v239 = vld [vmem:[%s205 + $0x48] sm:$0xf]
      %v240 = vld [vmem:[%s205 + $0x4c] sm:$0xf]
      %v241 = vld [vmem:[%s205 + $0x50] sm:$0xf]
      %v242 = vld [vmem:[%s205 + $0x54] sm:$0xf]
      %v243 = vld [vmem:[%s205 + $0x58] sm:$0xf]
      %v244 = vld [vmem:[%s205 + $0x5c] sm:$0xf]
      %v245 = vld [vmem:[%s205 + $0x60] sm:$0xf]
      %v246 = vld [vmem:[%s205 + $0x64] sm:$0xf]
      %v247 = vld [vmem:[%s205 + $0x68] sm:$0xf]
      %v248 = vld [vmem:[%s205 + $0x6c] sm:$0xf]
      %v249 = vld [vmem:[%s205 + $0x70] sm:$0xf]
      %v250 = vld [vmem:[%s205 + $0x74] sm:$0xf]
      %v251 = vld [vmem:[%s205 + $0x78] sm:$0xf]
      %v252 = vld [vmem:[%s205 + $0x7c] sm:$0xf]
      %v253 = vld [vmem:[%s1] sm:$0xf]
      %v254 = vld [vmem:[%s1 + $0x4] sm:$0xf]
      %v255 = vld [vmem:[%s1 + $0x8] sm:$0xf]
      %v256 = vld [vmem:[%s1 + $0xc] sm:$0xf]
      %v257 = vld [vmem:[%s1 + $0x10] sm:$0xf]
      %v258 = vld [vmem:[%s1 + $0x14] sm:$0xf]
      %v259 = vld [vmem:[%s1 + $0x18] sm:$0xf]
      %v260 = vld [vmem:[%s1 + $0x1c] sm:$0xf]
      %v261 = vld [vmem:[%s1 + $0x20] sm:$0xf]
      %v262 = vld [vmem:[%s1 + $0x24] sm:$0xf]
      %v263 = vld [vmem:[%s1 + $0x28] sm:$0xf]
      %v264 = vld [vmem:[%s1 + $0x2c] sm:$0xf]
      %v265 = vld [vmem:[%s1 + $0x30] sm:$0xf]
      %v266 = vld [vmem:[%s1 + $0x34] sm:$0xf]
      %v267 = vld [vmem:[%s1 + $0x38] sm:$0xf]
      %v268 = vld [vmem:[%s1 + $0x3c] sm:$0xf]
      %v301 = vunpack.c.l.b16 %v221
      %v302 = vunpack.c.l.b16 %v222
      %v303 = vunpack.c.l.b16 %v223
      %v304 = vunpack.c.l.b16 %v224
      %v305 = vunpack.c.l.b16 %v225
      %v306 = vunpack.c.l.b16 %v226
      %v307 = vunpack.c.l.b16 %v227
      %v308 = vunpack.c.l.b16 %v228
      %v309 = vunpack.c.l.b16 %v229
      %v310 = vunpack.c.l.b16 %v230
      %v311 = vunpack.c.l.b16 %v231
      %v312 = vunpack.c.l.b16 %v232
      %v313 = vunpack.c.l.b16 %v233
      %v314 = vunpack.c.l.b16 %v234
      %v315 = vunpack.c.l.b16 %v235
      %v316 = vunpack.c.l.b16 %v236
      %v317 = vunpack.c.l.b16 %v237
      %v318 = vunpack.c.l.b16 %v238
      %v319 = vunpack.c.l.b16 %v239
      %v320 = vunpack.c.l.b16 %v240
      %v321 = vunpack.c.l.b16 %v241
      %v322 = vunpack.c.l.b16 %v242
      %v323 = vunpack.c.l.b16 %v243
      %v324 = vunpack.c.l.b16 %v244
      %v325 = vunpack.c.l.b16 %v245
      %v326 = vunpack.c.l.b16 %v246
      %v327 = vunpack.c.l.b16 %v247
      %v328 = vunpack.c.l.b16 %v248
      %v329 = vunpack.c.l.b16 %v249
      %v330 = vunpack.c.l.b16 %v250
      %v331 = vunpack.c.l.b16 %v251
      %v332 = vunpack.c.l.b16 %v252
      %v333 = vpack.c.b16 %v302, %v301
      %v334 = vpack.c.b16 %v304, %v303
      %v335 = vpack.c.b16 %v306, %v305
      %v336 = vpack.c.b16 %v308, %v307
      %v337 = vpack.c.b16 %v310, %v309
      %v338 = vpack.c.b16 %v312, %v311
      %v339 = vpack.c.b16 %v314, %v313
      %v340 = vpack.c.b16 %v316, %v315
      %v341 = vpack.c.b16 %v318, %v317
      %v342 = vpack.c.b16 %v320, %v319
      %v343 = vpack.c.b16 %v322, %v321
      %v344 = vpack.c.b16 %v324, %v323
      %v345 = vpack.c.b16 %v326, %v325
      %v346 = vpack.c.b16 %v328, %v327
      %v347 = vpack.c.b16 %v330, %v329
      %v348 = vpack.c.b16 %v332, %v331
      %v381 = vunpack.c.l.b16 %v253
      %v382 = vunpack.c.l.b16 %v254
      %v383 = vunpack.c.l.b16 %v255
      %v384 = vunpack.c.l.b16 %v256
      %v385 = vunpack.c.l.b16 %v257
      %v386 = vunpack.c.l.b16 %v258
      %v387 = vunpack.c.l.b16 %v259
      %v388 = vunpack.c.l.b16 %v260
      %v389 = vunpack.c.l.b16 %v261
      %v390 = vunpack.c.l.b16 %v262
      %v391 = vunpack.c.l.b16 %v263
      %v392 = vunpack.c.l.b16 %v264
      %v393 = vunpack.c.l.b16 %v265
      %v394 = vunpack.c.l.b16 %v266
      %v395 = vunpack.c.l.b16 %v267
      %v396 = vunpack.c.l.b16 %v268
      %v397 = vpack.c.b16 %v382, %v381
      %v398 = vpack.c.b16 %v384, %v383
      %v399 = vpack.c.b16 %v386, %v385
      %v400 = vpack.c.b16 %v388, %v387
      %v401 = vpack.c.b16 %v390, %v389
      %v402 = vpack.c.b16 %v392, %v391
      %v403 = vpack.c.b16 %v394, %v393
      %v404 = vpack.c.b16 %v396, %v395
      %413 = vmatprep.subr.bf16.mxu0 0
      %414 = vmatpush1.bf16.msra.mxu0 %v397
      %415 = vmatprep.subr.bf16.mxu0 0
      %416 = vmatpush1.bf16.msra.mxu0 %v398
      %417 = vmatprep.subr.bf16.mxu0 0
      %418 = vmatpush1.bf16.msra.mxu0 %v399
      %419 = vmatprep.subr.bf16.mxu0 0
      %420 = vmatpush1.bf16.msra.mxu0 %v400
      %421 = vmatprep.subr.bf16.mxu0 0
      %422 = vmatpush1.bf16.msra.mxu0 %v401
      %423 = vmatprep.subr.bf16.mxu0 0
      %424 = vmatpush1.bf16.msra.mxu0 %v402
      %425 = vmatprep.subr.bf16.mxu0 0
      %426 = vmatpush1.bf16.msra.mxu0 %v403
      %427 = vmatprep.subr.bf16.mxu0 0
      %428 = vmatpush1.bf16.msra.mxu0 %v404
      %429 = vmatprep.subr.bf16.mxu0 0
      %430 = vmatpush1.bf16.msra.mxu0 0
      %431 = vmatprep.subr.bf16.mxu0 0
      %432 = vmatpush1.bf16.msra.mxu0 0
      %433 = vmatprep.subr.bf16.mxu0 0
      %434 = vmatpush1.bf16.msra.mxu0 0
      %435 = vmatprep.subr.bf16.mxu0 0
      %436 = vmatpush1.bf16.msra.mxu0 0
      %437 = vmatprep.subr.bf16.mxu0 0
      %438 = vmatpush1.bf16.msra.mxu0 0
      %439 = vmatprep.subr.bf16.mxu0 0
      %440 = vmatpush1.bf16.msra.mxu0 0
      %441 = vmatprep.subr.bf16.mxu0 0
      %442 = vmatpush1.bf16.msra.mxu0 0
      %443 = vmatprep.subr.bf16.mxu0 0
      %444 = vmatpush1.bf16.msra.mxu0 0
      %445 = vmatprep.mubr.bf16.mxu0 0
      %446 = vmatmul.mubr.bf16.gmra.mrb[0].mxu0 %v333
      %v447 = vpop.f32.mrb[0].mxu0
      %v448 = vadd.f32 0.0, %v447
      %v449 = vpop.f32.mrb[0].mxu0
      %v450 = vpop.f32.mrb[0].mxu0
      %v451 = vadd.f32 0.0, %v450
      %v452 = vpop.f32.mrb[0].mxu0
      %453 = vmatprep.mubr.bf16.mxu0 0
      %454 = vmatmul.mubr.bf16.gmra.mrb[0].mxu0 %v334
      %v455 = vpop.f32.mrb[0].mxu0
      %v456 = vadd.f32 0.0, %v455
      %v457 = vpop.f32.mrb[0].mxu0
      %v458 = vpop.f32.mrb[0].mxu0
      %v459 = vadd.f32 0.0, %v458
      %v460 = vpop.f32.mrb[0].mxu0
      %461 = vmatprep.mubr.bf16.mxu0 0
      %462 = vmatmul.mubr.bf16.gmra.mrb[0].mxu0 %v335
      %v463 = vpop.f32.mrb[0].mxu0
      %v464 = vadd.f32 0.0, %v463
      %v465 = vpop.f32.mrb[0].mxu0
      %v466 = vpop.f32.mrb[0].mxu0
      %v467 = vadd.f32 0.0, %v466
      %v468 = vpop.f32.mrb[0].mxu0
      %469 = vmatprep.mubr.bf16.mxu0 0
      %470 = vmatmul.mubr.bf16.gmra.mrb[0].mxu0 %v336
      %v471 = vpop.f32.mrb[0].mxu0
      %v472 = vadd.f32 0.0, %v471
      %v473 = vpop.f32.mrb[0].mxu0
      %v474 = vpop.f32.mrb[0].mxu0
      %v475 = vadd.f32 0.0, %v474
      %v476 = vpop.f32.mrb[0].mxu0
      %477 = vmatprep.mubr.bf16.mxu0 0
      %478 = vmatmul.mubr.bf16.gmra.mrb[0].mxu0 %v337
      %v479 = vpop.f32.mrb[0].mxu0
      %v480 = vadd.f32 0.0, %v479
      %v481 = vpop.f32.mrb[0].mxu0
      %v482 = vpop.f32.mrb[0].mxu0
      %v483 = vadd.f32 0.0, %v482
      %v484 = vpop.f32.mrb[0].mxu0
      %485 = vmatprep.mubr.bf16.mxu0 0
      %486 = vmatmul.mubr.bf16.gmra.mrb[0].mxu0 %v338
      %v487 = vpop.f32.mrb[0].mxu0
      %v488 = vadd.f32 0.0, %v487
      %v489 = vpop.f32.mrb[0].mxu0
      %v490 = vpop.f32.mrb[0].mxu0
      %v491 = vadd.f32 0.0, %v490
      %v492 = vpop.f32.mrb[0].mxu0
      %493 = vmatprep.mubr.bf16.mxu0 0
      %494 = vmatmul.mubr.bf16.gmra.mrb[0].mxu0 %v339
      %v495 = vpop.f32.mrb[0].mxu0
      %v496 = vadd.f32 0.0, %v495
      %v497 = vpop.f32.mrb[0].mxu0
      %v498 = vpop.f32.mrb[0].mxu0
      %v499 = vadd.f32 0.0, %v498
      %v500 = vpop.f32.mrb[0].mxu0
      %501 = vmatprep.mubr.bf16.mxu0 0
      %502 = vmatmul.mubr.bf16.gmra.mrb[0].mxu0 %v340
      %v503 = vpop.f32.mrb[0].mxu0
      %v504 = vadd.f32 0.0, %v503
      %v505 = vpop.f32.mrb[0].mxu0
      %v506 = vpop.f32.mrb[0].mxu0
      %v507 = vadd.f32 0.0, %v506
      %v508 = vpop.f32.mrb[0].mxu0
      %509 = vmatprep.mubr.bf16.mxu0 0
      %510 = vmatmul.mubr.bf16.gmra.mrb[0].mxu0 %v341
      %v511 = vpop.f32.mrb[0].mxu0
      %v512 = vadd.f32 0.0, %v511
      %v513 = vpop.f32.mrb[0].mxu0
      %v514 = vpop.f32.mrb[0].mxu0
      %v515 = vadd.f32 0.0, %v514
      %v516 = vpop.f32.mrb[0].mxu0
      %517 = vmatprep.mubr.bf16.mxu0 0
      %518 = vmatmul.mubr.bf16.gmra.mrb[0].mxu0 %v342
      %v519 = vpop.f32.mrb[0].mxu0
      %v520 = vadd.f32 0.0, %v519
      %v521 = vpop.f32.mrb[0].mxu0
      %v522 = vpop.f32.mrb[0].mxu0
      %v523 = vadd.f32 0.0, %v522
      %v524 = vpop.f32.mrb[0].mxu0
      %525 = vmatprep.mubr.bf16.mxu0 0
      %526 = vmatmul.mubr.bf16.gmra.mrb[0].mxu0 %v343
      %v527 = vpop.f32.mrb[0].mxu0
      %v528 = vadd.f32 0.0, %v527
      %v529 = vpop.f32.mrb[0].mxu0
      %v530 = vpop.f32.mrb[0].mxu0
      %v531 = vadd.f32 0.0, %v530
      %v532 = vpop.f32.mrb[0].mxu0
      %533 = vmatprep.mubr.bf16.mxu0 0
      %534 = vmatmul.mubr.bf16.gmra.mrb[0].mxu0 %v344
      %v535 = vpop.f32.mrb[0].mxu0
      %v536 = vadd.f32 0.0, %v535
      %v537 = vpop.f32.mrb[0].mxu0
      %v538 = vpop.f32.mrb[0].mxu0
      %v539 = vadd.f32 0.0, %v538
      %v540 = vpop.f32.mrb[0].mxu0
      %541 = vmatprep.mubr.bf16.mxu0 0
      %542 = vmatmul.mubr.bf16.gmra.mrb[0].mxu0 %v345
      %v543 = vpop.f32.mrb[0].mxu0
      %v544 = vadd.f32 0.0, %v543
      %v545 = vpop.f32.mrb[0].mxu0
      %v546 = vpop.f32.mrb[0].mxu0
      %v547 = vadd.f32 0.0, %v546
      %v548 = vpop.f32.mrb[0].mxu0
      %549 = vmatprep.mubr.bf16.mxu0 0
      %550 = vmatmul.mubr.bf16.gmra.mrb[0].mxu0 %v346
      %v551 = vpop.f32.mrb[0].mxu0
      %v552 = vadd.f32 0.0, %v551
      %v553 = vpop.f32.mrb[0].mxu0
      %v554 = vpop.f32.mrb[0].mxu0
      %v555 = vadd.f32 0.0, %v554
      %v556 = vpop.f32.mrb[0].mxu0
      %557 = vmatprep.mubr.bf16.mxu0 0
      %558 = vmatmul.mubr.bf16.gmra.mrb[0].mxu0 %v347
      %v559 = vpop.f32.mrb[0].mxu0
      %v560 = vadd.f32 0.0, %v559
      %v561 = vpop.f32.mrb[0].mxu0
      %v562 = vpop.f32.mrb[0].mxu0
      %v563 = vadd.f32 0.0, %v562
      %v564 = vpop.f32.mrb[0].mxu0
      %565 = vmatprep.mubr.bf16.mxu0 0
      %566 = vmatmul.mubr.bf16.gmra.mrb[0].mxu0 %v348
      %v567 = vpop.f32.mrb[0].mxu0
      %v568 = vadd.f32 0.0, %v567
      %v569 = vpop.f32.mrb[0].mxu0
      %v570 = vpop.f32.mrb[0].mxu0
      %v571 = vadd.f32 0.0, %v570
      %v572 = vpop.f32.mrb[0].mxu0
      %573 = vdwg.mxu0
      // Predicated region
      $region41: #{discriminator_forward.6} parent=35 // pred_check
        %p574 = pneg %p214
      $region42: #{discriminator_forward.6} parent=35 // pred_check_branch
        %576 = sbr.rel (%p574) target = $region44
      $region43: #{discriminator_forward.6} parent=35 // pred_region
        %v577 = vadd.f32 %v448, %v451
        %v578 = vadd.f32 %v577, %v456
        %v579 = vadd.f32 %v578, %v459
        %v580 = vadd.f32 %v579, %v464
        %v581 = vadd.f32 %v580, %v467
        %v582 = vadd.f32 %v581, %v472
        %v583 = vadd.f32 %v582, %v475
        %v584 = vadd.f32 %v583, %v480
        %v585 = vadd.f32 %v584, %v483
        %v586 = vadd.f32 %v585, %v488
        %v587 = vadd.f32 %v586, %v491
        %v588 = vadd.f32 %v587, %v496
        %v589 = vadd.f32 %v588, %v499
        %v590 = vadd.f32 %v589, %v504
        %v591 = vadd.f32 %v590, %v507
        %v592 = vadd.f32 %v591, %v512
        %v593 = vadd.f32 %v592, %v515
        %v594 = vadd.f32 %v593, %v520
        %v595 = vadd.f32 %v594, %v523
        %v596 = vadd.f32 %v595, %v528
        %v597 = vadd.f32 %v596, %v531
        %v598 = vadd.f32 %v597, %v536
        %v599 = vadd.f32 %v598, %v539
        %v600 = vadd.f32 %v599, %v544
        %v601 = vadd.f32 %v600, %v547
        %v602 = vadd.f32 %v601, %v552
        %v603 = vadd.f32 %v602, %v555
        %v604 = vadd.f32 %v603, %v560
        %v605 = vadd.f32 %v604, %v563
        %v606 = vadd.f32 %v605, %v568
        %v607 = vadd.f32 %v606, %v571
        %v608 = vrot.slane %v607, 4
        %v609 = vadd.f32 %v607, %v608
        %v610 = vrot.slane %v609, 2
        %v611 = vadd.f32 %v609, %v610
        %v612 = vrot.slane %v611, 1
        %v613 = vadd.f32 %v611, %v612
        %v614 = vmul.f32 %v448, %v448
        %v615 = vmul.f32 %v451, %v451
        %v616 = vmul.f32 %v456, %v456
        %v617 = vmul.f32 %v459, %v459
        %v618 = vmul.f32 %v464, %v464
        %v619 = vmul.f32 %v467, %v467
        %v620 = vmul.f32 %v472, %v472
        %v621 = vmul.f32 %v475, %v475
        %v622 = vmul.f32 %v480, %v480
        %v623 = vmul.f32 %v483, %v483
        %v624 = vmul.f32 %v488, %v488
        %v625 = vmul.f32 %v491, %v491
        %v626 = vmul.f32 %v496, %v496
        %v627 = vmul.f32 %v499, %v499
        %v628 = vmul.f32 %v504, %v504
        %v629 = vmul.f32 %v507, %v507
        %v630 = vmul.f32 %v512, %v512
        %v631 = vmul.f32 %v515, %v515
        %v632 = vmul.f32 %v520, %v520
        %v633 = vmul.f32 %v523, %v523
        %v634 = vmul.f32 %v528, %v528
        %v635 = vmul.f32 %v531, %v531
        %v636 = vmul.f32 %v536, %v536
        %v637 = vmul.f32 %v539, %v539
        %v638 = vmul.f32 %v544, %v544
        %v639 = vmul.f32 %v547, %v547
        %v640 = vmul.f32 %v552, %v552
        %v641 = vmul.f32 %v555, %v555
        %v642 = vmul.f32 %v560, %v560
        %v643 = vmul.f32 %v563, %v563
        %v644 = vmul.f32 %v568, %v568
        %v645 = vmul.f32 %v571, %v571
        %v646 = vadd.f32 %v614, %v615
        %v647 = vadd.f32 %v646, %v616
        %v648 = vadd.f32 %v647, %v617
        %v649 = vadd.f32 %v648, %v618
        %v650 = vadd.f32 %v649, %v619
        %v651 = vadd.f32 %v650, %v620
        %v652 = vadd.f32 %v651, %v621
        %v653 = vadd.f32 %v652, %v622
        %v654 = vadd.f32 %v653, %v623
        %v655 = vadd.f32 %v654, %v624
        %v656 = vadd.f32 %v655, %v625
        %v657 = vadd.f32 %v656, %v626
        %v658 = vadd.f32 %v657, %v627
        %v659 = vadd.f32 %v658, %v628
        %v660 = vadd.f32 %v659, %v629
        %v661 = vadd.f32 %v660, %v630
        %v662 = vadd.f32 %v661, %v631
        %v663 = vadd.f32 %v662, %v632
        %v664 = vadd.f32 %v663, %v633
        %v665 = vadd.f32 %v664, %v634
        %v666 = vadd.f32 %v665, %v635
        %v667 = vadd.f32 %v666, %v636
        %v668 = vadd.f32 %v667, %v637
        %v669 = vadd.f32 %v668, %v638
        %v670 = vadd.f32 %v669, %v639
        %v671 = vadd.f32 %v670, %v640
        %v672 = vadd.f32 %v671, %v641
        %v673 = vadd.f32 %v672, %v642
        %v674 = vadd.f32 %v673, %v643
        %v675 = vadd.f32 %v674, %v644
        %v676 = vadd.f32 %v675, %v645
        %v677 = vrot.slane %v676, 4
        %v678 = vadd.f32 %v676, %v677
        %v679 = vrot.slane %v678, 2
        %v680 = vadd.f32 %v678, %v679
        %v681 = vrot.slane %v680, 1
        %v682 = vadd.f32 %v680, %v681
        %v683 = vld [vmem:[#allocation2] sm:$0x3]
        %vm684 = vcmask 1040384
        %v685 = vsel %vm684, %v613, %v682
        %v686 = vadd.f32 %v683, %v685
        %687 = vst [vmem:[#allocation2] sm:$0x3] %v686
      $region44: #{discriminator_forward.6} parent=35 // pred_fallthru
        _
      %p688 = scmp.eq.s32.totalorder %s19, 1
      // Predicated region
      $region45: #{discriminator_forward.6} parent=35 // pred_check
        %p689 = pneg %p688
      $region46: #{discriminator_forward.6} parent=35 // pred_check_branch
        %691 = sbr.rel (%p689) target = $region48
      $region47: #{discriminator_forward.6} parent=35 // pred_region
        %v692 = vld [vmem:[#allocation2] sm:$0x3]
        %v693 = vmul.f32 %v692, 0.0026455026
        %v694 = vmul.f32 %v693, %v693
        %v696 = vrot.slane %v694, 7
        %v698 = vsub.f32 %v693, %v696
        %v699 = vmax.f32 %v698, 0.0
        %v700 = vadd.f32 %v699, 1e-05
        %v701 = vrsqrt.pop %v700
        %v702 = vld [vmem:[%s2] sm:$0x1]
        %v705 = vunpack.c.l.s4 1966171168
        %v706 = vunpack.c.0.s8 %v705
        %v707 = vlaneseq
        %v708 = vshrl.u32 %v707, 7
        %v709 = vsub.s32 %v706, %v708
        %v710 = vrot.slane %v701, %v709
        %v711 = vcombine.high %v710, %v710
        %v713 = vunpack.c.l.s4 1966171168
        %v714 = vunpack.c.0.s8 %v713
        %v715 = vlaneseq
        %v716 = vshrl.u32 %v715, 7
        %v717 = vsub.s32 %v714, %v716
        %v718 = vrot.slane %v711, %v717
        %v720 = vmul.f32 %v702, %v718
        %v721 = vld [vmem:[%s3] sm:$0x1]
        %v722 = vmul.f32 %v693, %v720
        %v723 = vsub.f32 %v721, %v722
        %v725 = vlaneseq
        %v726 = vshrl.u32 %v725, 7
        %v727 = vsub.s32 0, %v726
        %v728 = vrot.slane %v720, %v727
        %v730 = vmul.f32 %v448, %v728
        %v731 = vmul.f32 %v451, %v728
        %v732 = vmul.f32 %v456, %v728
        %v733 = vmul.f32 %v459, %v728
        %v734 = vmul.f32 %v464, %v728
        %v735 = vmul.f32 %v467, %v728
        %v736 = vmul.f32 %v472, %v728
        %v737 = vmul.f32 %v475, %v728
        %v738 = vmul.f32 %v480, %v728
        %v739 = vmul.f32 %v483, %v728
        %v740 = vmul.f32 %v488, %v728
        %v741 = vmul.f32 %v491, %v728
        %v742 = vmul.f32 %v496, %v728
        %v743 = vmul.f32 %v499, %v728
        %v744 = vmul.f32 %v504, %v728
        %v745 = vmul.f32 %v507, %v728
        %v746 = vmul.f32 %v512, %v728
        %v747 = vmul.f32 %v515, %v728
        %v748 = vmul.f32 %v520, %v728
        %v749 = vmul.f32 %v523, %v728
        %v750 = vmul.f32 %v528, %v728
        %v751 = vmul.f32 %v531, %v728
        %v752 = vmul.f32 %v536, %v728
        %v753 = vmul.f32 %v539, %v728
        %v754 = vmul.f32 %v544, %v728
        %v755 = vmul.f32 %v547, %v728
        %v756 = vmul.f32 %v552, %v728
        %v757 = vmul.f32 %v555, %v728
        %v758 = vmul.f32 %v560, %v728
        %v759 = vmul.f32 %v563, %v728
        %v760 = vmul.f32 %v568, %v728
        %v761 = vmul.f32 %v571, %v728
        %v763 = vlaneseq
        %v764 = vshrl.u32 %v763, 7
        %v765 = vsub.s32 0, %v764
        %v766 = vrot.slane %v723, %v765
        %v768 = vadd.f32 %v730, %v766
        %v769 = vadd.f32 %v731, %v766
        %v770 = vadd.f32 %v732, %v766
        %v771 = vadd.f32 %v733, %v766
        %v772 = vadd.f32 %v734, %v766
        %v773 = vadd.f32 %v735, %v766
        %v774 = vadd.f32 %v736, %v766
        %v775 = vadd.f32 %v737, %v766
        %v776 = vadd.f32 %v738, %v766
        %v777 = vadd.f32 %v739, %v766
        %v778 = vadd.f32 %v740, %v766
        %v779 = vadd.f32 %v741, %v766
        %v780 = vadd.f32 %v742, %v766
        %v781 = vadd.f32 %v743, %v766
        %v782 = vadd.f32 %v744, %v766
        %v783 = vadd.f32 %v745, %v766
        %v784 = vadd.f32 %v746, %v766
        %v785 = vadd.f32 %v747, %v766
        %v786 = vadd.f32 %v748, %v766
        %v787 = vadd.f32 %v749, %v766
        %v788 = vadd.f32 %v750, %v766
        %v789 = vadd.f32 %v751, %v766
        %v790 = vadd.f32 %v752, %v766
        %v791 = vadd.f32 %v753, %v766
        %v792 = vadd.f32 %v754, %v766
        %v793 = vadd.f32 %v755, %v766
        %v794 = vadd.f32 %v756, %v766
        %v795 = vadd.f32 %v757, %v766
        %v796 = vadd.f32 %v758, %v766
        %v797 = vadd.f32 %v759, %v766
        %v798 = vadd.f32 %v760, %v766
        %v799 = vadd.f32 %v761, %v766
        %vm800 = vcmp.ge.f32.partialorder %v768, 0.0
        %vm801 = vcmp.ge.f32.partialorder %v769, 0.0
        %vm802 = vcmp.ge.f32.partialorder %v770, 0.0
        %vm803 = vcmp.ge.f32.partialorder %v771, 0.0
        %vm804 = vcmp.ge.f32.partialorder %v772, 0.0
        %vm805 = vcmp.ge.f32.partialorder %v773, 0.0
        %vm806 = vcmp.ge.f32.partialorder %v774, 0.0
        %vm807 = vcmp.ge.f32.partialorder %v775, 0.0
        %vm808 = vcmp.ge.f32.partialorder %v776, 0.0
        %vm809 = vcmp.ge.f32.partialorder %v777, 0.0
        %vm810 = vcmp.ge.f32.partialorder %v778, 0.0
        %vm811 = vcmp.ge.f32.partialorder %v779, 0.0
        %vm812 = vcmp.ge.f32.partialorder %v780, 0.0
        %vm813 = vcmp.ge.f32.partialorder %v781, 0.0
        %vm814 = vcmp.ge.f32.partialorder %v782, 0.0
        %vm815 = vcmp.ge.f32.partialorder %v783, 0.0
        %vm816 = vcmp.ge.f32.partialorder %v784, 0.0
        %vm817 = vcmp.ge.f32.partialorder %v785, 0.0
        %vm818 = vcmp.ge.f32.partialorder %v786, 0.0
        %vm819 = vcmp.ge.f32.partialorder %v787, 0.0
        %vm820 = vcmp.ge.f32.partialorder %v788, 0.0
        %vm821 = vcmp.ge.f32.partialorder %v789, 0.0
        %vm822 = vcmp.ge.f32.partialorder %v790, 0.0
        %vm823 = vcmp.ge.f32.partialorder %v791, 0.0
        %vm824 = vcmp.ge.f32.partialorder %v792, 0.0
        %vm825 = vcmp.ge.f32.partialorder %v793, 0.0
        %vm826 = vcmp.ge.f32.partialorder %v794, 0.0
        %vm827 = vcmp.ge.f32.partialorder %v795, 0.0
        %vm828 = vcmp.ge.f32.partialorder %v796, 0.0
        %vm829 = vcmp.ge.f32.partialorder %v797, 0.0
        %vm830 = vcmp.ge.f32.partialorder %v798, 0.0
        %vm831 = vcmp.ge.f32.partialorder %v799, 0.0
        %v832 = vmul.f32 %v768, 0.2
        %v833 = vmul.f32 %v769, 0.2
        %v834 = vmul.f32 %v770, 0.2
        %v835 = vmul.f32 %v771, 0.2
        %v836 = vmul.f32 %v772, 0.2
        %v837 = vmul.f32 %v773, 0.2
        %v838 = vmul.f32 %v774, 0.2
        %v839 = vmul.f32 %v775, 0.2
        %v840 = vmul.f32 %v776, 0.2
        %v841 = vmul.f32 %v777, 0.2
        %v842 = vmul.f32 %v778, 0.2
        %v843 = vmul.f32 %v779, 0.2
        %v844 = vmul.f32 %v780, 0.2
        %v845 = vmul.f32 %v781, 0.2
        %v846 = vmul.f32 %v782, 0.2
        %v847 = vmul.f32 %v783, 0.2
        %v848 = vmul.f32 %v784, 0.2
        %v849 = vmul.f32 %v785, 0.2
        %v850 = vmul.f32 %v786, 0.2
        %v851 = vmul.f32 %v787, 0.2
        %v852 = vmul.f32 %v788, 0.2
        %v853 = vmul.f32 %v789, 0.2
        %v854 = vmul.f32 %v790, 0.2
        %v855 = vmul.f32 %v791, 0.2
        %v856 = vmul.f32 %v792, 0.2
        %v857 = vmul.f32 %v793, 0.2
        %v858 = vmul.f32 %v794, 0.2
        %v859 = vmul.f32 %v795, 0.2
        %v860 = vmul.f32 %v796, 0.2
        %v861 = vmul.f32 %v797, 0.2
        %v862 = vmul.f32 %v798, 0.2
        %v863 = vmul.f32 %v799, 0.2
        %v864 = vsel %vm800, %v768, %v832
        %v865 = vsel %vm801, %v769, %v833
        %v866 = vsel %vm802, %v770, %v834
        %v867 = vsel %vm803, %v771, %v835
        %v868 = vsel %vm804, %v772, %v836
        %v869 = vsel %vm805, %v773, %v837
        %v870 = vsel %vm806, %v774, %v838
        %v871 = vsel %vm807, %v775, %v839
        %v872 = vsel %vm808, %v776, %v840
        %v873 = vsel %vm809, %v777, %v841
        %v874 = vsel %vm810, %v778, %v842
        %v875 = vsel %vm811, %v779, %v843
        %v876 = vsel %vm812, %v780, %v844
        %v877 = vsel %vm813, %v781, %v845
        %v878 = vsel %vm814, %v782, %v846
        %v879 = vsel %vm815, %v783, %v847
        %v880 = vsel %vm816, %v784, %v848
        %v881 = vsel %vm817, %v785, %v849
        %v882 = vsel %vm818, %v786, %v850
        %v883 = vsel %vm819, %v787, %v851
        %v884 = vsel %vm820, %v788, %v852
        %v885 = vsel %vm821, %v789, %v853
        %v886 = vsel %vm822, %v790, %v854
        %v887 = vsel %vm823, %v791, %v855
        %v888 = vsel %vm824, %v792, %v856
        %v889 = vsel %vm825, %v793, %v857
        %v890 = vsel %vm826, %v794, %v858
        %v891 = vsel %vm827, %v795, %v859
        %v892 = vsel %vm828, %v796, %v860
        %v893 = vsel %vm829, %v797, %v861
        %v894 = vsel %vm830, %v798, %v862
        %v895 = vsel %vm831, %v799, %v863
        %v896 = vpack.c.bf16 %v865, %v864
        %v897 = vpack.c.bf16 %v867, %v866
        %v898 = vpack.c.bf16 %v869, %v868
        %v899 = vpack.c.bf16 %v871, %v870
        %v900 = vpack.c.bf16 %v873, %v872
        %v901 = vpack.c.bf16 %v875, %v874
        %v902 = vpack.c.bf16 %v877, %v876
        %v903 = vpack.c.bf16 %v879, %v878
        %v904 = vpack.c.bf16 %v881, %v880
        %v905 = vpack.c.bf16 %v883, %v882
        %v906 = vpack.c.bf16 %v885, %v884
        %v907 = vpack.c.bf16 %v887, %v886
        %v908 = vpack.c.bf16 %v889, %v888
        %v909 = vpack.c.bf16 %v891, %v890
        %v910 = vpack.c.bf16 %v893, %v892
        %v911 = vpack.c.bf16 %v895, %v894
        %v928 = vunpack.c.l.b16 %v896
        %v929 = vunpack.c.h.b16 %v896
        %v930 = vunpack.c.l.b16 %v897
        %v931 = vunpack.c.h.b16 %v897
        %v932 = vunpack.c.l.b16 %v898
        %v933 = vunpack.c.h.b16 %v898
        %v934 = vunpack.c.l.b16 %v899
        %v935 = vunpack.c.h.b16 %v899
        %v936 = vunpack.c.l.b16 %v900
        %v937 = vunpack.c.h.b16 %v900
        %v938 = vunpack.c.l.b16 %v901
        %v939 = vunpack.c.h.b16 %v901
        %v940 = vunpack.c.l.b16 %v902
        %v941 = vunpack.c.h.b16 %v902
        %v942 = vunpack.c.l.b16 %v903
        %v943 = vunpack.c.h.b16 %v903
        %v944 = vunpack.c.l.b16 %v904
        %v945 = vunpack.c.h.b16 %v904
        %v946 = vunpack.c.l.b16 %v905
        %v947 = vunpack.c.h.b16 %v905
        %v948 = vunpack.c.l.b16 %v906
        %v949 = vunpack.c.h.b16 %v906
        %v950 = vunpack.c.l.b16 %v907
        %v951 = vunpack.c.h.b16 %v907
        %v952 = vunpack.c.l.b16 %v908
        %v953 = vunpack.c.h.b16 %v908
        %v954 = vunpack.c.l.b16 %v909
        %v955 = vunpack.c.h.b16 %v909
        %v956 = vunpack.c.l.b16 %v910
        %v957 = vunpack.c.h.b16 %v910
        %v958 = vunpack.c.l.b16 %v911
        %v959 = vunpack.c.h.b16 %v911
        %v960 = vpack.c.b16 %v928, %v928
        %v961 = vpack.c.b16 %v929, %v929
        %v962 = vpack.c.b16 %v930, %v930
        %v963 = vpack.c.b16 %v931, %v931
        %v964 = vpack.c.b16 %v932, %v932
        %v965 = vpack.c.b16 %v933, %v933
        %v966 = vpack.c.b16 %v934, %v934
        %v967 = vpack.c.b16 %v935, %v935
        %v968 = vpack.c.b16 %v936, %v936
        %v969 = vpack.c.b16 %v937, %v937
        %v970 = vpack.c.b16 %v938, %v938
        %v971 = vpack.c.b16 %v939, %v939
        %v972 = vpack.c.b16 %v940, %v940
        %v973 = vpack.c.b16 %v941, %v941
        %v974 = vpack.c.b16 %v942, %v942
        %v975 = vpack.c.b16 %v943, %v943
        %v976 = vpack.c.b16 %v944, %v944
        %v977 = vpack.c.b16 %v945, %v945
        %v978 = vpack.c.b16 %v946, %v946
        %v979 = vpack.c.b16 %v947, %v947
        %v980 = vpack.c.b16 %v948, %v948
        %v981 = vpack.c.b16 %v949, %v949
        %v982 = vpack.c.b16 %v950, %v950
        %v983 = vpack.c.b16 %v951, %v951
        %v984 = vpack.c.b16 %v952, %v952
        %v985 = vpack.c.b16 %v953, %v953
        %v986 = vpack.c.b16 %v954, %v954
        %v987 = vpack.c.b16 %v955, %v955
        %v988 = vpack.c.b16 %v956, %v956
        %v989 = vpack.c.b16 %v957, %v957
        %v990 = vpack.c.b16 %v958, %v958
        %v991 = vpack.c.b16 %v959, %v959
        %1024 = vst [vmem:[%s211] sm:$0xf] %v960
        %1025 = vst [vmem:[%s211 + $0x4] sm:$0xf] %v961
        %1026 = vst [vmem:[%s211 + $0x8] sm:$0xf] %v962
        %1027 = vst [vmem:[%s211 + $0xc] sm:$0xf] %v963
        %1028 = vst [vmem:[%s211 + $0x10] sm:$0xf] %v964
        %1029 = vst [vmem:[%s211 + $0x14] sm:$0xf] %v965
        %1030 = vst [vmem:[%s211 + $0x18] sm:$0xf] %v966
        %1031 = vst [vmem:[%s211 + $0x1c] sm:$0xf] %v967
        %1032 = vst [vmem:[%s211 + $0x20] sm:$0xf] %v968
        %1033 = vst [vmem:[%s211 + $0x24] sm:$0xf] %v969
        %1034 = vst [vmem:[%s211 + $0x28] sm:$0xf] %v970
        %1035 = vst [vmem:[%s211 + $0x2c] sm:$0xf] %v971
        %1036 = vst [vmem:[%s211 + $0x30] sm:$0xf] %v972
        %1037 = vst [vmem:[%s211 + $0x34] sm:$0xf] %v973
        %1038 = vst [vmem:[%s211 + $0x38] sm:$0xf] %v974
        %1039 = vst [vmem:[%s211 + $0x3c] sm:$0xf] %v975
        %1040 = vst [vmem:[%s211 + $0x40] sm:$0xf] %v976
        %1041 = vst [vmem:[%s211 + $0x44] sm:$0xf] %v977
        %1042 = vst [vmem:[%s211 + $0x48] sm:$0xf] %v978
        %1043 = vst [vmem:[%s211 + $0x4c] sm:$0xf] %v979
        %1044 = vst [vmem:[%s211 + $0x50] sm:$0xf] %v980
        %1045 = vst [vmem:[%s211 + $0x54] sm:$0xf] %v981
        %1046 = vst [vmem:[%s211 + $0x58] sm:$0xf] %v982
        %1047 = vst [vmem:[%s211 + $0x5c] sm:$0xf] %v983
        %1048 = vst [vmem:[%s211 + $0x60] sm:$0xf] %v984
        %1049 = vst [vmem:[%s211 + $0x64] sm:$0xf] %v985
        %1050 = vst [vmem:[%s211 + $0x68] sm:$0xf] %v986
        %1051 = vst [vmem:[%s211 + $0x6c] sm:$0xf] %v987
        %1052 = vst [vmem:[%s211 + $0x70] sm:$0xf] %v988
        %1053 = vst [vmem:[%s211 + $0x74] sm:$0xf] %v989
        %1054 = vst [vmem:[%s211 + $0x78] sm:$0xf] %v990
        %1055 = vst [vmem:[%s211 + $0x7c] sm:$0xf] %v991
      $region48: #{discriminator_forward.6} parent=35 // pred_fallthru
        _
      %s1056 = smul.u32 32, %s20
      %p1057 = scmp.lt.s32.totalorder %s1056, 63
      %s1058 = scalar_select %p1057, %s1056, 63
      %s1059 = smul.addr %s1058, 4
      %s1060 = scalar_lea.vmem %s4, %s1059
      // Predicated region
      $region49: #{discriminator_forward.6} parent=35 // pred_check
        %p1061 = pneg %p134
      $region50: #{discriminator_forward.6} parent=35 // pred_check_branch
        %1063 = sbr.rel (%p1061) target = $region52
      $region51: #{discriminator_forward.6} parent=35 // pred_region
        %s1064 = smul.u32 32, %s20
      $region52: #{discriminator_forward.6} parent=35 // pred_fallthru
        _
    $region36: #{discriminator_forward.6} parent=5 // pred_fallthru
      _
    %p1065 = scmp.le.s32.totalorder 2, %s10
    // Predicated region
    $region53: #{discriminator_forward.6} parent=5 // pred_check
      %p1066 = pneg %p1065
    $region54: #{discriminator_forward.6} parent=5 // pred_check_branch
      %1068 = sbr.rel (%p1066) target = $region56
    $region55: #{discriminator_forward.6} parent=5 // pred_region
      %s1069 = ssub.s32 %s10, 2
      // Predicated region
      $region57: #{discriminator_forward.6} parent=55 // pred_check
        %p1070 = pneg %p140
      $region58: #{discriminator_forward.6} parent=55 // pred_check_branch
        %1072 = sbr.rel (%p1070) target = $region60
      $region59: #{discriminator_forward.6} parent=55 // pred_region
        %s1073 = smul.u32 32, %s22
        %p1074 = scmp.lt.s32.totalorder %s1073, 63
        %s1075 = scalar_select %p1074, %s1073, 63
        %s1076 = smul.addr %s1075, 4
        %s1077 = scalar_lea.vmem %s4, %s1076
      $region60: #{discriminator_forward.6} parent=55 // pred_fallthru
        _
    $region56: #{discriminator_forward.6} parent=5 // pred_fallthru
      _
  $region6: #{discriminator_forward.6} parent=0 // loop_footer
    %s14 = sadd.s32 1, %s10
  $region7: #{discriminator_forward.6} parent=0 // loop_footer_branch
    %9 = sbr.rel target = $region3
  $region8: #{discriminator_forward.6} parent=0 // loop_exit
    _

// kernel: discriminator_forward.7
$region0: #{discriminator_forward.7}
  #allocation0 [shape = 'u32[]', space=smem, size = 0x4, offset = 0x4, fixed_abs, tag = 'smem constant byte address 0x4 - core index']
  #allocation1 [shape = 'u32[144,128]{1,0:T(1,128)}', space=vmem, size = 0x12000, scoped, tag = 'internal scratch']
  #allocation2 [shape = 'f32[2,128]{1,0:T(2,128)}', space=vmem, size = 0x400, scoped, tag = 'scratch operand']
  %s0 = inlined_call_operand.vmem [shape: bf16[56,384], index: 0, kind: input, shape index: {}]
  %s1 = inlined_call_operand.vmem [shape: bf16[384,128], index: 1, kind: input, shape index: {}]
  %s2 = inlined_call_operand.vmem [shape: f32[1,128], index: 2, kind: input, shape index: {}]
  %s3 = inlined_call_operand.vmem [shape: f32[1,128], index: 3, kind: input, shape index: {}]
  %s4 = inlined_call_operand.vmem [shape: bf16[56,128], index: 4, kind: output, shape index: {}]
  %s5 = sld [smem:[#allocation0]]
  $region61: #{discriminator_forward.7} parent=0
    _
  %s7 = ssub.s32 1, %s5
  %s8 = scalar_select 0, %s7, %s5
  loop: start=0, step=1, limit=4
  $region2: #{discriminator_forward.7} parent=0 // loop_pre_header
    _
  $region3: #{discriminator_forward.7} parent=0 // loop_header
    %s10 = sphi 0, %s14
    %p11 = scmp.ge.s32.totalorder %s10, 4
    %s17 = sphi 0, %s29
    %s18 = sphi 0, %s25
    %s19 = sphi 0, %s17
    %s20 = sphi 0, %s18
    %s21 = sphi 0, %s19
    %s22 = sphi 0, %s20
    %s32 = sphi 0, %s34
    %s35 = sphi 0, %s32
    %s36 = sphi 0, %s35
    %s52 = sphi 0, %s36
    %s56 = sphi 0, %s56
    %s58 = sphi 0, %s56
    %s59 = sphi 0, %s58
    %s73 = sphi 0, %s59
    %s77 = sphi 0, %s77
    %s79 = sphi 0, %s77
    %s80 = sphi 0, %s79
    %s94 = sphi 0, %s80
    %s98 = sphi 0, %s98
    %s100 = sphi 0, %s98
    %s101 = sphi 0, %s100
    %s115 = sphi 0, %s101
    %s121 = sphi 0, %s123
    %s124 = sphi 0, %s121
    %s125 = sphi 0, %s124
    %s141 = sphi 0, %s125
  $region4: #{discriminator_forward.7} parent=0 // loop_header_branch
    %13 = sbr.rel (%p11) target = $region8
  $region5: #{discriminator_forward.7} parent=0 // loop_body
    %s15 = ssub.s32 %s10, 1
    %s16 = ssub.s32 %s10, 2
    %s23 = sadd.s32 1, %s18
    %p24 = scmp.ge.s32.totalorder %s23, 1
    %s25 = scalar_select %p24, 0, %s23
    %s26 = sadd.s32 1, %s17
    %s27 = scalar_select %p24, %s26, %s17
    %p28 = scmp.ge.s32.totalorder %s27, 2
    %s29 = scalar_select %p28, 0, %s27
    %s30 = ssub.s32 %s18, %s25
    %p31 = scmp.eq.s32.totalorder %s30, 0
    %s33 = sadd.s32 %s32, 1
    %s34 = scalar_select %p31, %s32, %s33
    %p37 = pneg %p31
    %p38 = scmp.eq.s32.totalorder %s10, 1
    %p39 = por %p37, %p38
    %p40 = scmp.ne.s32.totalorder %s32, %s35
    %p41 = scmp.eq.s32.totalorder %s10, 0
    %p42 = por %p40, %p41
    %p43 = scmp.ne.s32.totalorder %s32, %s35
    %p44 = scmp.eq.s32.totalorder %s15, 1
    %p45 = por %p43, %p44
    %p46 = scmp.ne.s32.totalorder %s35, %s36
    %p47 = scmp.eq.s32.totalorder %s15, 0
    %p48 = por %p46, %p47
    %p49 = scmp.ne.s32.totalorder %s35, %s36
    %p50 = scmp.eq.s32.totalorder %s16, 1
    %p51 = por %p49, %p50
    %p53 = scmp.ne.s32.totalorder %s36, %s52
    %p54 = scmp.eq.s32.totalorder %s16, 0
    %p55 = por %p53, %p54
    %s57 = sadd.s32 %s56, 1
    %p60 = scmp.eq.s32.totalorder %s10, 1
    %p61 = scmp.ne.s32.totalorder %s56, %s58
    %p62 = scmp.eq.s32.totalorder %s10, 0
    %p63 = por %p61, %p62
    %p64 = scmp.ne.s32.totalorder %s56, %s58
    %p65 = scmp.eq.s32.totalorder %s15, 1
    %p66 = por %p64, %p65
    %p67 = scmp.ne.s32.totalorder %s58, %s59
    %p68 = scmp.eq.s32.totalorder %s15, 0
    %p69 = por %p67, %p68
    %p70 = scmp.ne.s32.totalorder %s58, %s59
    %p71 = scmp.eq.s32.totalorder %s16, 1
    %p72 = por %p70, %p71
    %p74 = scmp.ne.s32.totalorder %s59, %s73
    %p75 = scmp.eq.s32.totalorder %s16, 0
    %p76 = por %p74, %p75
    %s78 = sadd.s32 %s77, 1
    %p81 = scmp.eq.s32.totalorder %s10, 1
    %p82 = scmp.ne.s32.totalorder %s77, %s79
    %p83 = scmp.eq.s32.totalorder %s10, 0
    %p84 = por %p82, %p83
    %p85 = scmp.ne.s32.totalorder %s77, %s79
    %p86 = scmp.eq.s32.totalorder %s15, 1
    %p87 = por %p85, %p86
    %p88 = scmp.ne.s32.totalorder %s79, %s80
    %p89 = scmp.eq.s32.totalorder %s15, 0
    %p90 = por %p88, %p89
    %p91 = scmp.ne.s32.totalorder %s79, %s80
    %p92 = scmp.eq.s32.totalorder %s16, 1
    %p93 = por %p91, %p92
    %p95 = scmp.ne.s32.totalorder %s80, %s94
    %p96 = scmp.eq.s32.totalorder %s16, 0
    %p97 = por %p95, %p96
    %s99 = sadd.s32 %s98, 1
    %p102 = scmp.eq.s32.totalorder %s10, 1
    %p103 = scmp.ne.s32.totalorder %s98, %s100
    %p104 = scmp.eq.s32.totalorder %s10, 0
    %p105 = por %p103, %p104
    %p106 = scmp.ne.s32.totalorder %s98, %s100
    %p107 = scmp.eq.s32.totalorder %s15, 1
    %p108 = por %p106, %p107
    %p109 = scmp.ne.s32.totalorder %s100, %s101
    %p110 = scmp.eq.s32.totalorder %s15, 0
    %p111 = por %p109, %p110
    %p112 = scmp.ne.s32.totalorder %s100, %s101
    %p113 = scmp.eq.s32.totalorder %s16, 1
    %p114 = por %p112, %p113
    %p116 = scmp.ne.s32.totalorder %s101, %s115
    %p117 = scmp.eq.s32.totalorder %s16, 0
    %p118 = por %p116, %p117
    %s119 = ssub.s32 %s18, %s25
    %p120 = scmp.eq.s32.totalorder %s119, 0
    %s122 = sadd.s32 %s121, 1
    %s123 = scalar_select %p120, %s121, %s122
    %p126 = pneg %p120
    %p127 = scmp.eq.s32.totalorder %s10, 1
    %p128 = por %p126, %p127
    %p129 = scmp.ne.s32.totalorder %s121, %s124
    %p130 = scmp.eq.s32.totalorder %s10, 0
    %p131 = por %p129, %p130
    %p132 = scmp.ne.s32.totalorder %s121, %s124
    %p133 = scmp.eq.s32.totalorder %s15, 1
    %p134 = por %p132, %p133
    %p135 = scmp.ne.s32.totalorder %s124, %s125
    %p136 = scmp.eq.s32.totalorder %s15, 0
    %p137 = por %p135, %p136
    %p138 = scmp.ne.s32.totalorder %s124, %s125
    %p139 = scmp.eq.s32.totalorder %s16, 1
    %p140 = por %p138, %p139
    %p142 = scmp.ne.s32.totalorder %s125, %s141
    %p143 = scmp.eq.s32.totalorder %s16, 0
    %p144 = por %p142, %p143
    %p145 = scmp.le.s32.totalorder 1, %s10
    %p146 = scmp.lt.s32.totalorder %s10, 3
    %p147 = pnand %p145, %p146
    %p148 = pneg %p147
    // Predicated region
    $region9: #{discriminator_forward.7} parent=5 // pred_check
      _
    $region10: #{discriminator_forward.7} parent=5 // pred_check_branch
      %150 = sbr.rel (%p147) target = $region12
    $region11: #{discriminator_forward.7} parent=5 // pred_region
      %s151 = ssub.s32 %s10, 1
      // Predicated region
      $region13: #{discriminator_forward.7} parent=11 // pred_check
        %p152 = pneg %p48
      $region14: #{discriminator_forward.7} parent=11 // pred_check_branch
        %154 = sbr.rel (%p152) target = $region16
      $region15: #{discriminator_forward.7} parent=11 // pred_region
        %s155 = smul.u32 7, %s20
        %p156 = scmp.lt.s32.totalorder %s155, 6
        %s157 = scalar_select %p156, %s155, 6
        %s158 = smul.addr %s157, 3
        %s159 = smul.addr %s158, 4
        %s160 = scalar_lea.vmem %s0, %s159
        %s161 = smul.u32 7, %s20
      $region16: #{discriminator_forward.7} parent=11 // pred_fallthru
        _
      // Predicated region
      $region17: #{discriminator_forward.7} parent=11 // pred_check
        %p162 = pneg %p69
      $region18: #{discriminator_forward.7} parent=11 // pred_check_branch
        %164 = sbr.rel (%p162) target = $region20
      $region19: #{discriminator_forward.7} parent=11 // pred_region
        _
      $region20: #{discriminator_forward.7} parent=11 // pred_fallthru
        _
      // Predicated region
      $region21: #{discriminator_forward.7} parent=11 // pred_check
        %p165 = pneg %p90
      $region22: #{discriminator_forward.7} parent=11 // pred_check_branch
        %167 = sbr.rel (%p165) target = $region24
      $region23: #{discriminator_forward.7} parent=11 // pred_region
        _
      $region24: #{discriminator_forward.7} parent=11 // pred_fallthru
        _
      // Predicated region
      $region25: #{discriminator_forward.7} parent=11 // pred_check
        %p168 = pneg %p111
      $region26: #{discriminator_forward.7} parent=11 // pred_check_branch
        %170 = sbr.rel (%p168) target = $region28
      $region27: #{discriminator_forward.7} parent=11 // pred_region
        _
      $region28: #{discriminator_forward.7} parent=11 // pred_fallthru
        _
    $region12: #{discriminator_forward.7} parent=5 // pred_fallthru
      _
    %p171 = scmp.lt.s32.totalorder %s10, 2
    // Predicated region
    $region29: #{discriminator_forward.7} parent=5 // pred_check
      %p172 = pneg %p171
    $region30: #{discriminator_forward.7} parent=5 // pred_check_branch
      %174 = sbr.rel (%p172) target = $region32
    $region31: #{discriminator_forward.7} parent=5 // pred_region
      _
    $region32: #{discriminator_forward.7} parent=5 // pred_fallthru
      _
    %p175 = scmp.le.s32.totalorder 1, %s10
    %p176 = scmp.lt.s32.totalorder %s10, 3
    %p177 = pnand %p175, %p176
    %p178 = pneg %p177
    // Predicated region
    $region33: #{discriminator_forward.7} parent=5 // pred_check
      _
    $region34: #{discriminator_forward.7} parent=5 // pred_check_branch
      %180 = sbr.rel (%p177) target = $region36
    $region35: #{discriminator_forward.7} parent=5 // pred_region
      %s181 = ssub.s32 %s10, 1
      %s182 = smul.u32 7, %s20
      %p183 = scmp.lt.s32.totalorder %s182, 6
      %s184 = scalar_select %p183, %s182, 6
      %s185 = smul.addr %s184, 3
      %s186 = smul.addr %s185, 4
      %s187 = scalar_lea.vmem %s0, %s186
      %p188 = pneg %p48
      %p189 = pneg %p45
      %p190 = pneg %p69
      %p191 = pneg %p66
      %p192 = pneg %p90
      %p193 = pneg %p87
      %p194 = pneg %p111
      %p195 = pneg %p108
      %p196 = pneg %p137
      %p197 = pneg %p134
      %s198 = smul.u32 7, %s20
      %p199 = scmp.lt.s32.totalorder %s198, 6
      %s200 = scalar_select %p199, %s198, 6
      %s201 = smul.addr %s200, 4
      %s202 = scalar_lea.vmem %s4, %s201
      %s203 = smul.u32 7, %s20
      %p204 = scmp.lt.s32.totalorder %s203, 6
      %s205 = scalar_select %p204, %s203, 6
      %s206 = smul.addr %s205, 3
      %s207 = smul.addr %s206, 4
      %s208 = scalar_lea.vmem %s0, %s207
      %s209 = smul.u32 7, %s20
      %s210 = smul.u32 7, %s20
      %p211 = scmp.lt.s32.totalorder %s210, 6
      %s212 = scalar_select %p211, %s210, 6
      %s213 = smul.addr %s212, 4
      %s214 = scalar_lea.vmem %s4, %s213
      %s215 = smul.u32 7, %s20
      %p217 = scmp.eq.s32.totalorder %s19, 0
      %p218 = scmp.eq.s32.totalorder %s20, 0
      %p219 = pnand %p217, %p218
      %p220 = pneg %p219
      // Predicated region
      $region37: #{discriminator_forward.7} parent=35 // pred_check
        _
      $region38: #{discriminator_forward.7} parent=35 // pred_check_branch
        %222 = sbr.rel (%p219) target = $region40
      $region39: #{discriminator_forward.7} parent=35 // pred_region
        %223 = vst [vmem:[#allocation2] sm:$0x3] 0.0
      $region40: #{discriminator_forward.7} parent=35 // pred_fallthru
        _
      %v224 = vld [vmem:[%s208] sm:$0xff]
      %v225 = vld [vmem:[%s208 + $0x8] sm:$0xf]
      %v226 = vld [vmem:[%s208 + $0xc] sm:$0xff]
      %v227 = vld [vmem:[%s208 + $0x14] sm:$0xf]
      %v228 = vld [vmem:[%s208 + $0x18] sm:$0xff]
      %v229 = vld [vmem:[%s208 + $0x20] sm:$0xf]
      %v230 = vld [vmem:[%s208 + $0x24] sm:$0xff]
      %v231 = vld [vmem:[%s208 + $0x2c] sm:$0xf]
      %v232 = vld [vmem:[%s208 + $0x30] sm:$0xff]
      %v233 = vld [vmem:[%s208 + $0x38] sm:$0xf]
      %v234 = vld [vmem:[%s208 + $0x3c] sm:$0xff]
      %v235 = vld [vmem:[%s208 + $0x44] sm:$0xf]
      %v236 = vld [vmem:[%s208 + $0x48] sm:$0xff]
      %v237 = vld [vmem:[%s208 + $0x50] sm:$0xf]
      %v238 = vld [vmem:[%s1] sm:$0xf]
      %v239 = vld [vmem:[%s1 + $0x4] sm:$0xf]
      %v240 = vld [vmem:[%s1 + $0x8] sm:$0xf]
      %v241 = vld [vmem:[%s1 + $0xc] sm:$0xf]
      %v242 = vld [vmem:[%s1 + $0x10] sm:$0xf]
      %v243 = vld [vmem:[%s1 + $0x14] sm:$0xf]
      %v244 = vld [vmem:[%s1 + $0x18] sm:$0xf]
      %v245 = vld [vmem:[%s1 + $0x1c] sm:$0xf]
      %v246 = vld [vmem:[%s1 + $0x20] sm:$0xf]
      %v247 = vld [vmem:[%s1 + $0x24] sm:$0xf]
      %v248 = vld [vmem:[%s1 + $0x28] sm:$0xf]
      %v249 = vld [vmem:[%s1 + $0x2c] sm:$0xf]
      %v250 = vld [vmem:[%s1 + $0x30] sm:$0xf]
      %v251 = vld [vmem:[%s1 + $0x34] sm:$0xf]
      %v252 = vld [vmem:[%s1 + $0x38] sm:$0xf]
      %v253 = vld [vmem:[%s1 + $0x3c] sm:$0xf]
      %v254 = vld [vmem:[%s1 + $0x40] sm:$0xf]
      %v255 = vld [vmem:[%s1 + $0x44] sm:$0xf]
      %v256 = vld [vmem:[%s1 + $0x48] sm:$0xf]
      %v257 = vld [vmem:[%s1 + $0x4c] sm:$0xf]
      %v258 = vld [vmem:[%s1 + $0x50] sm:$0xf]
      %v259 = vld [vmem:[%s1 + $0x54] sm:$0xf]
      %v260 = vld [vmem:[%s1 + $0x58] sm:$0xf]
      %v261 = vld [vmem:[%s1 + $0x5c] sm:$0xf]
      %v262 = vld [vmem:[%s1 + $0x60] sm:$0xf]
      %v263 = vld [vmem:[%s1 + $0x64] sm:$0xf]
      %v264 = vld [vmem:[%s1 + $0x68] sm:$0xf]
      %v265 = vld [vmem:[%s1 + $0x6c] sm:$0xf]
      %v266 = vld [vmem:[%s1 + $0x70] sm:$0xf]
      %v267 = vld [vmem:[%s1 + $0x74] sm:$0xf]
      %v268 = vld [vmem:[%s1 + $0x78] sm:$0xf]
      %v269 = vld [vmem:[%s1 + $0x7c] sm:$0xf]
      %v270 = vld [vmem:[%s1 + $0x80] sm:$0xf]
      %v271 = vld [vmem:[%s1 + $0x84] sm:$0xf]
      %v272 = vld [vmem:[%s1 + $0x88] sm:$0xf]
      %v273 = vld [vmem:[%s1 + $0x8c] sm:$0xf]
      %v274 = vld [vmem:[%s1 + $0x90] sm:$0xf]
      %v275 = vld [vmem:[%s1 + $0x94] sm:$0xf]
      %v276 = vld [vmem:[%s1 + $0x98] sm:$0xf]
      %v277 = vld [vmem:[%s1 + $0x9c] sm:$0xf]
      %v278 = vld [vmem:[%s1 + $0xa0] sm:$0xf]
      %v279 = vld [vmem:[%s1 + $0xa4] sm:$0xf]
      %v280 = vld [vmem:[%s1 + $0xa8] sm:$0xf]
      %v281 = vld [vmem:[%s1 + $0xac] sm:$0xf]
      %v282 = vld [vmem:[%s1 + $0xb0] sm:$0xf]
      %v283 = vld [vmem:[%s1 + $0xb4] sm:$0xf]
      %v284 = vld [vmem:[%s1 + $0xb8] sm:$0xf]
      %v285 = vld [vmem:[%s1 + $0xbc] sm:$0xf]
      %v300 = vunpack.c.l.b16 %v224
      %v301 = vunpack.c.h.b16 %v224
      %v302 = vunpack.c.l.b16 %v225
      %v303 = vunpack.c.l.b16 %v226
      %v304 = vunpack.c.h.b16 %v226
      %v305 = vunpack.c.l.b16 %v227
      %v306 = vunpack.c.l.b16 %v228
      %v307 = vunpack.c.h.b16 %v228
      %v308 = vunpack.c.l.b16 %v229
      %v309 = vunpack.c.l.b16 %v230
      %v310 = vunpack.c.h.b16 %v230
      %v311 = vunpack.c.l.b16 %v231
      %v312 = vunpack.c.l.b16 %v232
      %v313 = vunpack.c.h.b16 %v232
      %v314 = vunpack.c.l.b16 %v233
      %v315 = vunpack.c.l.b16 %v234
      %v316 = vunpack.c.h.b16 %v234
      %v317 = vunpack.c.l.b16 %v235
      %v318 = vunpack.c.l.b16 %v236
      %v319 = vunpack.c.h.b16 %v236
      %v320 = vunpack.c.l.b16 %v237
      %v321 = vpack.c.b16 %v303, %v300
      %v322 = vpack.c.b16 %v304, %v301
      %v323 = vpack.c.b16 %v305, %v302
      %v324 = vpack.c.b16 %v309, %v306
      %v325 = vpack.c.b16 %v310, %v307
      %v326 = vpack.c.b16 %v311, %v308
      %v327 = vpack.c.b16 %v315, %v312
      %v328 = vpack.c.b16 %v316, %v313
      %v329 = vpack.c.b16 %v317, %v314
      %v330 = vpack.c.b16 %v318, %v318
      %v331 = vpack.c.b16 %v319, %v319
      %v332 = vpack.c.b16 %v320, %v320
      %v393 = vunpack.c.l.b16 %v238
      %v394 = vunpack.c.l.b16 %v239
      %v395 = vunpack.c.l.b16 %v240
      %v396 = vunpack.c.l.b16 %v241
      %v397 = vunpack.c.l.b16 %v242
      %v398 = vunpack.c.l.b16 %v243
      %v399 = vunpack.c.l.b16 %v244
      %v400 = vunpack.c.l.b16 %v245
      %v401 = vunpack.c.l.b16 %v246
      %v402 = vunpack.c.l.b16 %v247
      %v403 = vunpack.c.l.b16 %v248
      %v404 = vunpack.c.l.b16 %v249
      %v405 = vunpack.c.l.b16 %v250
      %v406 = vunpack.c.l.b16 %v251
      %v407 = vunpack.c.l.b16 %v252
      %v408 = vunpack.c.l.b16 %v253
      %v409 = vunpack.c.l.b16 %v254
      %v410 = vunpack.c.l.b16 %v255
      %v411 = vunpack.c.l.b16 %v256
      %v412 = vunpack.c.l.b16 %v257
      %v413 = vunpack.c.l.b16 %v258
      %v414 = vunpack.c.l.b16 %v259
      %v415 = vunpack.c.l.b16 %v260
      %v416 = vunpack.c.l.b16 %v261
      %v417 = vunpack.c.l.b16 %v262
      %v418 = vunpack.c.l.b16 %v263
      %v419 = vunpack.c.l.b16 %v264
      %v420 = vunpack.c.l.b16 %v265
      %v421 = vunpack.c.l.b16 %v266
      %v422 = vunpack.c.l.b16 %v267
      %v423 = vunpack.c.l.b16 %v268
      %v424 = vunpack.c.l.b16 %v269
      %v425 = vunpack.c.l.b16 %v270
      %v426 = vunpack.c.l.b16 %v271
      %v427 = vunpack.c.l.b16 %v272
      %v428 = vunpack.c.l.b16 %v273
      %v429 = vunpack.c.l.b16 %v274
      %v430 = vunpack.c.l.b16 %v275
      %v431 = vunpack.c.l.b16 %v276
      %v432 = vunpack.c.l.b16 %v277
      %v433 = vunpack.c.l.b16 %v278
      %v434 = vunpack.c.l.b16 %v279
      %v435 = vunpack.c.l.b16 %v280
      %v436 = vunpack.c.l.b16 %v281
      %v437 = vunpack.c.l.b16 %v282
      %v438 = vunpack.c.l.b16 %v283
      %v439 = vunpack.c.l.b16 %v284
      %v440 = vunpack.c.l.b16 %v285
      %v441 = vpack.c.b16 %v394, %v393
      %v442 = vpack.c.b16 %v396, %v395
      %v443 = vpack.c.b16 %v398, %v397
      %v444 = vpack.c.b16 %v400, %v399
      %v445 = vpack.c.b16 %v402, %v401
      %v446 = vpack.c.b16 %v404, %v403
      %v447 = vpack.c.b16 %v406, %v405
      %v448 = vpack.c.b16 %v408, %v407
      %v449 = vpack.c.b16 %v410, %v409
      %v450 = vpack.c.b16 %v412, %v411
      %v451 = vpack.c.b16 %v414, %v413
      %v452 = vpack.c.b16 %v416, %v415
      %v453 = vpack.c.b16 %v418, %v417
      %v454 = vpack.c.b16 %v420, %v419
      %v455 = vpack.c.b16 %v422, %v421
      %v456 = vpack.c.b16 %v424, %v423
      %v457 = vpack.c.b16 %v426, %v425
      %v458 = vpack.c.b16 %v428, %v427
      %v459 = vpack.c.b16 %v430, %v429
      %v460 = vpack.c.b16 %v432, %v431
      %v461 = vpack.c.b16 %v434, %v433
      %v462 = vpack.c.b16 %v436, %v435
      %v463 = vpack.c.b16 %v438, %v437
      %v464 = vpack.c.b16 %v440, %v439
      %489 = vmatprep.subr.bf16.mxu0 0
      %490 = vmatpush1.bf16.msra.mxu0 %v441
      %491 = vmatprep.subr.bf16.mxu0 0
      %492 = vmatpush1.bf16.msra.mxu0 %v442
      %493 = vmatprep.subr.bf16.mxu0 0
      %494 = vmatpush1.bf16.msra.mxu0 %v443
      %495 = vmatprep.subr.bf16.mxu0 0
      %496 = vmatpush1.bf16.msra.mxu0 %v444
      %497 = vmatprep.subr.bf16.mxu0 0
      %498 = vmatpush1.bf16.msra.mxu0 %v445
      %499 = vmatprep.subr.bf16.mxu0 0
      %500 = vmatpush1.bf16.msra.mxu0 %v446
      %501 = vmatprep.subr.bf16.mxu0 0
      %502 = vmatpush1.bf16.msra.mxu0 %v447
      %503 = vmatprep.subr.bf16.mxu0 0
      %504 = vmatpush1.bf16.msra.mxu0 %v448
      %505 = vmatprep.subr.bf16.mxu0 0
      %506 = vmatpush1.bf16.msra.mxu0 %v449
      %507 = vmatprep.subr.bf16.mxu0 0
      %508 = vmatpush1.bf16.msra.mxu0 %v450
      %509 = vmatprep.subr.bf16.mxu0 0
      %510 = vmatpush1.bf16.msra.mxu0 %v451
      %511 = vmatprep.subr.bf16.mxu0 0
      %512 = vmatpush1.bf16.msra.mxu0 %v452
      %513 = vmatprep.subr.bf16.mxu0 0
      %514 = vmatpush1.bf16.msra.mxu0 %v453
      %515 = vmatprep.subr.bf16.mxu0 0
      %516 = vmatpush1.bf16.msra.mxu0 %v454
      %517 = vmatprep.subr.bf16.mxu0 0
      %518 = vmatpush1.bf16.msra.mxu0 %v455
      %519 = vmatprep.subr.bf16.mxu0 0
      %520 = vmatpush1.bf16.msra.mxu0 %v456
      %521 = vmatprep.mubr.bf16.mxu0 %v322
      %522 = vmatmul.mubr.bf16.gmra.mrb[0].mxu0 %v321
      %v523 = vpop.f32.mrb[0].mxu0
      %v524 = vadd.f32 0.0, %v523
      %v525 = vpop.f32.mrb[0].mxu0
      %v526 = vpop.f32.mrb[0].mxu0
      %v527 = vadd.f32 0.0, %v526
      %v528 = vpop.f32.mrb[0].mxu0
      %529 = vmatprep.mubr.bf16.mxu0 %v325
      %530 = vmatmul.mubr.bf16.gmra.mrb[0].mxu0 %v324
      %v531 = vpop.f32.mrb[0].mxu0
      %v532 = vadd.f32 0.0, %v531
      %v533 = vpop.f32.mrb[0].mxu0
      %v534 = vpop.f32.mrb[0].mxu0
      %v535 = vadd.f32 0.0, %v534
      %v536 = vpop.f32.mrb[0].mxu0
      %537 = vmatprep.mubr.bf16.mxu0 %v328
      %538 = vmatmul.mubr.bf16.gmra.mrb[0].mxu0 %v327
      %v539 = vpop.f32.mrb[0].mxu0
      %v540 = vadd.f32 0.0, %v539
      %v541 = vpop.f32.mrb[0].mxu0
      %v542 = vpop.f32.mrb[0].mxu0
      %v543 = vadd.f32 0.0, %v542
      %v544 = vpop.f32.mrb[0].mxu0
      %545 = vmatprep.mubr.bf16.mxu0 %v331
      %546 = vmatmul.mubr.bf16.gmra.mrb[0].mxu0 %v330
      %v547 = vpop.f32.mrb[0].mxu0
      %v548 = vadd.f32 0.0, %v547
      %v549 = vpop.f32.mrb[0].mxu0
      %v550 = vpop.f32.mrb[0].mxu0
      %v551 = vpop.f32.mrb[0].mxu0
      %552 = vdwg.mxu0
      %553 = vmatprep.subr.bf16.mxu0 0
      %554 = vmatpush1.bf16.msra.mxu0 %v457
      %555 = vmatprep.subr.bf16.mxu0 0
      %556 = vmatpush1.bf16.msra.mxu0 %v458
      %557 = vmatprep.subr.bf16.mxu0 0
      %558 = vmatpush1.bf16.msra.mxu0 %v459
      %559 = vmatprep.subr.bf16.mxu0 0
      %560 = vmatpush1.bf16.msra.mxu0 %v460
      %561 = vmatprep.subr.bf16.mxu0 0
      %562 = vmatpush1.bf16.msra.mxu0 %v461
      %563 = vmatprep.subr.bf16.mxu0 0
      %564 = vmatpush1.bf16.msra.mxu0 %v462
      %565 = vmatprep.subr.bf16.mxu0 0
      %566 = vmatpush1.bf16.msra.mxu0 %v463
      %567 = vmatprep.subr.bf16.mxu0 0
      %568 = vmatpush1.bf16.msra.mxu0 %v464
      %569 = vmatprep.subr.bf16.mxu0 0
      %570 = vmatpush1.bf16.msra.mxu0 0
      %571 = vmatprep.subr.bf16.mxu0 0
      %572 = vmatpush1.bf16.msra.mxu0 0
      %573 = vmatprep.subr.bf16.mxu0 0
      %574 = vmatpush1.bf16.msra.mxu0 0
      %575 = vmatprep.subr.bf16.mxu0 0
      %576 = vmatpush1.bf16.msra.mxu0 0
      %577 = vmatprep.subr.bf16.mxu0 0
      %578 = vmatpush1.bf16.msra.mxu0 0
      %579 = vmatprep.subr.bf16.mxu0 0
      %580 = vmatpush1.bf16.msra.mxu0 0
      %581 = vmatprep.subr.bf16.mxu0 0
      %582 = vmatpush1.bf16.msra.mxu0 0
      %583 = vmatprep.subr.bf16.mxu0 0
      %584 = vmatpush1.bf16.msra.mxu0 0
      %585 = vmatprep.mubr.bf16.mxu0 0
      %586 = vmatmul.mubr.bf16.gmra.mrb[0].mxu0 %v323
      %v587 = vpop.f32.mrb[0].mxu0
      %v588 = vadd.f32 %v524, %v587
      %v589 = vpop.f32.mrb[0].mxu0
      %v590 = vpop.f32.mrb[0].mxu0
      %v591 = vadd.f32 %v527, %v590
      %v592 = vpop.f32.mrb[0].mxu0
      %593 = vmatprep.mubr.bf16.mxu0 0
      %594 = vmatmul.mubr.bf16.gmra.mrb[0].mxu0 %v326
      %v595 = vpop.f32.mrb[0].mxu0
      %v596 = vadd.f32 %v532, %v595
      %v597 = vpop.f32.mrb[0].mxu0
      %v598 = vpop.f32.mrb[0].mxu0
      %v599 = vadd.f32 %v535, %v598
      %v600 = vpop.f32.mrb[0].mxu0
      %601 = vmatprep.mubr.bf16.mxu0 0
      %602 = vmatmul.mubr.bf16.gmra.mrb[0].mxu0 %v329
      %v603 = vpop.f32.mrb[0].mxu0
      %v604 = vadd.f32 %v540, %v603
      %v605 = vpop.f32.mrb[0].mxu0
      %v606 = vpop.f32.mrb[0].mxu0
      %v607 = vadd.f32 %v543, %v606
      %v608 = vpop.f32.mrb[0].mxu0
      %609 = vmatprep.mubr.bf16.mxu0 0
      %610 = vmatmul.mubr.bf16.gmra.mrb[0].mxu0 %v332
      %v611 = vpop.f32.mrb[0].mxu0
      %v612 = vadd.f32 %v548, %v611
      %v613 = vpop.f32.mrb[0].mxu0
      %v614 = vpop.f32.mrb[0].mxu0
      %v615 = vpop.f32.mrb[0].mxu0
      %616 = vdwg.mxu0
      // Predicated region
      $region41: #{discriminator_forward.7} parent=35 // pred_check
        %p617 = pneg %p217
      $region42: #{discriminator_forward.7} parent=35 // pred_check_branch
        %619 = sbr.rel (%p617) target = $region44
      $region43: #{discriminator_forward.7} parent=35 // pred_region
        %v620 = vadd.f32 %v588, %v591
        %v621 = vadd.f32 %v620, %v596
        %v622 = vadd.f32 %v621, %v599
        %v623 = vadd.f32 %v622, %v604
        %v624 = vadd.f32 %v623, %v607
        %v625 = vadd.f32 %v624, %v612
        %v626 = vrot.slane %v625, 4
        %v627 = vadd.f32 %v625, %v626
        %v628 = vrot.slane %v627, 2
        %v629 = vadd.f32 %v627, %v628
        %v630 = vrot.slane %v629, 1
        %v631 = vadd.f32 %v629, %v630
        %v632 = vmul.f32 %v588, %v588
        %v633 = vmul.f32 %v591, %v591
        %v634 = vmul.f32 %v596, %v596
        %v635 = vmul.f32 %v599, %v599
        %v636 = vmul.f32 %v604, %v604
        %v637 = vmul.f32 %v607, %v607
        %v638 = vmul.f32 %v612, %v612
        %v639 = vadd.f32 %v632, %v633
        %v640 = vadd.f32 %v639, %v634
        %v641 = vadd.f32 %v640, %v635
        %v642 = vadd.f32 %v641, %v636
        %v643 = vadd.f32 %v642, %v637
        %v644 = vadd.f32 %v643, %v638
        %v645 = vrot.slane %v644, 4
        %v646 = vadd.f32 %v644, %v645
        %v647 = vrot.slane %v646, 2
        %v648 = vadd.f32 %v646, %v647
        %v649 = vrot.slane %v648, 1
        %v650 = vadd.f32 %v648, %v649
        %v651 = vld [vmem:[#allocation2] sm:$0x3]
        %vm652 = vcmask 1040384
        %v653 = vsel %vm652, %v631, %v650
        %v654 = vadd.f32 %v651, %v653
        %655 = vst [vmem:[#allocation2] sm:$0x3] %v654
      $region44: #{discriminator_forward.7} parent=35 // pred_fallthru
        _
      %p656 = scmp.eq.s32.totalorder %s19, 1
      // Predicated region
      $region45: #{discriminator_forward.7} parent=35 // pred_check
        %p657 = pneg %p656
      $region46: #{discriminator_forward.7} parent=35 // pred_check_branch
        %659 = sbr.rel (%p657) target = $region48
      $region47: #{discriminator_forward.7} parent=35 // pred_region
        %v660 = vld [vmem:[#allocation2] sm:$0x3]
        %v661 = vmul.f32 %v660, 0.018518519
        %v662 = vmul.f32 %v661, %v661
        %v664 = vrot.slane %v662, 7
        %v666 = vsub.f32 %v661, %v664
        %v667 = vmax.f32 %v666, 0.0
        %v668 = vadd.f32 %v667, 1e-05
        %v669 = vrsqrt.pop %v668
        %v670 = vld [vmem:[%s2] sm:$0x1]
        %v673 = vunpack.c.l.s4 1966171168
        %v674 = vunpack.c.0.s8 %v673
        %v675 = vlaneseq
        %v676 = vshrl.u32 %v675, 7
        %v677 = vsub.s32 %v674, %v676
        %v678 = vrot.slane %v669, %v677
        %v679 = vcombine.high %v678, %v678
        %v681 = vunpack.c.l.s4 1966171168
        %v682 = vunpack.c.0.s8 %v681
        %v683 = vlaneseq
        %v684 = vshrl.u32 %v683, 7
        %v685 = vsub.s32 %v682, %v684
        %v686 = vrot.slane %v679, %v685
        %v688 = vmul.f32 %v670, %v686
        %v689 = vld [vmem:[%s3] sm:$0x1]
        %v690 = vmul.f32 %v661, %v688
        %v691 = vsub.f32 %v689, %v690
        %v693 = vlaneseq
        %v694 = vshrl.u32 %v693, 7
        %v695 = vsub.s32 0, %v694
        %v696 = vrot.slane %v688, %v695
        %v698 = vmul.f32 %v588, %v696
        %v699 = vmul.f32 %v591, %v696
        %v700 = vmul.f32 %v596, %v696
        %v701 = vmul.f32 %v599, %v696
        %v702 = vmul.f32 %v604, %v696
        %v703 = vmul.f32 %v607, %v696
        %v704 = vmul.f32 %v612, %v696
        %v706 = vlaneseq
        %v707 = vshrl.u32 %v706, 7
        %v708 = vsub.s32 0, %v707
        %v709 = vrot.slane %v691, %v708
        %v711 = vadd.f32 %v698, %v709
        %v712 = vadd.f32 %v699, %v709
        %v713 = vadd.f32 %v700, %v709
        %v714 = vadd.f32 %v701, %v709
        %v715 = vadd.f32 %v702, %v709
        %v716 = vadd.f32 %v703, %v709
        %v717 = vadd.f32 %v704, %v709
        %vm718 = vcmp.ge.f32.partialorder %v711, 0.0
        %vm719 = vcmp.ge.f32.partialorder %v712, 0.0
        %vm720 = vcmp.ge.f32.partialorder %v713, 0.0
        %vm721 = vcmp.ge.f32.partialorder %v714, 0.0
        %vm722 = vcmp.ge.f32.partialorder %v715, 0.0
        %vm723 = vcmp.ge.f32.partialorder %v716, 0.0
        %vm724 = vcmp.ge.f32.partialorder %v717, 0.0
        %v725 = vmul.f32 %v711, 0.2
        %v726 = vmul.f32 %v712, 0.2
        %v727 = vmul.f32 %v713, 0.2
        %v728 = vmul.f32 %v714, 0.2
        %v729 = vmul.f32 %v715, 0.2
        %v730 = vmul.f32 %v716, 0.2
        %v731 = vmul.f32 %v717, 0.2
        %v732 = vsel %vm718, %v711, %v725
        %v733 = vsel %vm719, %v712, %v726
        %v734 = vsel %vm720, %v713, %v727
        %v735 = vsel %vm721, %v714, %v728
        %v736 = vsel %vm722, %v715, %v729
        %v737 = vsel %vm723, %v716, %v730
        %v738 = vsel %vm724, %v717, %v731
        %v739 = vpack.c.bf16 %v733, %v732
        %v740 = vpack.c.bf16 %v735, %v734
        %v741 = vpack.c.bf16 %v737, %v736
        %v742 = vpack.c.bf16 %v738, %v738
        %v747 = vunpack.c.l.b16 %v739
        %v748 = vunpack.c.h.b16 %v739
        %v749 = vunpack.c.l.b16 %v740
        %v750 = vunpack.c.h.b16 %v740
        %v751 = vunpack.c.l.b16 %v741
        %v752 = vunpack.c.h.b16 %v741
        %v753 = vunpack.c.l.b16 %v742
        %v754 = vpack.c.b16 %v747, %v747
        %v755 = vpack.c.b16 %v748, %v748
        %v756 = vpack.c.b16 %v749, %v749
        %v757 = vpack.c.b16 %v750, %v750
        %v758 = vpack.c.b16 %v751, %v751
        %v759 = vpack.c.b16 %v752, %v752
        %v760 = vpack.c.b16 %v753, %v753
        %768 = vst [vmem:[%s214] sm:$0xf] %v754
        %769 = vst [vmem:[%s214 + $0x4] sm:$0xf] %v755
        %770 = vst [vmem:[%s214 + $0x8] sm:$0xf] %v756
        %771 = vst [vmem:[%s214 + $0xc] sm:$0xf] %v757
        %772 = vst [vmem:[%s214 + $0x10] sm:$0xf] %v758
        %773 = vst [vmem:[%s214 + $0x14] sm:$0xf] %v759
        %774 = vst [vmem:[%s214 + $0x18] sm:$0xf] %v760
      $region48: #{discriminator_forward.7} parent=35 // pred_fallthru
        _
      %s775 = smul.u32 7, %s20
      %p776 = scmp.lt.s32.totalorder %s775, 6
      %s777 = scalar_select %p776, %s775, 6
      %s778 = smul.addr %s777, 4
      %s779 = scalar_lea.vmem %s4, %s778
      // Predicated region
      $region49: #{discriminator_forward.7} parent=35 // pred_check
        %p780 = pneg %p134
      $region50: #{discriminator_forward.7} parent=35 // pred_check_branch
        %782 = sbr.rel (%p780) target = $region52
      $region51: #{discriminator_forward.7} parent=35 // pred_region
        %s783 = smul.u32 7, %s20
      $region52: #{discriminator_forward.7} parent=35 // pred_fallthru
        _
      // Predicated region
      $region53: #{discriminator_forward.7} parent=35 // pred_check
        %p784 = pneg %p134
      $region54: #{discriminator_forward.7} parent=35 // pred_check_branch
        %786 = sbr.rel (%p784) target = $region56
      $region55: #{discriminator_forward.7} parent=35 // pred_region
        %s787 = smul.u32 7, %s20
        %p788 = scmp.lt.s32.totalorder %s787, 6
        %s789 = scalar_select %p788, %s787, 6
        %s790 = smul.addr %s789, 4
        %s791 = scalar_lea.vmem %s4, %s790
      $region56: #{discriminator_forward.7} parent=35 // pred_fallthru
        _
    $region36: #{discriminator_forward.7} parent=5 // pred_fallthru
      _
    %p792 = scmp.le.s32.totalorder 2, %s10
    // Predicated region
    $region57: #{discriminator_forward.7} parent=5 // pred_check
      %p793 = pneg %p792
    $region58: #{discriminator_forward.7} parent=5 // pred_check_branch
      %795 = sbr.rel (%p793) target = $region60
    $region59: #{discriminator_forward.7} parent=5 // pred_region
      %s796 = ssub.s32 %s10, 2
    $region60: #{discriminator_forward.7} parent=5 // pred_fallthru
      _
  $region6: #{discriminator_forward.7} parent=0 // loop_footer
    %s14 = sadd.s32 1, %s10
  $region7: #{discriminator_forward.7} parent=0 // loop_footer_branch
    %9 = sbr.rel target = $region3
  $region8: #{discriminator_forward.7} parent=0 // loop_exit
    _

// kernel: discriminator_forward.8
$region0: #{discriminator_forward.8}
  #allocation0 [shape = 'u32[]', space=smem, size = 0x4, offset = 0x4, fixed_abs, tag = 'smem constant byte address 0x4 - core index']
  #allocation1 [shape = 'u32[144,128]{1,0:T(1,128)}', space=vmem, size = 0x12000, scoped, tag = 'internal scratch']
  #allocation2 [shape = 'f32[2,128]{1,0:T(2,128)}', space=vmem, size = 0x400, scoped, tag = 'scratch operand']
  %s0 = inlined_call_operand.vmem [shape: bf16[16,640], index: 0, kind: input, shape index: {}]
  %s1 = inlined_call_operand.vmem [shape: bf16[640,128], index: 1, kind: input, shape index: {}]
  %s2 = inlined_call_operand.vmem [shape: f32[1,128], index: 2, kind: input, shape index: {}]
  %s3 = inlined_call_operand.vmem [shape: f32[1,128], index: 3, kind: input, shape index: {}]
  %s4 = inlined_call_operand.vmem [shape: bf16[16,128], index: 4, kind: output, shape index: {}]
  %s5 = sld [smem:[#allocation0]]
  $region61: #{discriminator_forward.8} parent=0
    _
  %s7 = ssub.s32 1, %s5
  %s8 = scalar_select 0, %s7, %s5
  loop: start=0, step=1, limit=4
  $region2: #{discriminator_forward.8} parent=0 // loop_pre_header
    _
  $region3: #{discriminator_forward.8} parent=0 // loop_header
    %s10 = sphi 0, %s14
    %p11 = scmp.ge.s32.totalorder %s10, 4
    %s17 = sphi 0, %s29
    %s18 = sphi 0, %s25
    %s19 = sphi 0, %s17
    %s20 = sphi 0, %s18
    %s21 = sphi 0, %s19
    %s22 = sphi 0, %s20
    %s32 = sphi 0, %s34
    %s35 = sphi 0, %s32
    %s36 = sphi 0, %s35
    %s52 = sphi 0, %s36
    %s56 = sphi 0, %s56
    %s58 = sphi 0, %s56
    %s59 = sphi 0, %s58
    %s73 = sphi 0, %s59
    %s77 = sphi 0, %s77
    %s79 = sphi 0, %s77
    %s80 = sphi 0, %s79
    %s94 = sphi 0, %s80
    %s98 = sphi 0, %s98
    %s100 = sphi 0, %s98
    %s101 = sphi 0, %s100
    %s115 = sphi 0, %s101
    %s121 = sphi 0, %s123
    %s124 = sphi 0, %s121
    %s125 = sphi 0, %s124
    %s141 = sphi 0, %s125
  $region4: #{discriminator_forward.8} parent=0 // loop_header_branch
    %13 = sbr.rel (%p11) target = $region8
  $region5: #{discriminator_forward.8} parent=0 // loop_body
    %s15 = ssub.s32 %s10, 1
    %s16 = ssub.s32 %s10, 2
    %s23 = sadd.s32 1, %s18
    %p24 = scmp.ge.s32.totalorder %s23, 1
    %s25 = scalar_select %p24, 0, %s23
    %s26 = sadd.s32 1, %s17
    %s27 = scalar_select %p24, %s26, %s17
    %p28 = scmp.ge.s32.totalorder %s27, 2
    %s29 = scalar_select %p28, 0, %s27
    %s30 = ssub.s32 %s18, %s25
    %p31 = scmp.eq.s32.totalorder %s30, 0
    %s33 = sadd.s32 %s32, 1
    %s34 = scalar_select %p31, %s32, %s33
    %p37 = pneg %p31
    %p38 = scmp.eq.s32.totalorder %s10, 1
    %p39 = por %p37, %p38
    %p40 = scmp.ne.s32.totalorder %s32, %s35
    %p41 = scmp.eq.s32.totalorder %s10, 0
    %p42 = por %p40, %p41
    %p43 = scmp.ne.s32.totalorder %s32, %s35
    %p44 = scmp.eq.s32.totalorder %s15, 1
    %p45 = por %p43, %p44
    %p46 = scmp.ne.s32.totalorder %s35, %s36
    %p47 = scmp.eq.s32.totalorder %s15, 0
    %p48 = por %p46, %p47
    %p49 = scmp.ne.s32.totalorder %s35, %s36
    %p50 = scmp.eq.s32.totalorder %s16, 1
    %p51 = por %p49, %p50
    %p53 = scmp.ne.s32.totalorder %s36, %s52
    %p54 = scmp.eq.s32.totalorder %s16, 0
    %p55 = por %p53, %p54
    %s57 = sadd.s32 %s56, 1
    %p60 = scmp.eq.s32.totalorder %s10, 1
    %p61 = scmp.ne.s32.totalorder %s56, %s58
    %p62 = scmp.eq.s32.totalorder %s10, 0
    %p63 = por %p61, %p62
    %p64 = scmp.ne.s32.totalorder %s56, %s58
    %p65 = scmp.eq.s32.totalorder %s15, 1
    %p66 = por %p64, %p65
    %p67 = scmp.ne.s32.totalorder %s58, %s59
    %p68 = scmp.eq.s32.totalorder %s15, 0
    %p69 = por %p67, %p68
    %p70 = scmp.ne.s32.totalorder %s58, %s59
    %p71 = scmp.eq.s32.totalorder %s16, 1
    %p72 = por %p70, %p71
    %p74 = scmp.ne.s32.totalorder %s59, %s73
    %p75 = scmp.eq.s32.totalorder %s16, 0
    %p76 = por %p74, %p75
    %s78 = sadd.s32 %s77, 1
    %p81 = scmp.eq.s32.totalorder %s10, 1
    %p82 = scmp.ne.s32.totalorder %s77, %s79
    %p83 = scmp.eq.s32.totalorder %s10, 0
    %p84 = por %p82, %p83
    %p85 = scmp.ne.s32.totalorder %s77, %s79
    %p86 = scmp.eq.s32.totalorder %s15, 1
    %p87 = por %p85, %p86
    %p88 = scmp.ne.s32.totalorder %s79, %s80
    %p89 = scmp.eq.s32.totalorder %s15, 0
    %p90 = por %p88, %p89
    %p91 = scmp.ne.s32.totalorder %s79, %s80
    %p92 = scmp.eq.s32.totalorder %s16, 1
    %p93 = por %p91, %p92
    %p95 = scmp.ne.s32.totalorder %s80, %s94
    %p96 = scmp.eq.s32.totalorder %s16, 0
    %p97 = por %p95, %p96
    %s99 = sadd.s32 %s98, 1
    %p102 = scmp.eq.s32.totalorder %s10, 1
    %p103 = scmp.ne.s32.totalorder %s98, %s100
    %p104 = scmp.eq.s32.totalorder %s10, 0
    %p105 = por %p103, %p104
    %p106 = scmp.ne.s32.totalorder %s98, %s100
    %p107 = scmp.eq.s32.totalorder %s15, 1
    %p108 = por %p106, %p107
    %p109 = scmp.ne.s32.totalorder %s100, %s101
    %p110 = scmp.eq.s32.totalorder %s15, 0
    %p111 = por %p109, %p110
    %p112 = scmp.ne.s32.totalorder %s100, %s101
    %p113 = scmp.eq.s32.totalorder %s16, 1
    %p114 = por %p112, %p113
    %p116 = scmp.ne.s32.totalorder %s101, %s115
    %p117 = scmp.eq.s32.totalorder %s16, 0
    %p118 = por %p116, %p117
    %s119 = ssub.s32 %s18, %s25
    %p120 = scmp.eq.s32.totalorder %s119, 0
    %s122 = sadd.s32 %s121, 1
    %s123 = scalar_select %p120, %s121, %s122
    %p126 = pneg %p120
    %p127 = scmp.eq.s32.totalorder %s10, 1
    %p128 = por %p126, %p127
    %p129 = scmp.ne.s32.totalorder %s121, %s124
    %p130 = scmp.eq.s32.totalorder %s10, 0
    %p131 = por %p129, %p130
    %p132 = scmp.ne.s32.totalorder %s121, %s124
    %p133 = scmp.eq.s32.totalorder %s15, 1
    %p134 = por %p132, %p133
    %p135 = scmp.ne.s32.totalorder %s124, %s125
    %p136 = scmp.eq.s32.totalorder %s15, 0
    %p137 = por %p135, %p136
    %p138 = scmp.ne.s32.totalorder %s124, %s125
    %p139 = scmp.eq.s32.totalorder %s16, 1
    %p140 = por %p138, %p139
    %p142 = scmp.ne.s32.totalorder %s125, %s141
    %p143 = scmp.eq.s32.totalorder %s16, 0
    %p144 = por %p142, %p143
    %p145 = scmp.le.s32.totalorder 1, %s10
    %p146 = scmp.lt.s32.totalorder %s10, 3
    %p147 = pnand %p145, %p146
    %p148 = pneg %p147
    // Predicated region
    $region9: #{discriminator_forward.8} parent=5 // pred_check
      _
    $region10: #{discriminator_forward.8} parent=5 // pred_check_branch
      %150 = sbr.rel (%p147) target = $region12
    $region11: #{discriminator_forward.8} parent=5 // pred_region
      %s151 = ssub.s32 %s10, 1
      // Predicated region
      $region13: #{discriminator_forward.8} parent=11 // pred_check
        %p152 = pneg %p48
      $region14: #{discriminator_forward.8} parent=11 // pred_check_branch
        %154 = sbr.rel (%p152) target = $region16
      $region15: #{discriminator_forward.8} parent=11 // pred_region
        %s155 = smul.u32 2, %s20
        %p156 = scmp.lt.s32.totalorder %s155, 1
        %s157 = scalar_select %p156, %s155, 1
        %s158 = smul.addr %s157, 5
        %s159 = smul.addr %s158, 4
        %s160 = scalar_lea.vmem %s0, %s159
        %s161 = smul.u32 2, %s20
      $region16: #{discriminator_forward.8} parent=11 // pred_fallthru
        _
      // Predicated region
      $region17: #{discriminator_forward.8} parent=11 // pred_check
        %p162 = pneg %p69
      $region18: #{discriminator_forward.8} parent=11 // pred_check_branch
        %164 = sbr.rel (%p162) target = $region20
      $region19: #{discriminator_forward.8} parent=11 // pred_region
        _
      $region20: #{discriminator_forward.8} parent=11 // pred_fallthru
        _
      // Predicated region
      $region21: #{discriminator_forward.8} parent=11 // pred_check
        %p165 = pneg %p90
      $region22: #{discriminator_forward.8} parent=11 // pred_check_branch
        %167 = sbr.rel (%p165) target = $region24
      $region23: #{discriminator_forward.8} parent=11 // pred_region
        _
      $region24: #{discriminator_forward.8} parent=11 // pred_fallthru
        _
      // Predicated region
      $region25: #{discriminator_forward.8} parent=11 // pred_check
        %p168 = pneg %p111
      $region26: #{discriminator_forward.8} parent=11 // pred_check_branch
        %170 = sbr.rel (%p168) target = $region28
      $region27: #{discriminator_forward.8} parent=11 // pred_region
        _
      $region28: #{discriminator_forward.8} parent=11 // pred_fallthru
        _
    $region12: #{discriminator_forward.8} parent=5 // pred_fallthru
      _
    %p171 = scmp.lt.s32.totalorder %s10, 2
    // Predicated region
    $region29: #{discriminator_forward.8} parent=5 // pred_check
      %p172 = pneg %p171
    $region30: #{discriminator_forward.8} parent=5 // pred_check_branch
      %174 = sbr.rel (%p172) target = $region32
    $region31: #{discriminator_forward.8} parent=5 // pred_region
      _
    $region32: #{discriminator_forward.8} parent=5 // pred_fallthru
      _
    %p175 = scmp.le.s32.totalorder 1, %s10
    %p176 = scmp.lt.s32.totalorder %s10, 3
    %p177 = pnand %p175, %p176
    %p178 = pneg %p177
    // Predicated region
    $region33: #{discriminator_forward.8} parent=5 // pred_check
      _
    $region34: #{discriminator_forward.8} parent=5 // pred_check_branch
      %180 = sbr.rel (%p177) target = $region36
    $region35: #{discriminator_forward.8} parent=5 // pred_region
      %s181 = ssub.s32 %s10, 1
      %s182 = smul.u32 2, %s20
      %p183 = scmp.lt.s32.totalorder %s182, 1
      %s184 = scalar_select %p183, %s182, 1
      %s185 = smul.addr %s184, 5
      %s186 = smul.addr %s185, 4
      %s187 = scalar_lea.vmem %s0, %s186
      %p188 = pneg %p48
      %p189 = pneg %p45
      %p190 = pneg %p69
      %p191 = pneg %p66
      %p192 = pneg %p90
      %p193 = pneg %p87
      %p194 = pneg %p111
      %p195 = pneg %p108
      %p196 = pneg %p137
      %p197 = pneg %p134
      %s198 = smul.u32 2, %s20
      %p199 = scmp.lt.s32.totalorder %s198, 1
      %s200 = scalar_select %p199, %s198, 1
      %s201 = smul.addr %s200, 4
      %s202 = scalar_lea.vmem %s4, %s201
      %s203 = smul.u32 2, %s20
      %p204 = scmp.lt.s32.totalorder %s203, 1
      %s205 = scalar_select %p204, %s203, 1
      %s206 = smul.addr %s205, 5
      %s207 = smul.addr %s206, 4
      %s208 = scalar_lea.vmem %s0, %s207
      %s209 = smul.u32 2, %s20
      %s210 = smul.u32 2, %s20
      %p211 = scmp.lt.s32.totalorder %s210, 1
      %s212 = scalar_select %p211, %s210, 1
      %s213 = smul.addr %s212, 4
      %s214 = scalar_lea.vmem %s4, %s213
      %s215 = smul.u32 2, %s20
      %p217 = scmp.eq.s32.totalorder %s19, 0
      %p218 = scmp.eq.s32.totalorder %s20, 0
      %p219 = pnand %p217, %p218
      %p220 = pneg %p219
      // Predicated region
      $region37: #{discriminator_forward.8} parent=35 // pred_check
        _
      $region38: #{discriminator_forward.8} parent=35 // pred_check_branch
        %222 = sbr.rel (%p219) target = $region40
      $region39: #{discriminator_forward.8} parent=35 // pred_region
        %223 = vst [vmem:[#allocation2] sm:$0x3] 0.0
      $region40: #{discriminator_forward.8} parent=35 // pred_fallthru
        _
      %v224 = vld [vmem:[%s208] sm:$0xff]
      %v225 = vld [vmem:[%s208 + $0x8] sm:$0xff]
      %v226 = vld [vmem:[%s208 + $0x10] sm:$0xf]
      %v227 = vld [vmem:[%s208 + $0x14] sm:$0xff]
      %v228 = vld [vmem:[%s208 + $0x1c] sm:$0xff]
      %v229 = vld [vmem:[%s208 + $0x24] sm:$0xf]
      %v230 = vld [vmem:[%s1] sm:$0xf]
      %v231 = vld [vmem:[%s1 + $0x4] sm:$0xf]
      %v232 = vld [vmem:[%s1 + $0x8] sm:$0xf]
      %v233 = vld [vmem:[%s1 + $0xc] sm:$0xf]
      %v234 = vld [vmem:[%s1 + $0x10] sm:$0xf]
      %v235 = vld [vmem:[%s1 + $0x14] sm:$0xf]
      %v236 = vld [vmem:[%s1 + $0x18] sm:$0xf]
      %v237 = vld [vmem:[%s1 + $0x1c] sm:$0xf]
      %v238 = vld [vmem:[%s1 + $0x20] sm:$0xf]
      %v239 = vld [vmem:[%s1 + $0x24] sm:$0xf]
      %v240 = vld [vmem:[%s1 + $0x28] sm:$0xf]
      %v241 = vld [vmem:[%s1 + $0x2c] sm:$0xf]
      %v242 = vld [vmem:[%s1 + $0x30] sm:$0xf]
      %v243 = vld [vmem:[%s1 + $0x34] sm:$0xf]
      %v244 = vld [vmem:[%s1 + $0x38] sm:$0xf]
      %v245 = vld [vmem:[%s1 + $0x3c] sm:$0xf]
      %v246 = vld [vmem:[%s1 + $0x40] sm:$0xf]
      %v247 = vld [vmem:[%s1 + $0x44] sm:$0xf]
      %v248 = vld [vmem:[%s1 + $0x48] sm:$0xf]
      %v249 = vld [vmem:[%s1 + $0x4c] sm:$0xf]
      %v250 = vld [vmem:[%s1 + $0x50] sm:$0xf]
      %v251 = vld [vmem:[%s1 + $0x54] sm:$0xf]
      %v252 = vld [vmem:[%s1 + $0x58] sm:$0xf]
      %v253 = vld [vmem:[%s1 + $0x5c] sm:$0xf]
      %v254 = vld [vmem:[%s1 + $0x60] sm:$0xf]
      %v255 = vld [vmem:[%s1 + $0x64] sm:$0xf]
      %v256 = vld [vmem:[%s1 + $0x68] sm:$0xf]
      %v257 = vld [vmem:[%s1 + $0x6c] sm:$0xf]
      %v258 = vld [vmem:[%s1 + $0x70] sm:$0xf]
      %v259 = vld [vmem:[%s1 + $0x74] sm:$0xf]
      %v260 = vld [vmem:[%s1 + $0x78] sm:$0xf]
      %v261 = vld [vmem:[%s1 + $0x7c] sm:$0xf]
      %v262 = vld [vmem:[%s1 + $0x80] sm:$0xf]
      %v263 = vld [vmem:[%s1 + $0x84] sm:$0xf]
      %v264 = vld [vmem:[%s1 + $0x88] sm:$0xf]
      %v265 = vld [vmem:[%s1 + $0x8c] sm:$0xf]
      %v266 = vld [vmem:[%s1 + $0x90] sm:$0xf]
      %v267 = vld [vmem:[%s1 + $0x94] sm:$0xf]
      %v268 = vld [vmem:[%s1 + $0x98] sm:$0xf]
      %v269 = vld [vmem:[%s1 + $0x9c] sm:$0xf]
      %v270 = vld [vmem:[%s1 + $0xa0] sm:$0xf]
      %v271 = vld [vmem:[%s1 + $0xa4] sm:$0xf]
      %v272 = vld [vmem:[%s1 + $0xa8] sm:$0xf]
      %v273 = vld [vmem:[%s1 + $0xac] sm:$0xf]
      %v274 = vld [vmem:[%s1 + $0xb0] sm:$0xf]
      %v275 = vld [vmem:[%s1 + $0xb4] sm:$0xf]
      %v276 = vld [vmem:[%s1 + $0xb8] sm:$0xf]
      %v277 = vld [vmem:[%s1 + $0xbc] sm:$0xf]
      %v278 = vld [vmem:[%s1 + $0xc0] sm:$0xf]
      %v279 = vld [vmem:[%s1 + $0xc4] sm:$0xf]
      %v280 = vld [vmem:[%s1 + $0xc8] sm:$0xf]
      %v281 = vld [vmem:[%s1 + $0xcc] sm:$0xf]
      %v282 = vld [vmem:[%s1 + $0xd0] sm:$0xf]
      %v283 = vld [vmem:[%s1 + $0xd4] sm:$0xf]
      %v284 = vld [vmem:[%s1 + $0xd8] sm:$0xf]
      %v285 = vld [vmem:[%s1 + $0xdc] sm:$0xf]
      %v286 = vld [vmem:[%s1 + $0xe0] sm:$0xf]
      %v287 = vld [vmem:[%s1 + $0xe4] sm:$0xf]
      %v288 = vld [vmem:[%s1 + $0xe8] sm:$0xf]
      %v289 = vld [vmem:[%s1 + $0xec] sm:$0xf]
      %v290 = vld [vmem:[%s1 + $0xf0] sm:$0xf]
      %v291 = vld [vmem:[%s1 + $0xf4] sm:$0xf]
      %v292 = vld [vmem:[%s1 + $0xf8] sm:$0xf]
      %v293 = vld [vmem:[%s1 + $0xfc] sm:$0xf]
      %v294 = vld [vmem:[%s1 + $0x100] sm:$0xf]
      %v295 = vld [vmem:[%s1 + $0x104] sm:$0xf]
      %v296 = vld [vmem:[%s1 + $0x108] sm:$0xf]
      %v297 = vld [vmem:[%s1 + $0x10c] sm:$0xf]
      %v298 = vld [vmem:[%s1 + $0x110] sm:$0xf]
      %v299 = vld [vmem:[%s1 + $0x114] sm:$0xf]
      %v300 = vld [vmem:[%s1 + $0x118] sm:$0xf]
      %v301 = vld [vmem:[%s1 + $0x11c] sm:$0xf]
      %v302 = vld [vmem:[%s1 + $0x120] sm:$0xf]
      %v303 = vld [vmem:[%s1 + $0x124] sm:$0xf]
      %v304 = vld [vmem:[%s1 + $0x128] sm:$0xf]
      %v305 = vld [vmem:[%s1 + $0x12c] sm:$0xf]
      %v306 = vld [vmem:[%s1 + $0x130] sm:$0xf]
      %v307 = vld [vmem:[%s1 + $0x134] sm:$0xf]
      %v308 = vld [vmem:[%s1 + $0x138] sm:$0xf]
      %v309 = vld [vmem:[%s1 + $0x13c] sm:$0xf]
      %v316 = vunpack.c.l.b16 %v224
      %v317 = vunpack.c.h.b16 %v224
      %v318 = vunpack.c.l.b16 %v225
      %v319 = vunpack.c.h.b16 %v225
      %v320 = vunpack.c.l.b16 %v226
      %v321 = vunpack.c.l.b16 %v227
      %v322 = vunpack.c.h.b16 %v227
      %v323 = vunpack.c.l.b16 %v228
      %v324 = vunpack.c.h.b16 %v228
      %v325 = vunpack.c.l.b16 %v229
      %v326 = vpack.c.b16 %v321, %v316
      %v327 = vpack.c.b16 %v322, %v317
      %v328 = vpack.c.b16 %v323, %v318
      %v329 = vpack.c.b16 %v324, %v319
      %v330 = vpack.c.b16 %v325, %v320
      %v416 = vunpack.c.l.b16 %v230
      %v417 = vunpack.c.l.b16 %v231
      %v418 = vunpack.c.l.b16 %v232
      %v419 = vunpack.c.l.b16 %v233
      %v420 = vunpack.c.l.b16 %v234
      %v421 = vunpack.c.l.b16 %v235
      %v422 = vunpack.c.l.b16 %v236
      %v423 = vunpack.c.l.b16 %v237
      %v424 = vunpack.c.l.b16 %v238
      %v425 = vunpack.c.l.b16 %v239
      %v426 = vunpack.c.l.b16 %v240
      %v427 = vunpack.c.l.b16 %v241
      %v428 = vunpack.c.l.b16 %v242
      %v429 = vunpack.c.l.b16 %v243
      %v430 = vunpack.c.l.b16 %v244
      %v431 = vunpack.c.l.b16 %v245
      %v432 = vunpack.c.l.b16 %v246
      %v433 = vunpack.c.l.b16 %v247
      %v434 = vunpack.c.l.b16 %v248
      %v435 = vunpack.c.l.b16 %v249
      %v436 = vunpack.c.l.b16 %v250
      %v437 = vunpack.c.l.b16 %v251
      %v438 = vunpack.c.l.b16 %v252
      %v439 = vunpack.c.l.b16 %v253
      %v440 = vunpack.c.l.b16 %v254
      %v441 = vunpack.c.l.b16 %v255
      %v442 = vunpack.c.l.b16 %v256
      %v443 = vunpack.c.l.b16 %v257
      %v444 = vunpack.c.l.b16 %v258
      %v445 = vunpack.c.l.b16 %v259
      %v446 = vunpack.c.l.b16 %v260
      %v447 = vunpack.c.l.b16 %v261
      %v448 = vunpack.c.l.b16 %v262
      %v449 = vunpack.c.l.b16 %v263
      %v450 = vunpack.c.l.b16 %v264
      %v451 = vunpack.c.l.b16 %v265
      %v452 = vunpack.c.l.b16 %v266
      %v453 = vunpack.c.l.b16 %v267
      %v454 = vunpack.c.l.b16 %v268
      %v455 = vunpack.c.l.b16 %v269
      %v456 = vunpack.c.l.b16 %v270
      %v457 = vunpack.c.l.b16 %v271
      %v458 = vunpack.c.l.b16 %v272
      %v459 = vunpack.c.l.b16 %v273
      %v460 = vunpack.c.l.b16 %v274
      %v461 = vunpack.c.l.b16 %v275
      %v462 = vunpack.c.l.b16 %v276
      %v463 = vunpack.c.l.b16 %v277
      %v464 = vunpack.c.l.b16 %v278
      %v465 = vunpack.c.l.b16 %v279
      %v466 = vunpack.c.l.b16 %v280
      %v467 = vunpack.c.l.b16 %v281
      %v468 = vunpack.c.l.b16 %v282
      %v469 = vunpack.c.l.b16 %v283
      %v470 = vunpack.c.l.b16 %v284
      %v471 = vunpack.c.l.b16 %v285
      %v472 = vunpack.c.l.b16 %v286
      %v473 = vunpack.c.l.b16 %v287
      %v474 = vunpack.c.l.b16 %v288
      %v475 = vunpack.c.l.b16 %v289
      %v476 = vunpack.c.l.b16 %v290
      %v477 = vunpack.c.l.b16 %v291
      %v478 = vunpack.c.l.b16 %v292
      %v479 = vunpack.c.l.b16 %v293
      %v480 = vunpack.c.l.b16 %v294
      %v481 = vunpack.c.l.b16 %v295
      %v482 = vunpack.c.l.b16 %v296
      %v483 = vunpack.c.l.b16 %v297
      %v484 = vunpack.c.l.b16 %v298
      %v485 = vunpack.c.l.b16 %v299
      %v486 = vunpack.c.l.b16 %v300
      %v487 = vunpack.c.l.b16 %v301
      %v488 = vunpack.c.l.b16 %v302
      %v489 = vunpack.c.l.b16 %v303
      %v490 = vunpack.c.l.b16 %v304
      %v491 = vunpack.c.l.b16 %v305
      %v492 = vunpack.c.l.b16 %v306
      %v493 = vunpack.c.l.b16 %v307
      %v494 = vunpack.c.l.b16 %v308
      %v495 = vunpack.c.l.b16 %v309
      %v496 = vpack.c.b16 %v417, %v416
      %v497 = vpack.c.b16 %v419, %v418
      %v498 = vpack.c.b16 %v421, %v420
      %v499 = vpack.c.b16 %v423, %v422
      %v500 = vpack.c.b16 %v425, %v424
      %v501 = vpack.c.b16 %v427, %v426
      %v502 = vpack.c.b16 %v429, %v428
      %v503 = vpack.c.b16 %v431, %v430
      %v504 = vpack.c.b16 %v433, %v432
      %v505 = vpack.c.b16 %v435, %v434
      %v506 = vpack.c.b16 %v437, %v436
      %v507 = vpack.c.b16 %v439, %v438
      %v508 = vpack.c.b16 %v441, %v440
      %v509 = vpack.c.b16 %v443, %v442
      %v510 = vpack.c.b16 %v445, %v444
      %v511 = vpack.c.b16 %v447, %v446
      %v512 = vpack.c.b16 %v449, %v448
      %v513 = vpack.c.b16 %v451, %v450
      %v514 = vpack.c.b16 %v453, %v452
      %v515 = vpack.c.b16 %v455, %v454
      %v516 = vpack.c.b16 %v457, %v456
      %v517 = vpack.c.b16 %v459, %v458
      %v518 = vpack.c.b16 %v461, %v460
      %v519 = vpack.c.b16 %v463, %v462
      %v520 = vpack.c.b16 %v465, %v464
      %v521 = vpack.c.b16 %v467, %v466
      %v522 = vpack.c.b16 %v469, %v468
      %v523 = vpack.c.b16 %v471, %v470
      %v524 = vpack.c.b16 %v473, %v472
      %v525 = vpack.c.b16 %v475, %v474
      %v526 = vpack.c.b16 %v477, %v476
      %v527 = vpack.c.b16 %v479, %v478
      %v528 = vpack.c.b16 %v481, %v480
      %v529 = vpack.c.b16 %v483, %v482
      %v530 = vpack.c.b16 %v485, %v484
      %v531 = vpack.c.b16 %v487, %v486
      %v532 = vpack.c.b16 %v489, %v488
      %v533 = vpack.c.b16 %v491, %v490
      %v534 = vpack.c.b16 %v493, %v492
      %v535 = vpack.c.b16 %v495, %v494
      %576 = vmatprep.subr.bf16.mxu0 0
      %577 = vmatpush1.bf16.msra.mxu0 %v496
      %578 = vmatprep.subr.bf16.mxu0 0
      %579 = vmatpush1.bf16.msra.mxu0 %v497
      %580 = vmatprep.subr.bf16.mxu0 0
      %581 = vmatpush1.bf16.msra.mxu0 %v498
      %582 = vmatprep.subr.bf16.mxu0 0
      %583 = vmatpush1.bf16.msra.mxu0 %v499
      %584 = vmatprep.subr.bf16.mxu0 0
      %585 = vmatpush1.bf16.msra.mxu0 %v500
      %586 = vmatprep.subr.bf16.mxu0 0
      %587 = vmatpush1.bf16.msra.mxu0 %v501
      %588 = vmatprep.subr.bf16.mxu0 0
      %589 = vmatpush1.bf16.msra.mxu0 %v502
      %590 = vmatprep.subr.bf16.mxu0 0
      %591 = vmatpush1.bf16.msra.mxu0 %v503
      %592 = vmatprep.subr.bf16.mxu0 0
      %593 = vmatpush1.bf16.msra.mxu0 %v504
      %594 = vmatprep.subr.bf16.mxu0 0
      %595 = vmatpush1.bf16.msra.mxu0 %v505
      %596 = vmatprep.subr.bf16.mxu0 0
      %597 = vmatpush1.bf16.msra.mxu0 %v506
      %598 = vmatprep.subr.bf16.mxu0 0
      %599 = vmatpush1.bf16.msra.mxu0 %v507
      %600 = vmatprep.subr.bf16.mxu0 0
      %601 = vmatpush1.bf16.msra.mxu0 %v508
      %602 = vmatprep.subr.bf16.mxu0 0
      %603 = vmatpush1.bf16.msra.mxu0 %v509
      %604 = vmatprep.subr.bf16.mxu0 0
      %605 = vmatpush1.bf16.msra.mxu0 %v510
      %606 = vmatprep.subr.bf16.mxu0 0
      %607 = vmatpush1.bf16.msra.mxu0 %v511
      %608 = vmatprep.mubr.bf16.mxu0 %v327
      %609 = vmatmul.mubr.bf16.gmra.mrb[0].mxu0 %v326
      %v610 = vpop.f32.mrb[0].mxu0
      %v611 = vadd.f32 0.0, %v610
      %v612 = vpop.f32.mrb[0].mxu0
      %v613 = vpop.f32.mrb[0].mxu0
      %v614 = vadd.f32 0.0, %v613
      %v615 = vpop.f32.mrb[0].mxu0
      %616 = vdwg.mxu0
      %617 = vmatprep.subr.bf16.mxu0 0
      %618 = vmatpush1.bf16.msra.mxu0 %v512
      %619 = vmatprep.subr.bf16.mxu0 0
      %620 = vmatpush1.bf16.msra.mxu0 %v513
      %621 = vmatprep.subr.bf16.mxu0 0
      %622 = vmatpush1.bf16.msra.mxu0 %v514
      %623 = vmatprep.subr.bf16.mxu0 0
      %624 = vmatpush1.bf16.msra.mxu0 %v515
      %625 = vmatprep.subr.bf16.mxu0 0
      %626 = vmatpush1.bf16.msra.mxu0 %v516
      %627 = vmatprep.subr.bf16.mxu0 0
      %628 = vmatpush1.bf16.msra.mxu0 %v517
      %629 = vmatprep.subr.bf16.mxu0 0
      %630 = vmatpush1.bf16.msra.mxu0 %v518
      %631 = vmatprep.subr.bf16.mxu0 0
      %632 = vmatpush1.bf16.msra.mxu0 %v519
      %633 = vmatprep.subr.bf16.mxu0 0
      %634 = vmatpush1.bf16.msra.mxu0 %v520
      %635 = vmatprep.subr.bf16.mxu0 0
      %636 = vmatpush1.bf16.msra.mxu0 %v521
      %637 = vmatprep.subr.bf16.mxu0 0
      %638 = vmatpush1.bf16.msra.mxu0 %v522
      %639 = vmatprep.subr.bf16.mxu0 0
      %640 = vmatpush1.bf16.msra.mxu0 %v523
      %641 = vmatprep.subr.bf16.mxu0 0
      %642 = vmatpush1.bf16.msra.mxu0 %v524
      %643 = vmatprep.subr.bf16.mxu0 0
      %644 = vmatpush1.bf16.msra.mxu0 %v525
      %645 = vmatprep.subr.bf16.mxu0 0
      %646 = vmatpush1.bf16.msra.mxu0 %v526
      %647 = vmatprep.subr.bf16.mxu0 0
      %648 = vmatpush1.bf16.msra.mxu0 %v527
      %649 = vmatprep.mubr.bf16.mxu0 %v329
      %650 = vmatmul.mubr.bf16.gmra.mrb[0].mxu0 %v328
      %v651 = vpop.f32.mrb[0].mxu0
      %v652 = vadd.f32 %v611, %v651
      %v653 = vpop.f32.mrb[0].mxu0
      %v654 = vpop.f32.mrb[0].mxu0
      %v655 = vadd.f32 %v614, %v654
      %v656 = vpop.f32.mrb[0].mxu0
      %657 = vdwg.mxu0
      %658 = vmatprep.subr.bf16.mxu0 0
      %659 = vmatpush1.bf16.msra.mxu0 %v528
      %660 = vmatprep.subr.bf16.mxu0 0
      %661 = vmatpush1.bf16.msra.mxu0 %v529
      %662 = vmatprep.subr.bf16.mxu0 0
      %663 = vmatpush1.bf16.msra.mxu0 %v530
      %664 = vmatprep.subr.bf16.mxu0 0
      %665 = vmatpush1.bf16.msra.mxu0 %v531
      %666 = vmatprep.subr.bf16.mxu0 0
      %667 = vmatpush1.bf16.msra.mxu0 %v532
      %668 = vmatprep.subr.bf16.mxu0 0
      %669 = vmatpush1.bf16.msra.mxu0 %v533
      %670 = vmatprep.subr.bf16.mxu0 0
      %671 = vmatpush1.bf16.msra.mxu0 %v534
      %672 = vmatprep.subr.bf16.mxu0 0
      %673 = vmatpush1.bf16.msra.mxu0 %v535
      %674 = vmatprep.subr.bf16.mxu0 0
      %675 = vmatpush1.bf16.msra.mxu0 0
      %676 = vmatprep.subr.bf16.mxu0 0
      %677 = vmatpush1.bf16.msra.mxu0 0
      %678 = vmatprep.subr.bf16.mxu0 0
      %679 = vmatpush1.bf16.msra.mxu0 0
      %680 = vmatprep.subr.bf16.mxu0 0
      %681 = vmatpush1.bf16.msra.mxu0 0
      %682 = vmatprep.subr.bf16.mxu0 0
      %683 = vmatpush1.bf16.msra.mxu0 0
      %684 = vmatprep.subr.bf16.mxu0 0
      %685 = vmatpush1.bf16.msra.mxu0 0
      %686 = vmatprep.subr.bf16.mxu0 0
      %687 = vmatpush1.bf16.msra.mxu0 0
      %688 = vmatprep.subr.bf16.mxu0 0
      %689 = vmatpush1.bf16.msra.mxu0 0
      %690 = vmatprep.mubr.bf16.mxu0 0
      %691 = vmatmul.mubr.bf16.gmra.mrb[0].mxu0 %v330
      %v692 = vpop.f32.mrb[0].mxu0
      %v693 = vadd.f32 %v652, %v692
      %v694 = vpop.f32.mrb[0].mxu0
      %v695 = vpop.f32.mrb[0].mxu0
      %v696 = vadd.f32 %v655, %v695
      %v697 = vpop.f32.mrb[0].mxu0
      %698 = vdwg.mxu0
      // Predicated region
      $region41: #{discriminator_forward.8} parent=35 // pred_check
        %p699 = pneg %p217
      $region42: #{discriminator_forward.8} parent=35 // pred_check_branch
        %701 = sbr.rel (%p699) target = $region44
      $region43: #{discriminator_forward.8} parent=35 // pred_region
        %v702 = vadd.f32 %v693, %v696
        %v703 = vrot.slane %v702, 4
        %v704 = vadd.f32 %v702, %v703
        %v705 = vrot.slane %v704, 2
        %v706 = vadd.f32 %v704, %v705
        %v707 = vrot.slane %v706, 1
        %v708 = vadd.f32 %v706, %v707
        %v709 = vmul.f32 %v693, %v693
        %v710 = vmul.f32 %v696, %v696
        %v711 = vadd.f32 %v709, %v710
        %v712 = vrot.slane %v711, 4
        %v713 = vadd.f32 %v711, %v712
        %v714 = vrot.slane %v713, 2
        %v715 = vadd.f32 %v713, %v714
        %v716 = vrot.slane %v715, 1
        %v717 = vadd.f32 %v715, %v716
        %v718 = vld [vmem:[#allocation2] sm:$0x3]
        %vm719 = vcmask 1040384
        %v720 = vsel %vm719, %v708, %v717
        %v721 = vadd.f32 %v718, %v720
        %722 = vst [vmem:[#allocation2] sm:$0x3] %v721
      $region44: #{discriminator_forward.8} parent=35 // pred_fallthru
        _
      %p723 = scmp.eq.s32.totalorder %s19, 1
      // Predicated region
      $region45: #{discriminator_forward.8} parent=35 // pred_check
        %p724 = pneg %p723
      $region46: #{discriminator_forward.8} parent=35 // pred_check_branch
        %726 = sbr.rel (%p724) target = $region48
      $region47: #{discriminator_forward.8} parent=35 // pred_region
        %v727 = vld [vmem:[#allocation2] sm:$0x3]
        %v728 = vmul.f32 %v727, 0.083333336
        %v729 = vmul.f32 %v728, %v728
        %v731 = vrot.slane %v729, 7
        %v733 = vsub.f32 %v728, %v731
        %v734 = vmax.f32 %v733, 0.0
        %v735 = vadd.f32 %v734, 1e-05
        %v736 = vrsqrt.pop %v735
        %v737 = vld [vmem:[%s2] sm:$0x1]
        %v740 = vunpack.c.l.s4 1966171168
        %v741 = vunpack.c.0.s8 %v740
        %v742 = vlaneseq
        %v743 = vshrl.u32 %v742, 7
        %v744 = vsub.s32 %v741, %v743
        %v745 = vrot.slane %v736, %v744
        %v746 = vcombine.high %v745, %v745
        %v748 = vunpack.c.l.s4 1966171168
        %v749 = vunpack.c.0.s8 %v748
        %v750 = vlaneseq
        %v751 = vshrl.u32 %v750, 7
        %v752 = vsub.s32 %v749, %v751
        %v753 = vrot.slane %v746, %v752
        %v755 = vmul.f32 %v737, %v753
        %v756 = vld [vmem:[%s3] sm:$0x1]
        %v757 = vmul.f32 %v728, %v755
        %v758 = vsub.f32 %v756, %v757
        %v760 = vlaneseq
        %v761 = vshrl.u32 %v760, 7
        %v762 = vsub.s32 0, %v761
        %v763 = vrot.slane %v755, %v762
        %v765 = vmul.f32 %v693, %v763
        %v766 = vmul.f32 %v696, %v763
        %v768 = vlaneseq
        %v769 = vshrl.u32 %v768, 7
        %v770 = vsub.s32 0, %v769
        %v771 = vrot.slane %v758, %v770
        %v773 = vadd.f32 %v765, %v771
        %v774 = vadd.f32 %v766, %v771
        %vm775 = vcmp.ge.f32.partialorder %v773, 0.0
        %vm776 = vcmp.ge.f32.partialorder %v774, 0.0
        %v777 = vmul.f32 %v773, 0.2
        %v778 = vmul.f32 %v774, 0.2
        %v779 = vsel %vm775, %v773, %v777
        %v780 = vsel %vm776, %v774, %v778
        %v781 = vpack.c.bf16 %v780, %v779
        %v783 = vunpack.c.l.b16 %v781
        %v784 = vunpack.c.h.b16 %v781
        %v785 = vpack.c.b16 %v783, %v783
        %v786 = vpack.c.b16 %v784, %v784
        %789 = vst [vmem:[%s214] sm:$0xf] %v785
        %790 = vst [vmem:[%s214 + $0x4] sm:$0xf] %v786
      $region48: #{discriminator_forward.8} parent=35 // pred_fallthru
        _
      %s791 = smul.u32 2, %s20
      %p792 = scmp.lt.s32.totalorder %s791, 1
      %s793 = scalar_select %p792, %s791, 1
      %s794 = smul.addr %s793, 4
      %s795 = scalar_lea.vmem %s4, %s794
      // Predicated region
      $region49: #{discriminator_forward.8} parent=35 // pred_check
        %p796 = pneg %p134
      $region50: #{discriminator_forward.8} parent=35 // pred_check_branch
        %798 = sbr.rel (%p796) target = $region52
      $region51: #{discriminator_forward.8} parent=35 // pred_region
        %s799 = smul.u32 2, %s20
      $region52: #{discriminator_forward.8} parent=35 // pred_fallthru
        _
      // Predicated region
      $region53: #{discriminator_forward.8} parent=35 // pred_check
        %p800 = pneg %p134
      $region54: #{discriminator_forward.8} parent=35 // pred_check_branch
        %802 = sbr.rel (%p800) target = $region56
      $region55: #{discriminator_forward.8} parent=35 // pred_region
        %s803 = smul.u32 2, %s20
        %p804 = scmp.lt.s32.totalorder %s803, 1
        %s805 = scalar_select %p804, %s803, 1
        %s806 = smul.addr %s805, 4
        %s807 = scalar_lea.vmem %s4, %s806
      $region56: #{discriminator_forward.8} parent=35 // pred_fallthru
        _
    $region36: #{discriminator_forward.8} parent=5 // pred_fallthru
      _
    %p808 = scmp.le.s32.totalorder 2, %s10
    // Predicated region
    $region57: #{discriminator_forward.8} parent=5 // pred_check
      %p809 = pneg %p808
    $region58: #{discriminator_forward.8} parent=5 // pred_check_branch
      %811 = sbr.rel (%p809) target = $region60
    $region59: #{discriminator_forward.8} parent=5 // pred_region
      %s812 = ssub.s32 %s10, 2
    $region60: #{discriminator_forward.8} parent=5 // pred_fallthru
      _
  $region6: #{discriminator_forward.8} parent=0 // loop_footer
    %s14 = sadd.s32 1, %s10
  $region7: #{discriminator_forward.8} parent=0 // loop_footer_branch
    %9 = sbr.rel target = $region3
  $region8: #{discriminator_forward.8} parent=0 // loop_exit
    _

// kernel: discriminator_forward.9
$region0: #{discriminator_forward.9}
  #allocation0 [shape = 'u32[]', space=smem, size = 0x4, offset = 0x4, fixed_abs, tag = 'smem constant byte address 0x4 - core index']
  #allocation1 [shape = 'u32[144,128]{1,0:T(1,128)}', space=vmem, size = 0x12000, scoped, tag = 'internal scratch']
  %s0 = inlined_call_operand.vmem [shape: bf16[8,1280], index: 0, kind: input, shape index: {}]
  %s1 = inlined_call_operand.vmem [shape: bf16[1280,128], index: 1, kind: input, shape index: {}]
  %s2 = inlined_call_operand.vmem [shape: f32[1,128], index: 2, kind: input, shape index: {}]
  %s3 = inlined_call_operand.vmem [shape: f32[8,128], index: 3, kind: output, shape index: {}]
  %s4 = sld [smem:[#allocation0]]
  $region22: #{discriminator_forward.9} parent=0
    _
  %s6 = ssub.s32 1, %s4
  %s7 = scalar_select 0, %s6, %s4
  // Predicated region
  $region2: #{discriminator_forward.9} parent=0 // pred_check
    _
  $region3: #{discriminator_forward.9} parent=0 // pred_check_branch
    %9 = sbr.rel (0) target = $region5
  $region4: #{discriminator_forward.9} parent=0 // pred_region
    _
  $region5: #{discriminator_forward.9} parent=0 // pred_fallthru
    _
  // Predicated region
  $region6: #{discriminator_forward.9} parent=0 // pred_check
    _
  $region7: #{discriminator_forward.9} parent=0 // pred_check_branch
    %11 = sbr.rel (0) target = $region9
  $region8: #{discriminator_forward.9} parent=0 // pred_region
    _
  $region9: #{discriminator_forward.9} parent=0 // pred_fallthru
    _
  // Predicated region
  $region10: #{discriminator_forward.9} parent=0 // pred_check
    _
  $region11: #{discriminator_forward.9} parent=0 // pred_check_branch
    %13 = sbr.rel (0) target = $region13
  $region12: #{discriminator_forward.9} parent=0 // pred_region
    _
  $region13: #{discriminator_forward.9} parent=0 // pred_fallthru
    _
  %v15 = vld [vmem:[%s0] sm:$0xff]
  %v16 = vld [vmem:[%s0 + $0x8] sm:$0xff]
  %v17 = vld [vmem:[%s0 + $0x10] sm:$0xff]
  %v18 = vld [vmem:[%s0 + $0x18] sm:$0xff]
  %v19 = vld [vmem:[%s0 + $0x20] sm:$0xff]
  %v20 = vld [vmem:[%s1] sm:$0xf]
  %v21 = vld [vmem:[%s1 + $0x4] sm:$0xf]
  %v22 = vld [vmem:[%s1 + $0x8] sm:$0xf]
  %v23 = vld [vmem:[%s1 + $0xc] sm:$0xf]
  %v24 = vld [vmem:[%s1 + $0x10] sm:$0xf]
  %v25 = vld [vmem:[%s1 + $0x14] sm:$0xf]
  %v26 = vld [vmem:[%s1 + $0x18] sm:$0xf]
  %v27 = vld [vmem:[%s1 + $0x1c] sm:$0xf]
  %v28 = vld [vmem:[%s1 + $0x20] sm:$0xf]
  %v29 = vld [vmem:[%s1 + $0x24] sm:$0xf]
  %v30 = vld [vmem:[%s1 + $0x28] sm:$0xf]
  %v31 = vld [vmem:[%s1 + $0x2c] sm:$0xf]
  %v32 = vld [vmem:[%s1 + $0x30] sm:$0xf]
  %v33 = vld [vmem:[%s1 + $0x34] sm:$0xf]
  %v34 = vld [vmem:[%s1 + $0x38] sm:$0xf]
  %v35 = vld [vmem:[%s1 + $0x3c] sm:$0xf]
  %v36 = vld [vmem:[%s1 + $0x40] sm:$0xf]
  %v37 = vld [vmem:[%s1 + $0x44] sm:$0xf]
  %v38 = vld [vmem:[%s1 + $0x48] sm:$0xf]
  %v39 = vld [vmem:[%s1 + $0x4c] sm:$0xf]
  %v40 = vld [vmem:[%s1 + $0x50] sm:$0xf]
  %v41 = vld [vmem:[%s1 + $0x54] sm:$0xf]
  %v42 = vld [vmem:[%s1 + $0x58] sm:$0xf]
  %v43 = vld [vmem:[%s1 + $0x5c] sm:$0xf]
  %v44 = vld [vmem:[%s1 + $0x60] sm:$0xf]
  %v45 = vld [vmem:[%s1 + $0x64] sm:$0xf]
  %v46 = vld [vmem:[%s1 + $0x68] sm:$0xf]
  %v47 = vld [vmem:[%s1 + $0x6c] sm:$0xf]
  %v48 = vld [vmem:[%s1 + $0x70] sm:$0xf]
  %v49 = vld [vmem:[%s1 + $0x74] sm:$0xf]
  %v50 = vld [vmem:[%s1 + $0x78] sm:$0xf]
  %v51 = vld [vmem:[%s1 + $0x7c] sm:$0xf]
  %v52 = vld [vmem:[%s1 + $0x80] sm:$0xf]
  %v53 = vld [vmem:[%s1 + $0x84] sm:$0xf]
  %v54 = vld [vmem:[%s1 + $0x88] sm:$0xf]
  %v55 = vld [vmem:[%s1 + $0x8c] sm:$0xf]
  %v56 = vld [vmem:[%s1 + $0x90] sm:$0xf]
  %v57 = vld [vmem:[%s1 + $0x94] sm:$0xf]
  %v58 = vld [vmem:[%s1 + $0x98] sm:$0xf]
  %v59 = vld [vmem:[%s1 + $0x9c] sm:$0xf]
  %v60 = vld [vmem:[%s1 + $0xa0] sm:$0xf]
  %v61 = vld [vmem:[%s1 + $0xa4] sm:$0xf]
  %v62 = vld [vmem:[%s1 + $0xa8] sm:$0xf]
  %v63 = vld [vmem:[%s1 + $0xac] sm:$0xf]
  %v64 = vld [vmem:[%s1 + $0xb0] sm:$0xf]
  %v65 = vld [vmem:[%s1 + $0xb4] sm:$0xf]
  %v66 = vld [vmem:[%s1 + $0xb8] sm:$0xf]
  %v67 = vld [vmem:[%s1 + $0xbc] sm:$0xf]
  %v68 = vld [vmem:[%s1 + $0xc0] sm:$0xf]
  %v69 = vld [vmem:[%s1 + $0xc4] sm:$0xf]
  %v70 = vld [vmem:[%s1 + $0xc8] sm:$0xf]
  %v71 = vld [vmem:[%s1 + $0xcc] sm:$0xf]
  %v72 = vld [vmem:[%s1 + $0xd0] sm:$0xf]
  %v73 = vld [vmem:[%s1 + $0xd4] sm:$0xf]
  %v74 = vld [vmem:[%s1 + $0xd8] sm:$0xf]
  %v75 = vld [vmem:[%s1 + $0xdc] sm:$0xf]
  %v76 = vld [vmem:[%s1 + $0xe0] sm:$0xf]
  %v77 = vld [vmem:[%s1 + $0xe4] sm:$0xf]
  %v78 = vld [vmem:[%s1 + $0xe8] sm:$0xf]
  %v79 = vld [vmem:[%s1 + $0xec] sm:$0xf]
  %v80 = vld [vmem:[%s1 + $0xf0] sm:$0xf]
  %v81 = vld [vmem:[%s1 + $0xf4] sm:$0xf]
  %v82 = vld [vmem:[%s1 + $0xf8] sm:$0xf]
  %v83 = vld [vmem:[%s1 + $0xfc] sm:$0xf]
  %v84 = vld [vmem:[%s1 + $0x100] sm:$0xf]
  %v85 = vld [vmem:[%s1 + $0x104] sm:$0xf]
  %v86 = vld [vmem:[%s1 + $0x108] sm:$0xf]
  %v87 = vld [vmem:[%s1 + $0x10c] sm:$0xf]
  %v88 = vld [vmem:[%s1 + $0x110] sm:$0xf]
  %v89 = vld [vmem:[%s1 + $0x114] sm:$0xf]
  %v90 = vld [vmem:[%s1 + $0x118] sm:$0xf]
  %v91 = vld [vmem:[%s1 + $0x11c] sm:$0xf]
  %v92 = vld [vmem:[%s1 + $0x120] sm:$0xf]
  %v93 = vld [vmem:[%s1 + $0x124] sm:$0xf]
  %v94 = vld [vmem:[%s1 + $0x128] sm:$0xf]
  %v95 = vld [vmem:[%s1 + $0x12c] sm:$0xf]
  %v96 = vld [vmem:[%s1 + $0x130] sm:$0xf]
  %v97 = vld [vmem:[%s1 + $0x134] sm:$0xf]
  %v98 = vld [vmem:[%s1 + $0x138] sm:$0xf]
  %v99 = vld [vmem:[%s1 + $0x13c] sm:$0xf]
  %v100 = vld [vmem:[%s1 + $0x140] sm:$0xf]
  %v101 = vld [vmem:[%s1 + $0x144] sm:$0xf]
  %v102 = vld [vmem:[%s1 + $0x148] sm:$0xf]
  %v103 = vld [vmem:[%s1 + $0x14c] sm:$0xf]
  %v104 = vld [vmem:[%s1 + $0x150] sm:$0xf]
  %v105 = vld [vmem:[%s1 + $0x154] sm:$0xf]
  %v106 = vld [vmem:[%s1 + $0x158] sm:$0xf]
  %v107 = vld [vmem:[%s1 + $0x15c] sm:$0xf]
  %v108 = vld [vmem:[%s1 + $0x160] sm:$0xf]
  %v109 = vld [vmem:[%s1 + $0x164] sm:$0xf]
  %v110 = vld [vmem:[%s1 + $0x168] sm:$0xf]
  %v111 = vld [vmem:[%s1 + $0x16c] sm:$0xf]
  %v112 = vld [vmem:[%s1 + $0x170] sm:$0xf]
  %v113 = vld [vmem:[%s1 + $0x174] sm:$0xf]
  %v114 = vld [vmem:[%s1 + $0x178] sm:$0xf]
  %v115 = vld [vmem:[%s1 + $0x17c] sm:$0xf]
  %v116 = vld [vmem:[%s1 + $0x180] sm:$0xf]
  %v117 = vld [vmem:[%s1 + $0x184] sm:$0xf]
  %v118 = vld [vmem:[%s1 + $0x188] sm:$0xf]
  %v119 = vld [vmem:[%s1 + $0x18c] sm:$0xf]
  %v120 = vld [vmem:[%s1 + $0x190] sm:$0xf]
  %v121 = vld [vmem:[%s1 + $0x194] sm:$0xf]
  %v122 = vld [vmem:[%s1 + $0x198] sm:$0xf]
  %v123 = vld [vmem:[%s1 + $0x19c] sm:$0xf]
  %v124 = vld [vmem:[%s1 + $0x1a0] sm:$0xf]
  %v125 = vld [vmem:[%s1 + $0x1a4] sm:$0xf]
  %v126 = vld [vmem:[%s1 + $0x1a8] sm:$0xf]
  %v127 = vld [vmem:[%s1 + $0x1ac] sm:$0xf]
  %v128 = vld [vmem:[%s1 + $0x1b0] sm:$0xf]
  %v129 = vld [vmem:[%s1 + $0x1b4] sm:$0xf]
  %v130 = vld [vmem:[%s1 + $0x1b8] sm:$0xf]
  %v131 = vld [vmem:[%s1 + $0x1bc] sm:$0xf]
  %v132 = vld [vmem:[%s1 + $0x1c0] sm:$0xf]
  %v133 = vld [vmem:[%s1 + $0x1c4] sm:$0xf]
  %v134 = vld [vmem:[%s1 + $0x1c8] sm:$0xf]
  %v135 = vld [vmem:[%s1 + $0x1cc] sm:$0xf]
  %v136 = vld [vmem:[%s1 + $0x1d0] sm:$0xf]
  %v137 = vld [vmem:[%s1 + $0x1d4] sm:$0xf]
  %v138 = vld [vmem:[%s1 + $0x1d8] sm:$0xf]
  %v139 = vld [vmem:[%s1 + $0x1dc] sm:$0xf]
  %v140 = vld [vmem:[%s1 + $0x1e0] sm:$0xf]
  %v141 = vld [vmem:[%s1 + $0x1e4] sm:$0xf]
  %v142 = vld [vmem:[%s1 + $0x1e8] sm:$0xf]
  %v143 = vld [vmem:[%s1 + $0x1ec] sm:$0xf]
  %v144 = vld [vmem:[%s1 + $0x1f0] sm:$0xf]
  %v145 = vld [vmem:[%s1 + $0x1f4] sm:$0xf]
  %v146 = vld [vmem:[%s1 + $0x1f8] sm:$0xf]
  %v147 = vld [vmem:[%s1 + $0x1fc] sm:$0xf]
  %v148 = vld [vmem:[%s1 + $0x200] sm:$0xf]
  %v149 = vld [vmem:[%s1 + $0x204] sm:$0xf]
  %v150 = vld [vmem:[%s1 + $0x208] sm:$0xf]
  %v151 = vld [vmem:[%s1 + $0x20c] sm:$0xf]
  %v152 = vld [vmem:[%s1 + $0x210] sm:$0xf]
  %v153 = vld [vmem:[%s1 + $0x214] sm:$0xf]
  %v154 = vld [vmem:[%s1 + $0x218] sm:$0xf]
  %v155 = vld [vmem:[%s1 + $0x21c] sm:$0xf]
  %v156 = vld [vmem:[%s1 + $0x220] sm:$0xf]
  %v157 = vld [vmem:[%s1 + $0x224] sm:$0xf]
  %v158 = vld [vmem:[%s1 + $0x228] sm:$0xf]
  %v159 = vld [vmem:[%s1 + $0x22c] sm:$0xf]
  %v160 = vld [vmem:[%s1 + $0x230] sm:$0xf]
  %v161 = vld [vmem:[%s1 + $0x234] sm:$0xf]
  %v162 = vld [vmem:[%s1 + $0x238] sm:$0xf]
  %v163 = vld [vmem:[%s1 + $0x23c] sm:$0xf]
  %v164 = vld [vmem:[%s1 + $0x240] sm:$0xf]
  %v165 = vld [vmem:[%s1 + $0x244] sm:$0xf]
  %v166 = vld [vmem:[%s1 + $0x248] sm:$0xf]
  %v167 = vld [vmem:[%s1 + $0x24c] sm:$0xf]
  %v168 = vld [vmem:[%s1 + $0x250] sm:$0xf]
  %v169 = vld [vmem:[%s1 + $0x254] sm:$0xf]
  %v170 = vld [vmem:[%s1 + $0x258] sm:$0xf]
  %v171 = vld [vmem:[%s1 + $0x25c] sm:$0xf]
  %v172 = vld [vmem:[%s1 + $0x260] sm:$0xf]
  %v173 = vld [vmem:[%s1 + $0x264] sm:$0xf]
  %v174 = vld [vmem:[%s1 + $0x268] sm:$0xf]
  %v175 = vld [vmem:[%s1 + $0x26c] sm:$0xf]
  %v176 = vld [vmem:[%s1 + $0x270] sm:$0xf]
  %v177 = vld [vmem:[%s1 + $0x274] sm:$0xf]
  %v178 = vld [vmem:[%s1 + $0x278] sm:$0xf]
  %v179 = vld [vmem:[%s1 + $0x27c] sm:$0xf]
  %v180 = vld [vmem:[%s2] sm:$0x1]
  %v182 = vlaneseq
  %v183 = vshrl.u32 %v182, 7
  %v184 = vsub.s32 0, %v183
  %v185 = vrot.slane %v180, %v184
  %v192 = vunpack.c.l.b16 %v15
  %v193 = vunpack.c.h.b16 %v15
  %v194 = vunpack.c.l.b16 %v16
  %v195 = vunpack.c.h.b16 %v16
  %v196 = vunpack.c.l.b16 %v17
  %v197 = vunpack.c.h.b16 %v17
  %v198 = vunpack.c.l.b16 %v18
  %v199 = vunpack.c.h.b16 %v18
  %v200 = vunpack.c.l.b16 %v19
  %v201 = vunpack.c.h.b16 %v19
  %v202 = vpack.c.b16 %v192, %v192
  %v203 = vpack.c.b16 %v193, %v193
  %v204 = vpack.c.b16 %v194, %v194
  %v205 = vpack.c.b16 %v195, %v195
  %v206 = vpack.c.b16 %v196, %v196
  %v207 = vpack.c.b16 %v197, %v197
  %v208 = vpack.c.b16 %v198, %v198
  %v209 = vpack.c.b16 %v199, %v199
  %v210 = vpack.c.b16 %v200, %v200
  %v211 = vpack.c.b16 %v201, %v201
  %v382 = vunpack.c.l.b16 %v20
  %v383 = vunpack.c.l.b16 %v21
  %v384 = vunpack.c.l.b16 %v22
  %v385 = vunpack.c.l.b16 %v23
  %v386 = vunpack.c.l.b16 %v24
  %v387 = vunpack.c.l.b16 %v25
  %v388 = vunpack.c.l.b16 %v26
  %v389 = vunpack.c.l.b16 %v27
  %v390 = vunpack.c.l.b16 %v28
  %v391 = vunpack.c.l.b16 %v29
  %v392 = vunpack.c.l.b16 %v30
  %v393 = vunpack.c.l.b16 %v31
  %v394 = vunpack.c.l.b16 %v32
  %v395 = vunpack.c.l.b16 %v33
  %v396 = vunpack.c.l.b16 %v34
  %v397 = vunpack.c.l.b16 %v35
  %v398 = vunpack.c.l.b16 %v36
  %v399 = vunpack.c.l.b16 %v37
  %v400 = vunpack.c.l.b16 %v38
  %v401 = vunpack.c.l.b16 %v39
  %v402 = vunpack.c.l.b16 %v40
  %v403 = vunpack.c.l.b16 %v41
  %v404 = vunpack.c.l.b16 %v42
  %v405 = vunpack.c.l.b16 %v43
  %v406 = vunpack.c.l.b16 %v44
  %v407 = vunpack.c.l.b16 %v45
  %v408 = vunpack.c.l.b16 %v46
  %v409 = vunpack.c.l.b16 %v47
  %v410 = vunpack.c.l.b16 %v48
  %v411 = vunpack.c.l.b16 %v49
  %v412 = vunpack.c.l.b16 %v50
  %v413 = vunpack.c.l.b16 %v51
  %v414 = vunpack.c.l.b16 %v52
  %v415 = vunpack.c.l.b16 %v53
  %v416 = vunpack.c.l.b16 %v54
  %v417 = vunpack.c.l.b16 %v55
  %v418 = vunpack.c.l.b16 %v56
  %v419 = vunpack.c.l.b16 %v57
  %v420 = vunpack.c.l.b16 %v58
  %v421 = vunpack.c.l.b16 %v59
  %v422 = vunpack.c.l.b16 %v60
  %v423 = vunpack.c.l.b16 %v61
  %v424 = vunpack.c.l.b16 %v62
  %v425 = vunpack.c.l.b16 %v63
  %v426 = vunpack.c.l.b16 %v64
  %v427 = vunpack.c.l.b16 %v65
  %v428 = vunpack.c.l.b16 %v66
  %v429 = vunpack.c.l.b16 %v67
  %v430 = vunpack.c.l.b16 %v68
  %v431 = vunpack.c.l.b16 %v69
  %v432 = vunpack.c.l.b16 %v70
  %v433 = vunpack.c.l.b16 %v71
  %v434 = vunpack.c.l.b16 %v72
  %v435 = vunpack.c.l.b16 %v73
  %v436 = vunpack.c.l.b16 %v74
  %v437 = vunpack.c.l.b16 %v75
  %v438 = vunpack.c.l.b16 %v76
  %v439 = vunpack.c.l.b16 %v77
  %v440 = vunpack.c.l.b16 %v78
  %v441 = vunpack.c.l.b16 %v79
  %v442 = vunpack.c.l.b16 %v80
  %v443 = vunpack.c.l.b16 %v81
  %v444 = vunpack.c.l.b16 %v82
  %v445 = vunpack.c.l.b16 %v83
  %v446 = vunpack.c.l.b16 %v84
  %v447 = vunpack.c.l.b16 %v85
  %v448 = vunpack.c.l.b16 %v86
  %v449 = vunpack.c.l.b16 %v87
  %v450 = vunpack.c.l.b16 %v88
  %v451 = vunpack.c.l.b16 %v89
  %v452 = vunpack.c.l.b16 %v90
  %v453 = vunpack.c.l.b16 %v91
  %v454 = vunpack.c.l.b16 %v92
  %v455 = vunpack.c.l.b16 %v93
  %v456 = vunpack.c.l.b16 %v94
  %v457 = vunpack.c.l.b16 %v95
  %v458 = vunpack.c.l.b16 %v96
  %v459 = vunpack.c.l.b16 %v97
  %v460 = vunpack.c.l.b16 %v98
  %v461 = vunpack.c.l.b16 %v99
  %v462 = vunpack.c.l.b16 %v100
  %v463 = vunpack.c.l.b16 %v101
  %v464 = vunpack.c.l.b16 %v102
  %v465 = vunpack.c.l.b16 %v103
  %v466 = vunpack.c.l.b16 %v104
  %v467 = vunpack.c.l.b16 %v105
  %v468 = vunpack.c.l.b16 %v106
  %v469 = vunpack.c.l.b16 %v107
  %v470 = vunpack.c.l.b16 %v108
  %v471 = vunpack.c.l.b16 %v109
  %v472 = vunpack.c.l.b16 %v110
  %v473 = vunpack.c.l.b16 %v111
  %v474 = vunpack.c.l.b16 %v112
  %v475 = vunpack.c.l.b16 %v113
  %v476 = vunpack.c.l.b16 %v114
  %v477 = vunpack.c.l.b16 %v115
  %v478 = vunpack.c.l.b16 %v116
  %v479 = vunpack.c.l.b16 %v117
  %v480 = vunpack.c.l.b16 %v118
  %v481 = vunpack.c.l.b16 %v119
  %v482 = vunpack.c.l.b16 %v120
  %v483 = vunpack.c.l.b16 %v121
  %v484 = vunpack.c.l.b16 %v122
  %v485 = vunpack.c.l.b16 %v123
  %v486 = vunpack.c.l.b16 %v124
  %v487 = vunpack.c.l.b16 %v125
  %v488 = vunpack.c.l.b16 %v126
  %v489 = vunpack.c.l.b16 %v127
  %v490 = vunpack.c.l.b16 %v128
  %v491 = vunpack.c.l.b16 %v129
  %v492 = vunpack.c.l.b16 %v130
  %v493 = vunpack.c.l.b16 %v131
  %v494 = vunpack.c.l.b16 %v132
  %v495 = vunpack.c.l.b16 %v133
  %v496 = vunpack.c.l.b16 %v134
  %v497 = vunpack.c.l.b16 %v135
  %v498 = vunpack.c.l.b16 %v136
  %v499 = vunpack.c.l.b16 %v137
  %v500 = vunpack.c.l.b16 %v138
  %v501 = vunpack.c.l.b16 %v139
  %v502 = vunpack.c.l.b16 %v140
  %v503 = vunpack.c.l.b16 %v141
  %v504 = vunpack.c.l.b16 %v142
  %v505 = vunpack.c.l.b16 %v143
  %v506 = vunpack.c.l.b16 %v144
  %v507 = vunpack.c.l.b16 %v145
  %v508 = vunpack.c.l.b16 %v146
  %v509 = vunpack.c.l.b16 %v147
  %v510 = vunpack.c.l.b16 %v148
  %v511 = vunpack.c.l.b16 %v149
  %v512 = vunpack.c.l.b16 %v150
  %v513 = vunpack.c.l.b16 %v151
  %v514 = vunpack.c.l.b16 %v152
  %v515 = vunpack.c.l.b16 %v153
  %v516 = vunpack.c.l.b16 %v154
  %v517 = vunpack.c.l.b16 %v155
  %v518 = vunpack.c.l.b16 %v156
  %v519 = vunpack.c.l.b16 %v157
  %v520 = vunpack.c.l.b16 %v158
  %v521 = vunpack.c.l.b16 %v159
  %v522 = vunpack.c.l.b16 %v160
  %v523 = vunpack.c.l.b16 %v161
  %v524 = vunpack.c.l.b16 %v162
  %v525 = vunpack.c.l.b16 %v163
  %v526 = vunpack.c.l.b16 %v164
  %v527 = vunpack.c.l.b16 %v165
  %v528 = vunpack.c.l.b16 %v166
  %v529 = vunpack.c.l.b16 %v167
  %v530 = vunpack.c.l.b16 %v168
  %v531 = vunpack.c.l.b16 %v169
  %v532 = vunpack.c.l.b16 %v170
  %v533 = vunpack.c.l.b16 %v171
  %v534 = vunpack.c.l.b16 %v172
  %v535 = vunpack.c.l.b16 %v173
  %v536 = vunpack.c.l.b16 %v174
  %v537 = vunpack.c.l.b16 %v175
  %v538 = vunpack.c.l.b16 %v176
  %v539 = vunpack.c.l.b16 %v177
  %v540 = vunpack.c.l.b16 %v178
  %v541 = vunpack.c.l.b16 %v179
  %v542 = vpack.c.b16 %v383, %v382
  %v543 = vpack.c.b16 %v385, %v384
  %v544 = vpack.c.b16 %v387, %v386
  %v545 = vpack.c.b16 %v389, %v388
  %v546 = vpack.c.b16 %v391, %v390
  %v547 = vpack.c.b16 %v393, %v392
  %v548 = vpack.c.b16 %v395, %v394
  %v549 = vpack.c.b16 %v397, %v396
  %v550 = vpack.c.b16 %v399, %v398
  %v551 = vpack.c.b16 %v401, %v400
  %v552 = vpack.c.b16 %v403, %v402
  %v553 = vpack.c.b16 %v405, %v404
  %v554 = vpack.c.b16 %v407, %v406
  %v555 = vpack.c.b16 %v409, %v408
  %v556 = vpack.c.b16 %v411, %v410
  %v557 = vpack.c.b16 %v413, %v412
  %v558 = vpack.c.b16 %v415, %v414
  %v559 = vpack.c.b16 %v417, %v416
  %v560 = vpack.c.b16 %v419, %v418
  %v561 = vpack.c.b16 %v421, %v420
  %v562 = vpack.c.b16 %v423, %v422
  %v563 = vpack.c.b16 %v425, %v424
  %v564 = vpack.c.b16 %v427, %v426
  %v565 = vpack.c.b16 %v429, %v428
  %v566 = vpack.c.b16 %v431, %v430
  %v567 = vpack.c.b16 %v433, %v432
  %v568 = vpack.c.b16 %v435, %v434
  %v569 = vpack.c.b16 %v437, %v436
  %v570 = vpack.c.b16 %v439, %v438
  %v571 = vpack.c.b16 %v441, %v440
  %v572 = vpack.c.b16 %v443, %v442
  %v573 = vpack.c.b16 %v445, %v444
  %v574 = vpack.c.b16 %v447, %v446
  %v575 = vpack.c.b16 %v449, %v448
  %v576 = vpack.c.b16 %v451, %v450
  %v577 = vpack.c.b16 %v453, %v452
  %v578 = vpack.c.b16 %v455, %v454
  %v579 = vpack.c.b16 %v457, %v456
  %v580 = vpack.c.b16 %v459, %v458
  %v581 = vpack.c.b16 %v461, %v460
  %v582 = vpack.c.b16 %v463, %v462
  %v583 = vpack.c.b16 %v465, %v464
  %v584 = vpack.c.b16 %v467, %v466
  %v585 = vpack.c.b16 %v469, %v468
  %v586 = vpack.c.b16 %v471, %v470
  %v587 = vpack.c.b16 %v473, %v472
  %v588 = vpack.c.b16 %v475, %v474
  %v589 = vpack.c.b16 %v477, %v476
  %v590 = vpack.c.b16 %v479, %v478
  %v591 = vpack.c.b16 %v481, %v480
  %v592 = vpack.c.b16 %v483, %v482
  %v593 = vpack.c.b16 %v485, %v484
  %v594 = vpack.c.b16 %v487, %v486
  %v595 = vpack.c.b16 %v489, %v488
  %v596 = vpack.c.b16 %v491, %v490
  %v597 = vpack.c.b16 %v493, %v492
  %v598 = vpack.c.b16 %v495, %v494
  %v599 = vpack.c.b16 %v497, %v496
  %v600 = vpack.c.b16 %v499, %v498
  %v601 = vpack.c.b16 %v501, %v500
  %v602 = vpack.c.b16 %v503, %v502
  %v603 = vpack.c.b16 %v505, %v504
  %v604 = vpack.c.b16 %v507, %v506
  %v605 = vpack.c.b16 %v509, %v508
  %v606 = vpack.c.b16 %v511, %v510
  %v607 = vpack.c.b16 %v513, %v512
  %v608 = vpack.c.b16 %v515, %v514
  %v609 = vpack.c.b16 %v517, %v516
  %v610 = vpack.c.b16 %v519, %v518
  %v611 = vpack.c.b16 %v521, %v520
  %v612 = vpack.c.b16 %v523, %v522
  %v613 = vpack.c.b16 %v525, %v524
  %v614 = vpack.c.b16 %v527, %v526
  %v615 = vpack.c.b16 %v529, %v528
  %v616 = vpack.c.b16 %v531, %v530
  %v617 = vpack.c.b16 %v533, %v532
  %v618 = vpack.c.b16 %v535, %v534
  %v619 = vpack.c.b16 %v537, %v536
  %v620 = vpack.c.b16 %v539, %v538
  %v621 = vpack.c.b16 %v541, %v540
  %702 = vmatprep.subr.bf16.mxu0 0
  %703 = vmatpush1.bf16.msra.mxu0 %v542
  %704 = vmatprep.subr.bf16.mxu0 0
  %705 = vmatpush1.bf16.msra.mxu0 %v543
  %706 = vmatprep.subr.bf16.mxu0 0
  %707 = vmatpush1.bf16.msra.mxu0 %v544
  %708 = vmatprep.subr.bf16.mxu0 0
  %709 = vmatpush1.bf16.msra.mxu0 %v545
  %710 = vmatprep.subr.bf16.mxu0 0
  %711 = vmatpush1.bf16.msra.mxu0 %v546
  %712 = vmatprep.subr.bf16.mxu0 0
  %713 = vmatpush1.bf16.msra.mxu0 %v547
  %714 = vmatprep.subr.bf16.mxu0 0
  %715 = vmatpush1.bf16.msra.mxu0 %v548
  %716 = vmatprep.subr.bf16.mxu0 0
  %717 = vmatpush1.bf16.msra.mxu0 %v549
  %718 = vmatprep.subr.bf16.mxu0 0
  %719 = vmatpush1.bf16.msra.mxu0 %v550
  %720 = vmatprep.subr.bf16.mxu0 0
  %721 = vmatpush1.bf16.msra.mxu0 %v551
  %722 = vmatprep.subr.bf16.mxu0 0
  %723 = vmatpush1.bf16.msra.mxu0 %v552
  %724 = vmatprep.subr.bf16.mxu0 0
  %725 = vmatpush1.bf16.msra.mxu0 %v553
  %726 = vmatprep.subr.bf16.mxu0 0
  %727 = vmatpush1.bf16.msra.mxu0 %v554
  %728 = vmatprep.subr.bf16.mxu0 0
  %729 = vmatpush1.bf16.msra.mxu0 %v555
  %730 = vmatprep.subr.bf16.mxu0 0
  %731 = vmatpush1.bf16.msra.mxu0 %v556
  %732 = vmatprep.subr.bf16.mxu0 0
  %733 = vmatpush1.bf16.msra.mxu0 %v557
  %734 = vmatprep.mubr.bf16.mxu0 %v203
  %735 = vmatmul.mubr.bf16.gmra.mrb[0].mxu0 %v202
  %v736 = vpop.f32.mrb[0].mxu0
  %v737 = vadd.f32 %v185, %v736
  %v738 = vpop.f32.mrb[0].mxu0
  %v739 = vpop.f32.mrb[0].mxu0
  %v740 = vpop.f32.mrb[0].mxu0
  %741 = vdwg.mxu0
  %742 = vmatprep.subr.bf16.mxu0 0
  %743 = vmatpush1.bf16.msra.mxu0 %v558
  %744 = vmatprep.subr.bf16.mxu0 0
  %745 = vmatpush1.bf16.msra.mxu0 %v559
  %746 = vmatprep.subr.bf16.mxu0 0
  %747 = vmatpush1.bf16.msra.mxu0 %v560
  %748 = vmatprep.subr.bf16.mxu0 0
  %749 = vmatpush1.bf16.msra.mxu0 %v561
  %750 = vmatprep.subr.bf16.mxu0 0
  %751 = vmatpush1.bf16.msra.mxu0 %v562
  %752 = vmatprep.subr.bf16.mxu0 0
  %753 = vmatpush1.bf16.msra.mxu0 %v563
  %754 = vmatprep.subr.bf16.mxu0 0
  %755 = vmatpush1.bf16.msra.mxu0 %v564
  %756 = vmatprep.subr.bf16.mxu0 0
  %757 = vmatpush1.bf16.msra.mxu0 %v565
  %758 = vmatprep.subr.bf16.mxu0 0
  %759 = vmatpush1.bf16.msra.mxu0 %v566
  %760 = vmatprep.subr.bf16.mxu0 0
  %761 = vmatpush1.bf16.msra.mxu0 %v567
  %762 = vmatprep.subr.bf16.mxu0 0
  %763 = vmatpush1.bf16.msra.mxu0 %v568
  %764 = vmatprep.subr.bf16.mxu0 0
  %765 = vmatpush1.bf16.msra.mxu0 %v569
  %766 = vmatprep.subr.bf16.mxu0 0
  %767 = vmatpush1.bf16.msra.mxu0 %v570
  %768 = vmatprep.subr.bf16.mxu0 0
  %769 = vmatpush1.bf16.msra.mxu0 %v571
  %770 = vmatprep.subr.bf16.mxu0 0
  %771 = vmatpush1.bf16.msra.mxu0 %v572
  %772 = vmatprep.subr.bf16.mxu0 0
  %773 = vmatpush1.bf16.msra.mxu0 %v573
  %774 = vmatprep.mubr.bf16.mxu0 %v205
  %775 = vmatmul.mubr.bf16.gmra.mrb[0].mxu0 %v204
  %v776 = vpop.f32.mrb[0].mxu0
  %v777 = vadd.f32 %v737, %v776
  %v778 = vpop.f32.mrb[0].mxu0
  %v779 = vpop.f32.mrb[0].mxu0
  %v780 = vpop.f32.mrb[0].mxu0
  %781 = vdwg.mxu0
  %782 = vmatprep.subr.bf16.mxu0 0
  %783 = vmatpush1.bf16.msra.mxu0 %v574
  %784 = vmatprep.subr.bf16.mxu0 0
  %785 = vmatpush1.bf16.msra.mxu0 %v575
  %786 = vmatprep.subr.bf16.mxu0 0
  %787 = vmatpush1.bf16.msra.mxu0 %v576
  %788 = vmatprep.subr.bf16.mxu0 0
  %789 = vmatpush1.bf16.msra.mxu0 %v577
  %790 = vmatprep.subr.bf16.mxu0 0
  %791 = vmatpush1.bf16.msra.mxu0 %v578
  %792 = vmatprep.subr.bf16.mxu0 0
  %793 = vmatpush1.bf16.msra.mxu0 %v579
  %794 = vmatprep.subr.bf16.mxu0 0
  %795 = vmatpush1.bf16.msra.mxu0 %v580
  %796 = vmatprep.subr.bf16.mxu0 0
  %797 = vmatpush1.bf16.msra.mxu0 %v581
  %798 = vmatprep.subr.bf16.mxu0 0
  %799 = vmatpush1.bf16.msra.mxu0 %v582
  %800 = vmatprep.subr.bf16.mxu0 0
  %801 = vmatpush1.bf16.msra.mxu0 %v583
  %802 = vmatprep.subr.bf16.mxu0 0
  %803 = vmatpush1.bf16.msra.mxu0 %v584
  %804 = vmatprep.subr.bf16.mxu0 0
  %805 = vmatpush1.bf16.msra.mxu0 %v585
  %806 = vmatprep.subr.bf16.mxu0 0
  %807 = vmatpush1.bf16.msra.mxu0 %v586
  %808 = vmatprep.subr.bf16.mxu0 0
  %809 = vmatpush1.bf16.msra.mxu0 %v587
  %810 = vmatprep.subr.bf16.mxu0 0
  %811 = vmatpush1.bf16.msra.mxu0 %v588
  %812 = vmatprep.subr.bf16.mxu0 0
  %813 = vmatpush1.bf16.msra.mxu0 %v589
  %814 = vmatprep.mubr.bf16.mxu0 %v207
  %815 = vmatmul.mubr.bf16.gmra.mrb[0].mxu0 %v206
  %v816 = vpop.f32.mrb[0].mxu0
  %v817 = vadd.f32 %v777, %v816
  %v818 = vpop.f32.mrb[0].mxu0
  %v819 = vpop.f32.mrb[0].mxu0
  %v820 = vpop.f32.mrb[0].mxu0
  %821 = vdwg.mxu0
  %822 = vmatprep.subr.bf16.mxu0 0
  %823 = vmatpush1.bf16.msra.mxu0 %v590
  %824 = vmatprep.subr.bf16.mxu0 0
  %825 = vmatpush1.bf16.msra.mxu0 %v591
  %826 = vmatprep.subr.bf16.mxu0 0
  %827 = vmatpush1.bf16.msra.mxu0 %v592
  %828 = vmatprep.subr.bf16.mxu0 0
  %829 = vmatpush1.bf16.msra.mxu0 %v593
  %830 = vmatprep.subr.bf16.mxu0 0
  %831 = vmatpush1.bf16.msra.mxu0 %v594
  %832 = vmatprep.subr.bf16.mxu0 0
  %833 = vmatpush1.bf16.msra.mxu0 %v595
  %834 = vmatprep.subr.bf16.mxu0 0
  %835 = vmatpush1.bf16.msra.mxu0 %v596
  %836 = vmatprep.subr.bf16.mxu0 0
  %837 = vmatpush1.bf16.msra.mxu0 %v597
  %838 = vmatprep.subr.bf16.mxu0 0
  %839 = vmatpush1.bf16.msra.mxu0 %v598
  %840 = vmatprep.subr.bf16.mxu0 0
  %841 = vmatpush1.bf16.msra.mxu0 %v599
  %842 = vmatprep.subr.bf16.mxu0 0
  %843 = vmatpush1.bf16.msra.mxu0 %v600
  %844 = vmatprep.subr.bf16.mxu0 0
  %845 = vmatpush1.bf16.msra.mxu0 %v601
  %846 = vmatprep.subr.bf16.mxu0 0
  %847 = vmatpush1.bf16.msra.mxu0 %v602
  %848 = vmatprep.subr.bf16.mxu0 0
  %849 = vmatpush1.bf16.msra.mxu0 %v603
  %850 = vmatprep.subr.bf16.mxu0 0
  %851 = vmatpush1.bf16.msra.mxu0 %v604
  %852 = vmatprep.subr.bf16.mxu0 0
  %853 = vmatpush1.bf16.msra.mxu0 %v605
  %854 = vmatprep.mubr.bf16.mxu0 %v209
  %855 = vmatmul.mubr.bf16.gmra.mrb[0].mxu0 %v208
  %v856 = vpop.f32.mrb[0].mxu0
  %v857 = vadd.f32 %v817, %v856
  %v858 = vpop.f32.mrb[0].mxu0
  %v859 = vpop.f32.mrb[0].mxu0
  %v860 = vpop.f32.mrb[0].mxu0
  %861 = vdwg.mxu0
  %862 = vmatprep.subr.bf16.mxu0 0
  %863 = vmatpush1.bf16.msra.mxu0 %v606
  %864 = vmatprep.subr.bf16.mxu0 0
  %865 = vmatpush1.bf16.msra.mxu0 %v607
  %866 = vmatprep.subr.bf16.mxu0 0
  %867 = vmatpush1.bf16.msra.mxu0 %v608
  %868 = vmatprep.subr.bf16.mxu0 0
  %869 = vmatpush1.bf16.msra.mxu0 %v609
  %870 = vmatprep.subr.bf16.mxu0 0
  %871 = vmatpush1.bf16.msra.mxu0 %v610
  %872 = vmatprep.subr.bf16.mxu0 0
  %873 = vmatpush1.bf16.msra.mxu0 %v611
  %874 = vmatprep.subr.bf16.mxu0 0
  %875 = vmatpush1.bf16.msra.mxu0 %v612
  %876 = vmatprep.subr.bf16.mxu0 0
  %877 = vmatpush1.bf16.msra.mxu0 %v613
  %878 = vmatprep.subr.bf16.mxu0 0
  %879 = vmatpush1.bf16.msra.mxu0 %v614
  %880 = vmatprep.subr.bf16.mxu0 0
  %881 = vmatpush1.bf16.msra.mxu0 %v615
  %882 = vmatprep.subr.bf16.mxu0 0
  %883 = vmatpush1.bf16.msra.mxu0 %v616
  %884 = vmatprep.subr.bf16.mxu0 0
  %885 = vmatpush1.bf16.msra.mxu0 %v617
  %886 = vmatprep.subr.bf16.mxu0 0
  %887 = vmatpush1.bf16.msra.mxu0 %v618
  %888 = vmatprep.subr.bf16.mxu0 0
  %889 = vmatpush1.bf16.msra.mxu0 %v619
  %890 = vmatprep.subr.bf16.mxu0 0
  %891 = vmatpush1.bf16.msra.mxu0 %v620
  %892 = vmatprep.subr.bf16.mxu0 0
  %893 = vmatpush1.bf16.msra.mxu0 %v621
  %894 = vmatprep.mubr.bf16.mxu0 %v211
  %895 = vmatmul.mubr.bf16.gmra.mrb[0].mxu0 %v210
  %v896 = vpop.f32.mrb[0].mxu0
  %v897 = vadd.f32 %v857, %v896
  %v898 = vpop.f32.mrb[0].mxu0
  %v899 = vpop.f32.mrb[0].mxu0
  %v900 = vpop.f32.mrb[0].mxu0
  %901 = vdwg.mxu0
  %902 = vst [vmem:[%s3] sm:$0xff] %v897
  // Predicated region
  $region14: #{discriminator_forward.9} parent=0 // pred_check
    _
  $region15: #{discriminator_forward.9} parent=0 // pred_check_branch
    %904 = sbr.rel (0) target = $region17
  $region16: #{discriminator_forward.9} parent=0 // pred_region
    _
  $region17: #{discriminator_forward.9} parent=0 // pred_fallthru
    _
  // Predicated region
  $region18: #{discriminator_forward.9} parent=0 // pred_check
    _
  $region19: #{discriminator_forward.9} parent=0 // pred_check_branch
    %906 = sbr.rel (0) target = $region21
  $region20: #{discriminator_forward.9} parent=0 // pred_region
    _
  $region21: #{discriminator_forward.9} parent=0 // pred_fallthru
    _

</llo_original>
